<compile_context>
chip_gen: v6e
topology: v6e:2x2x1
jax: 0.10.0
libtpu: 0.0.40
codegen_flags: <defaults>
</compile_context>

<pallas_src>
import functools

import jax
import jax.numpy as jnp
from jax import lax
from jax.experimental import pallas as pl
from jax.experimental.pallas import tpu as pltpu

EPS = 1e-5


# ----------------------------------------------------------------------------
# Generation-aware VMEM sizing
# ----------------------------------------------------------------------------
def _vmem_budget_and_limit():
  """(tile-sizing budget, compiler vmem_limit_bytes) from the chip's VMEM."""
  cap = 128 * 1024 * 1024                       # v5e / v6e physical
  try:
    cap = int(getattr(pltpu.get_tpu_info(), "vmem_capacity_bytes", cap))
  except Exception:
    pass                                        # no TPU visible (e.g. interpret)
  limit = min((cap * 3) // 4, 100 * 1024 * 1024)  # ~96-100MiB v5e/v6e, ~48MiB v7x
  return (limit * 9) // 10, limit


def _row_tile(m, row_bytes, fixed_bytes, budget, cap=1024):
  """Largest row tile (<=cap) whose double-buffered footprint fits the budget."""
  tm = cap
  while tm > 8 and fixed_bytes + 2 * tm * row_bytes > budget:
    tm //= 2
  return m if tm >= m else tm


# ----------------------------------------------------------------------------
# Kernels
# ----------------------------------------------------------------------------
def _conv1x1_bn_relu_kernel(x_ref, w_ref, b_ref, o_ref, *, compute_dtype):
  # x: (tm, Cin), w: (Cin, Cout) with BN scale pre-folded, b: (1, Cout) f32.
  prec = (lax.Precision.HIGHEST
          if jnp.dtype(compute_dtype) == jnp.float32 else None)
  acc = jnp.dot(x_ref[...].astype(compute_dtype), w_ref[...],
                preferred_element_type=jnp.float32, precision=prec)
  o_ref[...] = jnp.maximum(acc + b_ref[...], 0.0).astype(o_ref.dtype)


def _fused_conv2_conv3_kernel(*refs, stride, has_proj, compute_dtype):
  """3x3 conv + BN + ReLU fused with 1x1 conv + BN + shortcut + add + ReLU.

  refs (projection): o1p, sc, w2, b2, w3, wsc, bias, out
  refs (identity)  : o1p, sc, w2, b2, w3,      bias, out

  o1p: (1, s*s, Hps, Wps, C1) space-to-depth padded conv1 output, so every
       3x3 tap (including stride 2) is a dense static slice of one parity
       plane — no strided ref reads.
  w2 : (9, C1, C1) tap-major with BN2 scale folded.
  """
  if has_proj:
    o1p_ref, sc_ref, w2_ref, b2_ref, w3_ref, wsc_ref, b_ref, o_ref = refs
  else:
    o1p_ref, sc_ref, w2_ref, b2_ref, w3_ref, b_ref, o_ref = refs
    wsc_ref = None
  s = stride
  _, ho, wo, cexp = o_ref.shape
  c1 = w3_ref.shape[0]
  prec = (lax.Precision.HIGHEST
          if jnp.dtype(compute_dtype) == jnp.float32 else None)

  # conv2: 9 accumulating MXU dots into one f32 accumulator.
  acc2 = None
  for kh in range(3):
    for kw in range(3):
      p = (kh % s) * s + (kw % s)
      a, b = kh // s, kw // s
      tap = o1p_ref[0, p, a:a + ho, b:b + wo, :]
      tap = tap.reshape(ho * wo, c1).astype(compute_dtype)
      d = jnp.dot(tap, w2_ref[kh * 3 + kw],
                  preferred_element_type=jnp.float32, precision=prec)
      acc2 = d if acc2 is None else acc2 + d
  h2 = jnp.maximum(acc2 + b2_ref[...], 0.0).astype(compute_dtype)

  # conv3 (+ shortcut) shares the f32 accumulator; no o2 HBM round trip.
  acc3 = jnp.dot(h2, w3_ref[...], preferred_element_type=jnp.float32,
                 precision=prec)
  scv = sc_ref[0].reshape(ho * wo, -1)
  if has_proj:
    acc3 = acc3 + jnp.dot(scv.astype(compute_dtype), wsc_ref[...],
                          preferred_element_type=jnp.float32, precision=prec)
  else:
    acc3 = acc3 + scv.astype(jnp.float32)
  y = jnp.maximum(acc3 + b_ref[...], 0.0)
  o_ref[...] = y.reshape(1, ho, wo, cexp).astype(o_ref.dtype)


# ----------------------------------------------------------------------------
# pallas_call wrappers
# ----------------------------------------------------------------------------
def conv1x1_bn_relu(x2d, w, b, *, out_dtype, compute_dtype, budget, limit):
  m, cin = x2d.shape
  cout = w.shape[1]
  row_bytes = cin * x2d.dtype.itemsize + cout * jnp.dtype(out_dtype).itemsize
  fixed = 2 * (w.size * w.dtype.itemsize + b.size * b.dtype.itemsize)
  tm = _row_tile(m, row_bytes, fixed, budget)
  # TODO(synk): when cout < 128, pad the output channels to a multiple of 128
  # for lane-dense unmasked stores (and slice afterwards).
  return pl.pallas_call(
      functools.partial(_conv1x1_bn_relu_kernel, compute_dtype=compute_dtype),
      out_shape=jax.ShapeDtypeStruct((m, cout), out_dtype),
      grid_spec=pltpu.PrefetchScalarGridSpec(
          num_scalar_prefetch=0,
          grid=(pl.cdiv(m, tm),),
          in_specs=[
              pl.BlockSpec((tm, cin), lambda i: (i, 0)),
              pl.BlockSpec((cin, cout), lambda i: (0, 0)),
              pl.BlockSpec((1, cout), lambda i: (0, 0)),
          ],
          out_specs=pl.BlockSpec((tm, cout), lambda i: (i, 0))),
      compiler_params=pltpu.CompilerParams(
          dimension_semantics=("parallel",), vmem_limit_bytes=limit),
  )(x2d, w, b)


def _space_to_depth_pad(x_nhwc, stride):
  """Pad by 1 (conv padding) and split into stride*stride parity planes so the
  kernel reads every (possibly strided) 3x3 tap as a dense static slice."""
  n, h, w, c = x_nhwc.shape
  s = stride
  xp = jnp.pad(x_nhwc, ((0, 0), (1, 1), (1, 1), (0, 0)))
  hp, wp = h + 2, w + 2
  hps, wps = -(-hp // s) * s, -(-wp // s) * s
  if (hps, wps) != (hp, wp):
    xp = jnp.pad(xp, ((0, 0), (0, hps - hp), (0, wps - wp), (0, 0)))
  xp = xp.reshape(n, hps // s, s, wps // s, s, c)
  xp = jnp.transpose(xp, (0, 2, 4, 1, 3, 5))
  return xp.reshape(n, s * s, hps // s, wps // s, c)


def fused_conv2_conv3(o1, sc, w2, b2, w3, wsc, bias, *, stride, out_dtype,
                      compute_dtype, limit):
  n, h, w_, c1 = o1.shape
  s = stride
  ho, wo = (h - 1) // s + 1, (w_ - 1) // s + 1
  cexp = w3.shape[1]
  csc = sc.shape[-1]
  o1p = _space_to_depth_pad(o1, s)
  _, ss, hps, wps, _ = o1p.shape
  has_proj = wsc is not None

  in_specs = [
      pl.BlockSpec((1, ss, hps, wps, c1), lambda i: (i, 0, 0, 0, 0)),
      pl.BlockSpec((1, ho, wo, csc), lambda i: (i, 0, 0, 0)),
      pl.BlockSpec((9, c1, c1), lambda i: (0, 0, 0)),
      pl.BlockSpec((1, c1), lambda i: (0, 0)),
      pl.BlockSpec((c1, cexp), lambda i: (0, 0)),
  ]
  args = [o1p, sc, w2, b2, w3]
  if has_proj:
    in_specs.append(pl.BlockSpec((csc, cexp), lambda i: (0, 0)))
    args.append(wsc)
  in_specs.append(pl.BlockSpec((1, cexp), lambda i: (0, 0)))
  args.append(bias)

  # TODO(synk): for large feature maps, tile this grid over output-row blocks
  # (1-row halo) to bound per-step VMEM on v7x and feed both TensorCores.
  return pl.pallas_call(
      functools.partial(_fused_conv2_conv3_kernel, stride=s,
                        has_proj=has_proj, compute_dtype=compute_dtype),
      out_shape=jax.ShapeDtypeStruct((n, ho, wo, cexp), out_dtype),
      grid_spec=pltpu.PrefetchScalarGridSpec(
          num_scalar_prefetch=0,
          grid=(n,),
          in_specs=in_specs,
          out_specs=pl.BlockSpec((1, ho, wo, cexp), lambda i: (i, 0, 0, 0))),
      compiler_params=pltpu.CompilerParams(
          dimension_semantics=("parallel",), vmem_limit_bytes=limit),
  )(*args)


# ----------------------------------------------------------------------------
# BatchNorm folding (eval mode) + Bottleneck forward (Pallas) + JAX reference
# ----------------------------------------------------------------------------
def _fold_bn_1x1(w_oihw, g, b, m, v):
  scale = g / jnp.sqrt(v + EPS)                       # (Cout,)
  w_f = (w_oihw[:, :, 0, 0] * scale[:, None]).T       # (Cin, Cout)
  bias = (b - m * scale).reshape(1, -1)                # f32 bias
  return w_f, bias


def _fold_bn_3x3(w_oihw, g, b, m, v):
  scale = g / jnp.sqrt(v + EPS)
  w_f = w_oihw * scale[:, None, None, None]            # (Cout, Cin, 3, 3)
  w_f = jnp.transpose(w_f, (2, 3, 1, 0))               # (kh, kw, Cin, Cout)
  w_f = w_f.reshape(9, w_oihw.shape[1], w_oihw.shape[0])  # (9, Cin, Cout)
  bias = (b - m * scale).reshape(1, -1)
  return w_f, bias


def bottleneck_forward(x_nchw, p, stride, *, compute_dtype=jnp.bfloat16):
  """Pallas Bottleneck forward (eval-mode BN). x: (N, Cin, H, W) NCHW f32."""
  n, cin, h, w = x_nchw.shape
  planes = p["conv1_w"].shape[0]
  cexp = 4 * planes
  budget, limit = _vmem_budget_and_limit()

  # TODO(synk): when chained inside a network, keep activations NHWC/bf16
  # end-to-end instead of transposing at each block boundary.
  x = jnp.transpose(x_nchw, (0, 2, 3, 1)).astype(compute_dtype)   # NHWC

  # conv1 (1x1) + bn1 + relu -- row-tiled matmul kernel
  w1, b1 = _fold_bn_1x1(p["conv1_w"], p["bn1_g"], p["bn1_b"], p["bn1_m"],
                        p["bn1_v"])
  o1 = conv1x1_bn_relu(x.reshape(n * h * w, cin), w1.astype(compute_dtype), b1,
                       out_dtype=compute_dtype, compute_dtype=compute_dtype,
                       budget=budget, limit=limit)
  o1 = o1.reshape(n, h, w, planes)

  # conv2 (3x3, stride) + bn2 + relu  FUSED WITH  conv3 + bn3 + shortcut + relu
  # TODO(synk): BN scale is baked into bf16 weights; apply it in the f32
  # epilogue instead if tighter accuracy is required.
  w2, b2 = _fold_bn_3x3(p["conv2_w"], p["bn2_g"], p["bn2_b"], p["bn2_m"],
                        p["bn2_v"])
  w3, b3 = _fold_bn_1x1(p["conv3_w"], p["bn3_g"], p["bn3_b"], p["bn3_m"],
                        p["bn3_v"])
  if stride != 1 or cin != cexp:
    wsc, bsc = _fold_bn_1x1(p["sc_w"], p["sc_g"], p["sc_b"], p["sc_m"],
                            p["sc_v"])
    # TODO(synk): select strided shortcut rows inside the fused kernel instead
    # of this wrapper-side strided slice.
    xs = x if stride == 1 else x[:, ::stride, ::stride, :]
    out = fused_conv2_conv3(o1, xs, w2.astype(compute_dtype), b2,
                            w3.astype(compute_dtype), wsc.astype(compute_dtype),
                            b3 + bsc, stride=stride, out_dtype=x_nchw.dtype,
                            compute_dtype=compute_dtype, limit=limit)
  else:
    out = fused_conv2_conv3(o1, x, w2.astype(compute_dtype), b2,
                            w3.astype(compute_dtype), None, b3,
                            stride=stride, out_dtype=x_nchw.dtype,
                            compute_dtype=compute_dtype, limit=limit)
  return jnp.transpose(out, (0, 3, 1, 2))               # back to NCHW


def bottleneck_ref(x, p, stride):
  """Pure-JAX NCHW reference (matches PyTorch eval-mode semantics)."""
  dn = ("NCHW", "OIHW", "NCHW")
  prec = lax.Precision.HIGHEST

  def bn(y, g, b, m, v):
    g, b = g[None, :, None, None], b[None, :, None, None]
    m, v = m[None, :, None, None], v[None, :, None, None]
    return g * (y - m) / jnp.sqrt(v + EPS) + b

  out = lax.conv_general_dilated(x, p["conv1_w"], (1, 1), ((0, 0), (0, 0)),
                                 dimension_numbers=dn, precision=prec)
  out = jax.nn.relu(bn(out, p["bn1_g"], p["bn1_b"], p["bn1_m"], p["bn1_v"]))
  out = lax.conv_general_dilated(out, p["conv2_w"], (stride, stride),
                                 ((1, 1), (1, 1)), dimension_numbers=dn,
                                 precision=prec)
  out = jax.nn.relu(bn(out, p["bn2_g"], p["bn2_b"], p["bn2_m"], p["bn2_v"]))
  out = lax.conv_general_dilated(out, p["conv3_w"], (1, 1), ((0, 0), (0, 0)),
                                 dimension_numbers=dn, precision=prec)
  out = bn(out, p["bn3_g"], p["bn3_b"], p["bn3_m"], p["bn3_v"])
  cexp = p["conv3_w"].shape[0]
  if stride != 1 or x.shape[1] != cexp:
    sc = lax.conv_general_dilated(x, p["sc_w"], (stride, stride),
                                  ((0, 0), (0, 0)), dimension_numbers=dn,
                                  precision=prec)
    sc = bn(sc, p["sc_g"], p["sc_b"], p["sc_m"], p["sc_v"])
  else:
    sc = x
  return jax.nn.relu(out + sc)


# ----------------------------------------------------------------------------
# Deterministic parameter init (synthetic, PyTorch OIHW shapes)
# ----------------------------------------------------------------------------
def init_params(key, in_planes, planes, stride):
  exp = 4 * planes
  ks = jax.random.split(key, 8)

  def bn_params(k, c):
    k1, k2, k3, k4 = jax.random.split(k, 4)
    return (jax.random.uniform(k1, (c,), jnp.float32, 0.5, 1.5),
            0.1 * jax.random.normal(k2, (c,), jnp.float32),
            0.1 * jax.random.normal(k3, (c,), jnp.float32),
            jax.random.uniform(k4, (c,), jnp.float32, 0.5, 1.5))

  p = {}
  p["conv1_w"] = 0.2 * jax.random.normal(ks[0], (planes, in_planes, 1, 1),
                                         jnp.float32)
  p["bn1_g"], p["bn1_b"], p["bn1_m"], p["bn1_v"] = bn_params(ks[1], planes)
  p["conv2_w"] = 0.2 * jax.random.normal(ks[2], (planes, planes, 3, 3),
                                         jnp.float32)
  p["bn2_g"], p["bn2_b"], p["bn2_m"], p["bn2_v"] = bn_params(ks[3], planes)
  p["conv3_w"] = 0.2 * jax.random.normal(ks[4], (exp, planes, 1, 1),
                                         jnp.float32)
  p["bn3_g"], p["bn3_b"], p["bn3_m"], p["bn3_v"] = bn_params(ks[5], exp)
  if stride != 1 or in_planes != exp:
    p["sc_w"] = 0.2 * jax.random.normal(ks[6], (exp, in_planes, 1, 1),
                                        jnp.float32)
    p["sc_g"], p["sc_b"], p["sc_m"], p["sc_v"] = bn_params(ks[7], exp)
  return p


# ----------------------------------------------------------------------------
if __name__ == "__main__":
  key = jax.random.PRNGKey(0)
  kx, kp1, kp2, kp3 = jax.random.split(key, 4)

  N, H, W = 2, 16, 16
  configs = [
      # (in_planes, planes, stride, param_key)
      (8, 4, 1, kp1),    # projection shortcut, stride 1
      (8, 4, 2, kp2),    # projection shortcut, stride 2 (strided conv2 path)
      (16, 4, 1, kp3),   # identity shortcut
  ]

  ok = True
  for in_planes, planes, stride, kp in configs:
    x = jax.random.normal(kx, (N, in_planes, H, W), jnp.float32)
    params = init_params(kp, in_planes, planes, stride)
    ref = jax.block_until_ready(bottleneck_ref(x, params, stride))

    # f32-compute path: strict elementwise check against the reference.
    out32 = jax.block_until_ready(
        bottleneck_forward(x, params, stride, compute_dtype=jnp.float32))
    # default bf16-MXU path: loose (max-normalized) check.
    outbf = jax.block_until_ready(bottleneck_forward(x, params, stride))

    ho = (H - 1) // stride + 1
    wo = (W - 1) // stride + 1
    ok = ok and out32.shape == (N, 4 * planes, ho, wo)
    ok = ok and outbf.shape == (N, 4 * planes, ho, wo)
    ok = ok and bool(jnp.allclose(out32, ref, rtol=1e-4, atol=1e-4))
    rel = float(jnp.max(jnp.abs(outbf.astype(jnp.float32) - ref)) /
                (jnp.max(jnp.abs(ref)) + 1e-6))
    ok = ok and rel < 0.05

  if ok:
    print("KERNEL_OK")
  else:
    print("MISMATCH")
</pallas_src>

<mosaic_0001>
module attributes {stable_mosaic.version = 11 : i64} {
  func.func @_conv1x1_bn_relu_kernel(%arg0: i32, %arg1: memref<512x8xf32, #tpu.memory_space<vmem>>, %arg2: memref<8x4xf32, #tpu.memory_space<vmem>>, %arg3: memref<1x4xf32, #tpu.memory_space<vmem>>, %arg4: memref<512x4xf32, #tpu.memory_space<vmem>>) attributes {dimension_semantics = [#tpu.dimension_semantics<parallel>], iteration_bounds = array<i64: 1>, scalar_prefetch = 0 : i64, scratch_operands = 0 : i64, tpu.core_type = #tpu.core_type<tc>, window_params = [{transform_indices = @transform_0, window_bounds = array<i64: 512, 8>}, {pipeline_mode = #tpu.pipeline_mode<synchronous>, transform_indices = @transform_1, window_bounds = array<i64: 8, 4>}, {pipeline_mode = #tpu.pipeline_mode<synchronous>, transform_indices = @transform_2, window_bounds = array<i64: 1, 4>}, {transform_indices = @transform_3, window_bounds = array<i64: 512, 4>}]} {
    %c0 = arith.constant 0 : index
    %c0_0 = arith.constant 0 : index
    %0 = vector.load %arg1[%c0, %c0_0] : memref<512x8xf32, #tpu.memory_space<vmem>>, vector<512x8xf32>
    %c0_1 = arith.constant 0 : index
    %c0_2 = arith.constant 0 : index
    %1 = vector.load %arg2[%c0_1, %c0_2] : memref<8x4xf32, #tpu.memory_space<vmem>>, vector<8x4xf32>
    %cst = arith.constant dense<0.000000e+00> : vector<512x4xf32>
    %2 = tpu.matmul %0, %1, %cst {dimension_numbers = #tpu.dot_dimension_numbers<[1], [0], [0], [1], [0, 0, 1, 1], [], []>, precision = #tpu.contract_precision<fp32>} : vector<512x8xf32>, vector<8x4xf32>, vector<512x4xf32> -> vector<512x4xf32>
    %c0_3 = arith.constant 0 : index
    %c0_4 = arith.constant 0 : index
    %3 = vector.load %arg3[%c0_3, %c0_4] : memref<1x4xf32, #tpu.memory_space<vmem>>, vector<1x4xf32>
    %4 = vector.broadcast %3 : vector<1x4xf32> to vector<512x4xf32>
    %5 = arith.addf %2, %4 : vector<512x4xf32>
    %cst_5 = arith.constant 0.000000e+00 : f32
    %6 = vector.broadcast %cst_5 : f32 to vector<512x4xf32>
    %7 = arith.maximumf %5, %6 : vector<512x4xf32>
    %c0_6 = arith.constant 0 : index
    %c0_7 = arith.constant 0 : index
    %8 = vector.load %arg4[%c0_6, %c0_7] : memref<512x4xf32, #tpu.memory_space<vmem>>, vector<512x4xf32>
    tpu.vector_store %arg4[%c0_6, %c0_7], %7 {strides = array<i32>} : memref<512x4xf32, #tpu.memory_space<vmem>>, vector<512x4xf32>,
    return
  }
  func.func @transform_0(%arg0: i32) -> (i32, i32) {
    %c0_i32 = arith.constant 0 : i32
    %c0_i32_0 = arith.constant 0 : i32
    return %arg0, %c0_i32 : i32, i32
  }
  func.func @transform_1(%arg0: i32) -> (i32, i32) {
    %c0_i32 = arith.constant 0 : i32
    %c0_i32_0 = arith.constant 0 : i32
    %c0_i32_1 = arith.constant 0 : i32
    return %c0_i32, %c0_i32_0 : i32, i32
  }
  func.func @transform_2(%arg0: i32) -> (i32, i32) {
    %c0_i32 = arith.constant 0 : i32
    %c0_i32_0 = arith.constant 0 : i32
    %c0_i32_1 = arith.constant 0 : i32
    return %c0_i32, %c0_i32_0 : i32, i32
  }
  func.func @transform_3(%arg0: i32) -> (i32, i32) {
    %c0_i32 = arith.constant 0 : i32
    %c0_i32_0 = arith.constant 0 : i32
    return %arg0, %c0_i32 : i32, i32
  }
}

</mosaic_0001>

<llo_original>
// kernel: tpu_custom_call.1
$region0: #{tpu_custom_call.1}
  #allocation0 [shape = 'u32[]', space=smem, size = 0x4, offset = 0x4, fixed_abs, tag = 'smem constant byte address 0x4 - core index']
  #allocation1 [shape = 'u32[144,128]{1,0:T(1,128)}', space=vmem, size = 0x12000, scoped, tag = 'internal scratch']
  %s0 = inlined_call_operand.vmem [shape: f32[512,8], index: 0, kind: input, shape index: {}]
  %s1 = inlined_call_operand.vmem [shape: f32[8,4], index: 1, kind: input, shape index: {}]
  %s2 = inlined_call_operand.vmem [shape: f32[1,4], index: 2, kind: input, shape index: {}]
  %s3 = inlined_call_operand.vmem [shape: f32[512,4], index: 3, kind: output, shape index: {}]
  %s4 = sld [smem:[#allocation0]]
  $region22: #{tpu_custom_call.1} parent=0
    _
  %s6 = ssub.s32 1, %s4
  %s7 = scalar_select 0, %s6, %s4
  // Predicated region
  $region2: #{tpu_custom_call.1} parent=0 // pred_check
    _
  $region3: #{tpu_custom_call.1} parent=0 // pred_check_branch
    %9 = sbr.rel (0) target = $region5
  $region4: #{tpu_custom_call.1} parent=0 // pred_region
    _
  $region5: #{tpu_custom_call.1} parent=0 // pred_fallthru
    _
  // Predicated region
  $region6: #{tpu_custom_call.1} parent=0 // pred_check
    _
  $region7: #{tpu_custom_call.1} parent=0 // pred_check_branch
    %11 = sbr.rel (0) target = $region9
  $region8: #{tpu_custom_call.1} parent=0 // pred_region
    _
  $region9: #{tpu_custom_call.1} parent=0 // pred_fallthru
    _
  // Predicated region
  $region10: #{tpu_custom_call.1} parent=0 // pred_check
    _
  $region11: #{tpu_custom_call.1} parent=0 // pred_check_branch
    %13 = sbr.rel (0) target = $region13
  $region12: #{tpu_custom_call.1} parent=0 // pred_region
    _
  $region13: #{tpu_custom_call.1} parent=0 // pred_fallthru
    _
  %v14 = vld [vmem:[%s0] sm:$0xff]
  %v15 = vld [vmem:[%s0 + $0x8] sm:$0xff]
  %v16 = vld [vmem:[%s0 + $0x10] sm:$0xff]
  %v17 = vld [vmem:[%s0 + $0x18] sm:$0xff]
  %v18 = vld [vmem:[%s0 + $0x20] sm:$0xff]
  %v19 = vld [vmem:[%s0 + $0x28] sm:$0xff]
  %v20 = vld [vmem:[%s0 + $0x30] sm:$0xff]
  %v21 = vld [vmem:[%s0 + $0x38] sm:$0xff]
  %v22 = vld [vmem:[%s0 + $0x40] sm:$0xff]
  %v23 = vld [vmem:[%s0 + $0x48] sm:$0xff]
  %v24 = vld [vmem:[%s0 + $0x50] sm:$0xff]
  %v25 = vld [vmem:[%s0 + $0x58] sm:$0xff]
  %v26 = vld [vmem:[%s0 + $0x60] sm:$0xff]
  %v27 = vld [vmem:[%s0 + $0x68] sm:$0xff]
  %v28 = vld [vmem:[%s0 + $0x70] sm:$0xff]
  %v29 = vld [vmem:[%s0 + $0x78] sm:$0xff]
  %v30 = vld [vmem:[%s0 + $0x80] sm:$0xff]
  %v31 = vld [vmem:[%s0 + $0x88] sm:$0xff]
  %v32 = vld [vmem:[%s0 + $0x90] sm:$0xff]
  %v33 = vld [vmem:[%s0 + $0x98] sm:$0xff]
  %v34 = vld [vmem:[%s0 + $0xa0] sm:$0xff]
  %v35 = vld [vmem:[%s0 + $0xa8] sm:$0xff]
  %v36 = vld [vmem:[%s0 + $0xb0] sm:$0xff]
  %v37 = vld [vmem:[%s0 + $0xb8] sm:$0xff]
  %v38 = vld [vmem:[%s0 + $0xc0] sm:$0xff]
  %v39 = vld [vmem:[%s0 + $0xc8] sm:$0xff]
  %v40 = vld [vmem:[%s0 + $0xd0] sm:$0xff]
  %v41 = vld [vmem:[%s0 + $0xd8] sm:$0xff]
  %v42 = vld [vmem:[%s0 + $0xe0] sm:$0xff]
  %v43 = vld [vmem:[%s0 + $0xe8] sm:$0xff]
  %v44 = vld [vmem:[%s0 + $0xf0] sm:$0xff]
  %v45 = vld [vmem:[%s0 + $0xf8] sm:$0xff]
  %v46 = vld [vmem:[%s0 + $0x100] sm:$0xff]
  %v47 = vld [vmem:[%s0 + $0x108] sm:$0xff]
  %v48 = vld [vmem:[%s0 + $0x110] sm:$0xff]
  %v49 = vld [vmem:[%s0 + $0x118] sm:$0xff]
  %v50 = vld [vmem:[%s0 + $0x120] sm:$0xff]
  %v51 = vld [vmem:[%s0 + $0x128] sm:$0xff]
  %v52 = vld [vmem:[%s0 + $0x130] sm:$0xff]
  %v53 = vld [vmem:[%s0 + $0x138] sm:$0xff]
  %v54 = vld [vmem:[%s0 + $0x140] sm:$0xff]
  %v55 = vld [vmem:[%s0 + $0x148] sm:$0xff]
  %v56 = vld [vmem:[%s0 + $0x150] sm:$0xff]
  %v57 = vld [vmem:[%s0 + $0x158] sm:$0xff]
  %v58 = vld [vmem:[%s0 + $0x160] sm:$0xff]
  %v59 = vld [vmem:[%s0 + $0x168] sm:$0xff]
  %v60 = vld [vmem:[%s0 + $0x170] sm:$0xff]
  %v61 = vld [vmem:[%s0 + $0x178] sm:$0xff]
  %v62 = vld [vmem:[%s0 + $0x180] sm:$0xff]
  %v63 = vld [vmem:[%s0 + $0x188] sm:$0xff]
  %v64 = vld [vmem:[%s0 + $0x190] sm:$0xff]
  %v65 = vld [vmem:[%s0 + $0x198] sm:$0xff]
  %v66 = vld [vmem:[%s0 + $0x1a0] sm:$0xff]
  %v67 = vld [vmem:[%s0 + $0x1a8] sm:$0xff]
  %v68 = vld [vmem:[%s0 + $0x1b0] sm:$0xff]
  %v69 = vld [vmem:[%s0 + $0x1b8] sm:$0xff]
  %v70 = vld [vmem:[%s0 + $0x1c0] sm:$0xff]
  %v71 = vld [vmem:[%s0 + $0x1c8] sm:$0xff]
  %v72 = vld [vmem:[%s0 + $0x1d0] sm:$0xff]
  %v73 = vld [vmem:[%s0 + $0x1d8] sm:$0xff]
  %v74 = vld [vmem:[%s0 + $0x1e0] sm:$0xff]
  %v75 = vld [vmem:[%s0 + $0x1e8] sm:$0xff]
  %v76 = vld [vmem:[%s0 + $0x1f0] sm:$0xff]
  %v77 = vld [vmem:[%s0 + $0x1f8] sm:$0xff]
  %v78 = vld [vmem:[%s1] sm:$0xff]
  %v79 = vld [vmem:[%s2] sm:$0x1]
  %v81 = vlaneseq
  %v82 = vshrl.u32 %v81, 7
  %v83 = vsub.s32 0, %v82
  %v84 = vrot.slane %v79, %v83
  %vm86 = vcmask 64512
  %v88 = vsel %vm86, %v14, 0
  %v91 = vsel %vm86, %v15, 0
  %v94 = vsel %vm86, %v16, 0
  %v97 = vsel %vm86, %v17, 0
  %v100 = vsel %vm86, %v18, 0
  %v103 = vsel %vm86, %v19, 0
  %v106 = vsel %vm86, %v20, 0
  %v109 = vsel %vm86, %v21, 0
  %v112 = vsel %vm86, %v22, 0
  %v115 = vsel %vm86, %v23, 0
  %v118 = vsel %vm86, %v24, 0
  %v121 = vsel %vm86, %v25, 0
  %v124 = vsel %vm86, %v26, 0
  %v127 = vsel %vm86, %v27, 0
  %v130 = vsel %vm86, %v28, 0
  %v133 = vsel %vm86, %v29, 0
  %v136 = vsel %vm86, %v30, 0
  %v139 = vsel %vm86, %v31, 0
  %v142 = vsel %vm86, %v32, 0
  %v145 = vsel %vm86, %v33, 0
  %v148 = vsel %vm86, %v34, 0
  %v151 = vsel %vm86, %v35, 0
  %v154 = vsel %vm86, %v36, 0
  %v157 = vsel %vm86, %v37, 0
  %v160 = vsel %vm86, %v38, 0
  %v163 = vsel %vm86, %v39, 0
  %v166 = vsel %vm86, %v40, 0
  %v169 = vsel %vm86, %v41, 0
  %v172 = vsel %vm86, %v42, 0
  %v175 = vsel %vm86, %v43, 0
  %v178 = vsel %vm86, %v44, 0
  %v181 = vsel %vm86, %v45, 0
  %v184 = vsel %vm86, %v46, 0
  %v187 = vsel %vm86, %v47, 0
  %v190 = vsel %vm86, %v48, 0
  %v193 = vsel %vm86, %v49, 0
  %v196 = vsel %vm86, %v50, 0
  %v199 = vsel %vm86, %v51, 0
  %v202 = vsel %vm86, %v52, 0
  %v205 = vsel %vm86, %v53, 0
  %v208 = vsel %vm86, %v54, 0
  %v211 = vsel %vm86, %v55, 0
  %v214 = vsel %vm86, %v56, 0
  %v217 = vsel %vm86, %v57, 0
  %v220 = vsel %vm86, %v58, 0
  %v223 = vsel %vm86, %v59, 0
  %v226 = vsel %vm86, %v60, 0
  %v229 = vsel %vm86, %v61, 0
  %v232 = vsel %vm86, %v62, 0
  %v235 = vsel %vm86, %v63, 0
  %v238 = vsel %vm86, %v64, 0
  %v241 = vsel %vm86, %v65, 0
  %v244 = vsel %vm86, %v66, 0
  %v247 = vsel %vm86, %v67, 0
  %v250 = vsel %vm86, %v68, 0
  %v253 = vsel %vm86, %v69, 0
  %v256 = vsel %vm86, %v70, 0
  %v259 = vsel %vm86, %v71, 0
  %v262 = vsel %vm86, %v72, 0
  %v265 = vsel %vm86, %v73, 0
  %v268 = vsel %vm86, %v74, 0
  %v271 = vsel %vm86, %v75, 0
  %v274 = vsel %vm86, %v76, 0
  %v277 = vsel %vm86, %v77, 0
  %279 = vmatprep.subr.mxu0 0.0
  %280 = vmatpush1.msra.mxu0 0.0
  %281 = vmatprep.subr.mxu0 0.0
  %282 = vmatpush1.msra.mxu0 0.0
  %283 = vmatprep.subr.mxu0 0.0
  %284 = vmatpush1.msra.mxu0 0.0
  %285 = vmatprep.subr.mxu0 0.0
  %286 = vmatpush1.msra.mxu0 0.0
  %287 = vmatprep.subr.mxu0 0.0
  %288 = vmatpush1.msra.mxu0 0.0
  %289 = vmatprep.subr.mxu0 0.0
  %290 = vmatpush1.msra.mxu0 0.0
  %291 = vmatprep.subr.mxu0 0.0
  %292 = vmatpush1.msra.mxu0 0.0
  %293 = vmatprep.subr.mxu0 0.0
  %294 = vmatpush1.msra.mxu0 0.0
  %295 = vmatprep.subr.mxu0 0.0
  %296 = vmatpush1.msra.mxu0 0.0
  %297 = vmatprep.subr.mxu0 0.0
  %298 = vmatpush1.msra.mxu0 0.0
  %299 = vmatprep.subr.mxu0 0.0
  %300 = vmatpush1.msra.mxu0 0.0
  %301 = vmatprep.subr.mxu0 0.0
  %302 = vmatpush1.msra.mxu0 0.0
  %303 = vmatprep.subr.mxu0 0.0
  %304 = vmatpush1.msra.mxu0 0.0
  %305 = vmatprep.subr.mxu0 0.0
  %306 = vmatpush1.msra.mxu0 0.0
  %307 = vmatprep.subr.mxu0 0.0
  %308 = vmatpush1.msra.mxu0 0.0
  %309 = vmatprep.subr.mxu0 0.0
  %v310 = vand.u32 %v78, 4294901760
  %311 = vmatpush1.msra.mxu0 %v310
  %312 = vmatprep.subr.mxu0 0.0
  %313 = vmatpush2.msra.mxu0 0.0
  %314 = vmatprep.subr.mxu0 0.0
  %315 = vmatpush2.msra.mxu0 0.0
  %316 = vmatprep.subr.mxu0 0.0
  %317 = vmatpush2.msra.mxu0 0.0
  %318 = vmatprep.subr.mxu0 0.0
  %319 = vmatpush2.msra.mxu0 0.0
  %320 = vmatprep.subr.mxu0 0.0
  %321 = vmatpush2.msra.mxu0 0.0
  %322 = vmatprep.subr.mxu0 0.0
  %323 = vmatpush2.msra.mxu0 0.0
  %324 = vmatprep.subr.mxu0 0.0
  %325 = vmatpush2.msra.mxu0 0.0
  %326 = vmatprep.subr.mxu0 0.0
  %327 = vmatpush2.msra.mxu0 0.0
  %328 = vmatprep.subr.mxu0 0.0
  %329 = vmatpush2.msra.mxu0 0.0
  %330 = vmatprep.subr.mxu0 0.0
  %331 = vmatpush2.msra.mxu0 0.0
  %332 = vmatprep.subr.mxu0 0.0
  %333 = vmatpush2.msra.mxu0 0.0
  %334 = vmatprep.subr.mxu0 0.0
  %335 = vmatpush2.msra.mxu0 0.0
  %336 = vmatprep.subr.mxu0 0.0
  %337 = vmatpush2.msra.mxu0 0.0
  %338 = vmatprep.subr.mxu0 0.0
  %339 = vmatpush2.msra.mxu0 0.0
  %340 = vmatprep.subr.mxu0 0.0
  %341 = vmatpush2.msra.mxu0 0.0
  %342 = vmatprep.subr.mxu0 0.0
  %343 = vmatpush2.msra.mxu0 0.0
  %344 = vmatprep.mubr.f32.mxu0 0.0
  %v345 = vand.u32 %v88, 4294901760
  %v346 = vsub.f32 %v88, %v345
  %v347 = vand.u32 %v346, 4294901760
  %v348 = vsub.f32 %v346, %v347
  %v349 = vand.u32 %v348, 4294901760
  %350 = vmatmul.mubr.f32.gmra.mxu0 %v349
  %v351 = vpop.f32.mrf.mxu0
  %v352 = vadd.f32 %v84, %v351
  %v353 = vpop.f32.mrf.mxu0
  %354 = vmatprep.mubr.f32.mxu0 0.0
  %v355 = vand.u32 %v91, 4294901760
  %v356 = vsub.f32 %v91, %v355
  %v357 = vand.u32 %v356, 4294901760
  %v358 = vsub.f32 %v356, %v357
  %v359 = vand.u32 %v358, 4294901760
  %360 = vmatmul.mubr.f32.gmra.mxu0 %v359
  %v361 = vpop.f32.mrf.mxu0
  %v362 = vadd.f32 %v84, %v361
  %v363 = vpop.f32.mrf.mxu0
  %364 = vmatprep.mubr.f32.mxu0 0.0
  %v365 = vand.u32 %v94, 4294901760
  %v366 = vsub.f32 %v94, %v365
  %v367 = vand.u32 %v366, 4294901760
  %v368 = vsub.f32 %v366, %v367
  %v369 = vand.u32 %v368, 4294901760
  %370 = vmatmul.mubr.f32.gmra.mxu0 %v369
  %v371 = vpop.f32.mrf.mxu0
  %v372 = vadd.f32 %v84, %v371
  %v373 = vpop.f32.mrf.mxu0
  %374 = vmatprep.mubr.f32.mxu0 0.0
  %v375 = vand.u32 %v97, 4294901760
  %v376 = vsub.f32 %v97, %v375
  %v377 = vand.u32 %v376, 4294901760
  %v378 = vsub.f32 %v376, %v377
  %v379 = vand.u32 %v378, 4294901760
  %380 = vmatmul.mubr.f32.gmra.mxu0 %v379
  %v381 = vpop.f32.mrf.mxu0
  %v382 = vadd.f32 %v84, %v381
  %v383 = vpop.f32.mrf.mxu0
  %384 = vmatprep.mubr.f32.mxu0 0.0
  %v385 = vand.u32 %v100, 4294901760
  %v386 = vsub.f32 %v100, %v385
  %v387 = vand.u32 %v386, 4294901760
  %v388 = vsub.f32 %v386, %v387
  %v389 = vand.u32 %v388, 4294901760
  %390 = vmatmul.mubr.f32.gmra.mxu0 %v389
  %v391 = vpop.f32.mrf.mxu0
  %v392 = vadd.f32 %v84, %v391
  %v393 = vpop.f32.mrf.mxu0
  %394 = vmatprep.mubr.f32.mxu0 0.0
  %v395 = vand.u32 %v103, 4294901760
  %v396 = vsub.f32 %v103, %v395
  %v397 = vand.u32 %v396, 4294901760
  %v398 = vsub.f32 %v396, %v397
  %v399 = vand.u32 %v398, 4294901760
  %400 = vmatmul.mubr.f32.gmra.mxu0 %v399
  %v401 = vpop.f32.mrf.mxu0
  %v402 = vadd.f32 %v84, %v401
  %v403 = vpop.f32.mrf.mxu0
  %404 = vmatprep.mubr.f32.mxu0 0.0
  %v405 = vand.u32 %v106, 4294901760
  %v406 = vsub.f32 %v106, %v405
  %v407 = vand.u32 %v406, 4294901760
  %v408 = vsub.f32 %v406, %v407
  %v409 = vand.u32 %v408, 4294901760
  %410 = vmatmul.mubr.f32.gmra.mxu0 %v409
  %v411 = vpop.f32.mrf.mxu0
  %v412 = vadd.f32 %v84, %v411
  %v413 = vpop.f32.mrf.mxu0
  %414 = vmatprep.mubr.f32.mxu0 0.0
  %v415 = vand.u32 %v109, 4294901760
  %v416 = vsub.f32 %v109, %v415
  %v417 = vand.u32 %v416, 4294901760
  %v418 = vsub.f32 %v416, %v417
  %v419 = vand.u32 %v418, 4294901760
  %420 = vmatmul.mubr.f32.gmra.mxu0 %v419
  %v421 = vpop.f32.mrf.mxu0
  %v422 = vadd.f32 %v84, %v421
  %v423 = vpop.f32.mrf.mxu0
  %424 = vmatprep.mubr.f32.mxu0 0.0
  %v425 = vand.u32 %v112, 4294901760
  %v426 = vsub.f32 %v112, %v425
  %v427 = vand.u32 %v426, 4294901760
  %v428 = vsub.f32 %v426, %v427
  %v429 = vand.u32 %v428, 4294901760
  %430 = vmatmul.mubr.f32.gmra.mxu0 %v429
  %v431 = vpop.f32.mrf.mxu0
  %v432 = vadd.f32 %v84, %v431
  %v433 = vpop.f32.mrf.mxu0
  %434 = vmatprep.mubr.f32.mxu0 0.0
  %v435 = vand.u32 %v115, 4294901760
  %v436 = vsub.f32 %v115, %v435
  %v437 = vand.u32 %v436, 4294901760
  %v438 = vsub.f32 %v436, %v437
  %v439 = vand.u32 %v438, 4294901760
  %440 = vmatmul.mubr.f32.gmra.mxu0 %v439
  %v441 = vpop.f32.mrf.mxu0
  %v442 = vadd.f32 %v84, %v441
  %v443 = vpop.f32.mrf.mxu0
  %444 = vmatprep.mubr.f32.mxu0 0.0
  %v445 = vand.u32 %v118, 4294901760
  %v446 = vsub.f32 %v118, %v445
  %v447 = vand.u32 %v446, 4294901760
  %v448 = vsub.f32 %v446, %v447
  %v449 = vand.u32 %v448, 4294901760
  %450 = vmatmul.mubr.f32.gmra.mxu0 %v449
  %v451 = vpop.f32.mrf.mxu0
  %v452 = vadd.f32 %v84, %v451
  %v453 = vpop.f32.mrf.mxu0
  %454 = vmatprep.mubr.f32.mxu0 0.0
  %v455 = vand.u32 %v121, 4294901760
  %v456 = vsub.f32 %v121, %v455
  %v457 = vand.u32 %v456, 4294901760
  %v458 = vsub.f32 %v456, %v457
  %v459 = vand.u32 %v458, 4294901760
  %460 = vmatmul.mubr.f32.gmra.mxu0 %v459
  %v461 = vpop.f32.mrf.mxu0
  %v462 = vadd.f32 %v84, %v461
  %v463 = vpop.f32.mrf.mxu0
  %464 = vmatprep.mubr.f32.mxu0 0.0
  %v465 = vand.u32 %v124, 4294901760
  %v466 = vsub.f32 %v124, %v465
  %v467 = vand.u32 %v466, 4294901760
  %v468 = vsub.f32 %v466, %v467
  %v469 = vand.u32 %v468, 4294901760
  %470 = vmatmul.mubr.f32.gmra.mxu0 %v469
  %v471 = vpop.f32.mrf.mxu0
  %v472 = vadd.f32 %v84, %v471
  %v473 = vpop.f32.mrf.mxu0
  %474 = vmatprep.mubr.f32.mxu0 0.0
  %v475 = vand.u32 %v127, 4294901760
  %v476 = vsub.f32 %v127, %v475
  %v477 = vand.u32 %v476, 4294901760
  %v478 = vsub.f32 %v476, %v477
  %v479 = vand.u32 %v478, 4294901760
  %480 = vmatmul.mubr.f32.gmra.mxu0 %v479
  %v481 = vpop.f32.mrf.mxu0
  %v482 = vadd.f32 %v84, %v481
  %v483 = vpop.f32.mrf.mxu0
  %484 = vmatprep.mubr.f32.mxu0 0.0
  %v485 = vand.u32 %v130, 4294901760
  %v486 = vsub.f32 %v130, %v485
  %v487 = vand.u32 %v486, 4294901760
  %v488 = vsub.f32 %v486, %v487
  %v489 = vand.u32 %v488, 4294901760
  %490 = vmatmul.mubr.f32.gmra.mxu0 %v489
  %v491 = vpop.f32.mrf.mxu0
  %v492 = vadd.f32 %v84, %v491
  %v493 = vpop.f32.mrf.mxu0
  %494 = vmatprep.mubr.f32.mxu0 0.0
  %v495 = vand.u32 %v133, 4294901760
  %v496 = vsub.f32 %v133, %v495
  %v497 = vand.u32 %v496, 4294901760
  %v498 = vsub.f32 %v496, %v497
  %v499 = vand.u32 %v498, 4294901760
  %500 = vmatmul.mubr.f32.gmra.mxu0 %v499
  %v501 = vpop.f32.mrf.mxu0
  %v502 = vadd.f32 %v84, %v501
  %v503 = vpop.f32.mrf.mxu0
  %504 = vmatprep.mubr.f32.mxu0 0.0
  %v505 = vand.u32 %v136, 4294901760
  %v506 = vsub.f32 %v136, %v505
  %v507 = vand.u32 %v506, 4294901760
  %v508 = vsub.f32 %v506, %v507
  %v509 = vand.u32 %v508, 4294901760
  %510 = vmatmul.mubr.f32.gmra.mxu0 %v509
  %v511 = vpop.f32.mrf.mxu0
  %v512 = vadd.f32 %v84, %v511
  %v513 = vpop.f32.mrf.mxu0
  %514 = vmatprep.mubr.f32.mxu0 0.0
  %v515 = vand.u32 %v139, 4294901760
  %v516 = vsub.f32 %v139, %v515
  %v517 = vand.u32 %v516, 4294901760
  %v518 = vsub.f32 %v516, %v517
  %v519 = vand.u32 %v518, 4294901760
  %520 = vmatmul.mubr.f32.gmra.mxu0 %v519
  %v521 = vpop.f32.mrf.mxu0
  %v522 = vadd.f32 %v84, %v521
  %v523 = vpop.f32.mrf.mxu0
  %524 = vmatprep.mubr.f32.mxu0 0.0
  %v525 = vand.u32 %v142, 4294901760
  %v526 = vsub.f32 %v142, %v525
  %v527 = vand.u32 %v526, 4294901760
  %v528 = vsub.f32 %v526, %v527
  %v529 = vand.u32 %v528, 4294901760
  %530 = vmatmul.mubr.f32.gmra.mxu0 %v529
  %v531 = vpop.f32.mrf.mxu0
  %v532 = vadd.f32 %v84, %v531
  %v533 = vpop.f32.mrf.mxu0
  %534 = vmatprep.mubr.f32.mxu0 0.0
  %v535 = vand.u32 %v145, 4294901760
  %v536 = vsub.f32 %v145, %v535
  %v537 = vand.u32 %v536, 4294901760
  %v538 = vsub.f32 %v536, %v537
  %v539 = vand.u32 %v538, 4294901760
  %540 = vmatmul.mubr.f32.gmra.mxu0 %v539
  %v541 = vpop.f32.mrf.mxu0
  %v542 = vadd.f32 %v84, %v541
  %v543 = vpop.f32.mrf.mxu0
  %544 = vmatprep.mubr.f32.mxu0 0.0
  %v545 = vand.u32 %v148, 4294901760
  %v546 = vsub.f32 %v148, %v545
  %v547 = vand.u32 %v546, 4294901760
  %v548 = vsub.f32 %v546, %v547
  %v549 = vand.u32 %v548, 4294901760
  %550 = vmatmul.mubr.f32.gmra.mxu0 %v549
  %v551 = vpop.f32.mrf.mxu0
  %v552 = vadd.f32 %v84, %v551
  %v553 = vpop.f32.mrf.mxu0
  %554 = vmatprep.mubr.f32.mxu0 0.0
  %v555 = vand.u32 %v151, 4294901760
  %v556 = vsub.f32 %v151, %v555
  %v557 = vand.u32 %v556, 4294901760
  %v558 = vsub.f32 %v556, %v557
  %v559 = vand.u32 %v558, 4294901760
  %560 = vmatmul.mubr.f32.gmra.mxu0 %v559
  %v561 = vpop.f32.mrf.mxu0
  %v562 = vadd.f32 %v84, %v561
  %v563 = vpop.f32.mrf.mxu0
  %564 = vmatprep.mubr.f32.mxu0 0.0
  %v565 = vand.u32 %v154, 4294901760
  %v566 = vsub.f32 %v154, %v565
  %v567 = vand.u32 %v566, 4294901760
  %v568 = vsub.f32 %v566, %v567
  %v569 = vand.u32 %v568, 4294901760
  %570 = vmatmul.mubr.f32.gmra.mxu0 %v569
  %v571 = vpop.f32.mrf.mxu0
  %v572 = vadd.f32 %v84, %v571
  %v573 = vpop.f32.mrf.mxu0
  %574 = vmatprep.mubr.f32.mxu0 0.0
  %v575 = vand.u32 %v157, 4294901760
  %v576 = vsub.f32 %v157, %v575
  %v577 = vand.u32 %v576, 4294901760
  %v578 = vsub.f32 %v576, %v577
  %v579 = vand.u32 %v578, 4294901760
  %580 = vmatmul.mubr.f32.gmra.mxu0 %v579
  %v581 = vpop.f32.mrf.mxu0
  %v582 = vadd.f32 %v84, %v581
  %v583 = vpop.f32.mrf.mxu0
  %584 = vmatprep.mubr.f32.mxu0 0.0
  %v585 = vand.u32 %v160, 4294901760
  %v586 = vsub.f32 %v160, %v585
  %v587 = vand.u32 %v586, 4294901760
  %v588 = vsub.f32 %v586, %v587
  %v589 = vand.u32 %v588, 4294901760
  %590 = vmatmul.mubr.f32.gmra.mxu0 %v589
  %v591 = vpop.f32.mrf.mxu0
  %v592 = vadd.f32 %v84, %v591
  %v593 = vpop.f32.mrf.mxu0
  %594 = vmatprep.mubr.f32.mxu0 0.0
  %v595 = vand.u32 %v163, 4294901760
  %v596 = vsub.f32 %v163, %v595
  %v597 = vand.u32 %v596, 4294901760
  %v598 = vsub.f32 %v596, %v597
  %v599 = vand.u32 %v598, 4294901760
  %600 = vmatmul.mubr.f32.gmra.mxu0 %v599
  %v601 = vpop.f32.mrf.mxu0
  %v602 = vadd.f32 %v84, %v601
  %v603 = vpop.f32.mrf.mxu0
  %604 = vmatprep.mubr.f32.mxu0 0.0
  %v605 = vand.u32 %v166, 4294901760
  %v606 = vsub.f32 %v166, %v605
  %v607 = vand.u32 %v606, 4294901760
  %v608 = vsub.f32 %v606, %v607
  %v609 = vand.u32 %v608, 4294901760
  %610 = vmatmul.mubr.f32.gmra.mxu0 %v609
  %v611 = vpop.f32.mrf.mxu0
  %v612 = vadd.f32 %v84, %v611
  %v613 = vpop.f32.mrf.mxu0
  %614 = vmatprep.mubr.f32.mxu0 0.0
  %v615 = vand.u32 %v169, 4294901760
  %v616 = vsub.f32 %v169, %v615
  %v617 = vand.u32 %v616, 4294901760
  %v618 = vsub.f32 %v616, %v617
  %v619 = vand.u32 %v618, 4294901760
  %620 = vmatmul.mubr.f32.gmra.mxu0 %v619
  %v621 = vpop.f32.mrf.mxu0
  %v622 = vadd.f32 %v84, %v621
  %v623 = vpop.f32.mrf.mxu0
  %624 = vmatprep.mubr.f32.mxu0 0.0
  %v625 = vand.u32 %v172, 4294901760
  %v626 = vsub.f32 %v172, %v625
  %v627 = vand.u32 %v626, 4294901760
  %v628 = vsub.f32 %v626, %v627
  %v629 = vand.u32 %v628, 4294901760
  %630 = vmatmul.mubr.f32.gmra.mxu0 %v629
  %v631 = vpop.f32.mrf.mxu0
  %v632 = vadd.f32 %v84, %v631
  %v633 = vpop.f32.mrf.mxu0
  %634 = vmatprep.mubr.f32.mxu0 0.0
  %v635 = vand.u32 %v175, 4294901760
  %v636 = vsub.f32 %v175, %v635
  %v637 = vand.u32 %v636, 4294901760
  %v638 = vsub.f32 %v636, %v637
  %v639 = vand.u32 %v638, 4294901760
  %640 = vmatmul.mubr.f32.gmra.mxu0 %v639
  %v641 = vpop.f32.mrf.mxu0
  %v642 = vadd.f32 %v84, %v641
  %v643 = vpop.f32.mrf.mxu0
  %644 = vmatprep.mubr.f32.mxu0 0.0
  %v645 = vand.u32 %v178, 4294901760
  %v646 = vsub.f32 %v178, %v645
  %v647 = vand.u32 %v646, 4294901760
  %v648 = vsub.f32 %v646, %v647
  %v649 = vand.u32 %v648, 4294901760
  %650 = vmatmul.mubr.f32.gmra.mxu0 %v649
  %v651 = vpop.f32.mrf.mxu0
  %v652 = vadd.f32 %v84, %v651
  %v653 = vpop.f32.mrf.mxu0
  %654 = vmatprep.mubr.f32.mxu0 0.0
  %v655 = vand.u32 %v181, 4294901760
  %v656 = vsub.f32 %v181, %v655
  %v657 = vand.u32 %v656, 4294901760
  %v658 = vsub.f32 %v656, %v657
  %v659 = vand.u32 %v658, 4294901760
  %660 = vmatmul.mubr.f32.gmra.mxu0 %v659
  %v661 = vpop.f32.mrf.mxu0
  %v662 = vadd.f32 %v84, %v661
  %v663 = vpop.f32.mrf.mxu0
  %664 = vmatprep.mubr.f32.mxu0 0.0
  %v665 = vand.u32 %v184, 4294901760
  %v666 = vsub.f32 %v184, %v665
  %v667 = vand.u32 %v666, 4294901760
  %v668 = vsub.f32 %v666, %v667
  %v669 = vand.u32 %v668, 4294901760
  %670 = vmatmul.mubr.f32.gmra.mxu0 %v669
  %v671 = vpop.f32.mrf.mxu0
  %v672 = vadd.f32 %v84, %v671
  %v673 = vpop.f32.mrf.mxu0
  %674 = vmatprep.mubr.f32.mxu0 0.0
  %v675 = vand.u32 %v187, 4294901760
  %v676 = vsub.f32 %v187, %v675
  %v677 = vand.u32 %v676, 4294901760
  %v678 = vsub.f32 %v676, %v677
  %v679 = vand.u32 %v678, 4294901760
  %680 = vmatmul.mubr.f32.gmra.mxu0 %v679
  %v681 = vpop.f32.mrf.mxu0
  %v682 = vadd.f32 %v84, %v681
  %v683 = vpop.f32.mrf.mxu0
  %684 = vmatprep.mubr.f32.mxu0 0.0
  %v685 = vand.u32 %v190, 4294901760
  %v686 = vsub.f32 %v190, %v685
  %v687 = vand.u32 %v686, 4294901760
  %v688 = vsub.f32 %v686, %v687
  %v689 = vand.u32 %v688, 4294901760
  %690 = vmatmul.mubr.f32.gmra.mxu0 %v689
  %v691 = vpop.f32.mrf.mxu0
  %v692 = vadd.f32 %v84, %v691
  %v693 = vpop.f32.mrf.mxu0
  %694 = vmatprep.mubr.f32.mxu0 0.0
  %v695 = vand.u32 %v193, 4294901760
  %v696 = vsub.f32 %v193, %v695
  %v697 = vand.u32 %v696, 4294901760
  %v698 = vsub.f32 %v696, %v697
  %v699 = vand.u32 %v698, 4294901760
  %700 = vmatmul.mubr.f32.gmra.mxu0 %v699
  %v701 = vpop.f32.mrf.mxu0
  %v702 = vadd.f32 %v84, %v701
  %v703 = vpop.f32.mrf.mxu0
  %704 = vmatprep.mubr.f32.mxu0 0.0
  %v705 = vand.u32 %v196, 4294901760
  %v706 = vsub.f32 %v196, %v705
  %v707 = vand.u32 %v706, 4294901760
  %v708 = vsub.f32 %v706, %v707
  %v709 = vand.u32 %v708, 4294901760
  %710 = vmatmul.mubr.f32.gmra.mxu0 %v709
  %v711 = vpop.f32.mrf.mxu0
  %v712 = vadd.f32 %v84, %v711
  %v713 = vpop.f32.mrf.mxu0
  %714 = vmatprep.mubr.f32.mxu0 0.0
  %v715 = vand.u32 %v199, 4294901760
  %v716 = vsub.f32 %v199, %v715
  %v717 = vand.u32 %v716, 4294901760
  %v718 = vsub.f32 %v716, %v717
  %v719 = vand.u32 %v718, 4294901760
  %720 = vmatmul.mubr.f32.gmra.mxu0 %v719
  %v721 = vpop.f32.mrf.mxu0
  %v722 = vadd.f32 %v84, %v721
  %v723 = vpop.f32.mrf.mxu0
  %724 = vmatprep.mubr.f32.mxu0 0.0
  %v725 = vand.u32 %v202, 4294901760
  %v726 = vsub.f32 %v202, %v725
  %v727 = vand.u32 %v726, 4294901760
  %v728 = vsub.f32 %v726, %v727
  %v729 = vand.u32 %v728, 4294901760
  %730 = vmatmul.mubr.f32.gmra.mxu0 %v729
  %v731 = vpop.f32.mrf.mxu0
  %v732 = vadd.f32 %v84, %v731
  %v733 = vpop.f32.mrf.mxu0
  %734 = vmatprep.mubr.f32.mxu0 0.0
  %v735 = vand.u32 %v205, 4294901760
  %v736 = vsub.f32 %v205, %v735
  %v737 = vand.u32 %v736, 4294901760
  %v738 = vsub.f32 %v736, %v737
  %v739 = vand.u32 %v738, 4294901760
  %740 = vmatmul.mubr.f32.gmra.mxu0 %v739
  %v741 = vpop.f32.mrf.mxu0
  %v742 = vadd.f32 %v84, %v741
  %v743 = vpop.f32.mrf.mxu0
  %744 = vmatprep.mubr.f32.mxu0 0.0
  %v745 = vand.u32 %v208, 4294901760
  %v746 = vsub.f32 %v208, %v745
  %v747 = vand.u32 %v746, 4294901760
  %v748 = vsub.f32 %v746, %v747
  %v749 = vand.u32 %v748, 4294901760
  %750 = vmatmul.mubr.f32.gmra.mxu0 %v749
  %v751 = vpop.f32.mrf.mxu0
  %v752 = vadd.f32 %v84, %v751
  %v753 = vpop.f32.mrf.mxu0
  %754 = vmatprep.mubr.f32.mxu0 0.0
  %v755 = vand.u32 %v211, 4294901760
  %v756 = vsub.f32 %v211, %v755
  %v757 = vand.u32 %v756, 4294901760
  %v758 = vsub.f32 %v756, %v757
  %v759 = vand.u32 %v758, 4294901760
  %760 = vmatmul.mubr.f32.gmra.mxu0 %v759
  %v761 = vpop.f32.mrf.mxu0
  %v762 = vadd.f32 %v84, %v761
  %v763 = vpop.f32.mrf.mxu0
  %764 = vmatprep.mubr.f32.mxu0 0.0
  %v765 = vand.u32 %v214, 4294901760
  %v766 = vsub.f32 %v214, %v765
  %v767 = vand.u32 %v766, 4294901760
  %v768 = vsub.f32 %v766, %v767
  %v769 = vand.u32 %v768, 4294901760
  %770 = vmatmul.mubr.f32.gmra.mxu0 %v769
  %v771 = vpop.f32.mrf.mxu0
  %v772 = vadd.f32 %v84, %v771
  %v773 = vpop.f32.mrf.mxu0
  %774 = vmatprep.mubr.f32.mxu0 0.0
  %v775 = vand.u32 %v217, 4294901760
  %v776 = vsub.f32 %v217, %v775
  %v777 = vand.u32 %v776, 4294901760
  %v778 = vsub.f32 %v776, %v777
  %v779 = vand.u32 %v778, 4294901760
  %780 = vmatmul.mubr.f32.gmra.mxu0 %v779
  %v781 = vpop.f32.mrf.mxu0
  %v782 = vadd.f32 %v84, %v781
  %v783 = vpop.f32.mrf.mxu0
  %784 = vmatprep.mubr.f32.mxu0 0.0
  %v785 = vand.u32 %v220, 4294901760
  %v786 = vsub.f32 %v220, %v785
  %v787 = vand.u32 %v786, 4294901760
  %v788 = vsub.f32 %v786, %v787
  %v789 = vand.u32 %v788, 4294901760
  %790 = vmatmul.mubr.f32.gmra.mxu0 %v789
  %v791 = vpop.f32.mrf.mxu0
  %v792 = vadd.f32 %v84, %v791
  %v793 = vpop.f32.mrf.mxu0
  %794 = vmatprep.mubr.f32.mxu0 0.0
  %v795 = vand.u32 %v223, 4294901760
  %v796 = vsub.f32 %v223, %v795
  %v797 = vand.u32 %v796, 4294901760
  %v798 = vsub.f32 %v796, %v797
  %v799 = vand.u32 %v798, 4294901760
  %800 = vmatmul.mubr.f32.gmra.mxu0 %v799
  %v801 = vpop.f32.mrf.mxu0
  %v802 = vadd.f32 %v84, %v801
  %v803 = vpop.f32.mrf.mxu0
  %804 = vmatprep.mubr.f32.mxu0 0.0
  %v805 = vand.u32 %v226, 4294901760
  %v806 = vsub.f32 %v226, %v805
  %v807 = vand.u32 %v806, 4294901760
  %v808 = vsub.f32 %v806, %v807
  %v809 = vand.u32 %v808, 4294901760
  %810 = vmatmul.mubr.f32.gmra.mxu0 %v809
  %v811 = vpop.f32.mrf.mxu0
  %v812 = vadd.f32 %v84, %v811
  %v813 = vpop.f32.mrf.mxu0
  %814 = vmatprep.mubr.f32.mxu0 0.0
  %v815 = vand.u32 %v229, 4294901760
  %v816 = vsub.f32 %v229, %v815
  %v817 = vand.u32 %v816, 4294901760
  %v818 = vsub.f32 %v816, %v817
  %v819 = vand.u32 %v818, 4294901760
  %820 = vmatmul.mubr.f32.gmra.mxu0 %v819
  %v821 = vpop.f32.mrf.mxu0
  %v822 = vadd.f32 %v84, %v821
  %v823 = vpop.f32.mrf.mxu0
  %824 = vmatprep.mubr.f32.mxu0 0.0
  %v825 = vand.u32 %v232, 4294901760
  %v826 = vsub.f32 %v232, %v825
  %v827 = vand.u32 %v826, 4294901760
  %v828 = vsub.f32 %v826, %v827
  %v829 = vand.u32 %v828, 4294901760
  %830 = vmatmul.mubr.f32.gmra.mxu0 %v829
  %v831 = vpop.f32.mrf.mxu0
  %v832 = vadd.f32 %v84, %v831
  %v833 = vpop.f32.mrf.mxu0
  %834 = vmatprep.mubr.f32.mxu0 0.0
  %v835 = vand.u32 %v235, 4294901760
  %v836 = vsub.f32 %v235, %v835
  %v837 = vand.u32 %v836, 4294901760
  %v838 = vsub.f32 %v836, %v837
  %v839 = vand.u32 %v838, 4294901760
  %840 = vmatmul.mubr.f32.gmra.mxu0 %v839
  %v841 = vpop.f32.mrf.mxu0
  %v842 = vadd.f32 %v84, %v841
  %v843 = vpop.f32.mrf.mxu0
  %844 = vmatprep.mubr.f32.mxu0 0.0
  %v845 = vand.u32 %v238, 4294901760
  %v846 = vsub.f32 %v238, %v845
  %v847 = vand.u32 %v846, 4294901760
  %v848 = vsub.f32 %v846, %v847
  %v849 = vand.u32 %v848, 4294901760
  %850 = vmatmul.mubr.f32.gmra.mxu0 %v849
  %v851 = vpop.f32.mrf.mxu0
  %v852 = vadd.f32 %v84, %v851
  %v853 = vpop.f32.mrf.mxu0
  %854 = vmatprep.mubr.f32.mxu0 0.0
  %v855 = vand.u32 %v241, 4294901760
  %v856 = vsub.f32 %v241, %v855
  %v857 = vand.u32 %v856, 4294901760
  %v858 = vsub.f32 %v856, %v857
  %v859 = vand.u32 %v858, 4294901760
  %860 = vmatmul.mubr.f32.gmra.mxu0 %v859
  %v861 = vpop.f32.mrf.mxu0
  %v862 = vadd.f32 %v84, %v861
  %v863 = vpop.f32.mrf.mxu0
  %864 = vmatprep.mubr.f32.mxu0 0.0
  %v865 = vand.u32 %v244, 4294901760
  %v866 = vsub.f32 %v244, %v865
  %v867 = vand.u32 %v866, 4294901760
  %v868 = vsub.f32 %v866, %v867
  %v869 = vand.u32 %v868, 4294901760
  %870 = vmatmul.mubr.f32.gmra.mxu0 %v869
  %v871 = vpop.f32.mrf.mxu0
  %v872 = vadd.f32 %v84, %v871
  %v873 = vpop.f32.mrf.mxu0
  %874 = vmatprep.mubr.f32.mxu0 0.0
  %v875 = vand.u32 %v247, 4294901760
  %v876 = vsub.f32 %v247, %v875
  %v877 = vand.u32 %v876, 4294901760
  %v878 = vsub.f32 %v876, %v877
  %v879 = vand.u32 %v878, 4294901760
  %880 = vmatmul.mubr.f32.gmra.mxu0 %v879
  %v881 = vpop.f32.mrf.mxu0
  %v882 = vadd.f32 %v84, %v881
  %v883 = vpop.f32.mrf.mxu0
  %884 = vmatprep.mubr.f32.mxu0 0.0
  %v885 = vand.u32 %v250, 4294901760
  %v886 = vsub.f32 %v250, %v885
  %v887 = vand.u32 %v886, 4294901760
  %v888 = vsub.f32 %v886, %v887
  %v889 = vand.u32 %v888, 4294901760
  %890 = vmatmul.mubr.f32.gmra.mxu0 %v889
  %v891 = vpop.f32.mrf.mxu0
  %v892 = vadd.f32 %v84, %v891
  %v893 = vpop.f32.mrf.mxu0
  %894 = vmatprep.mubr.f32.mxu0 0.0
  %v895 = vand.u32 %v253, 4294901760
  %v896 = vsub.f32 %v253, %v895
  %v897 = vand.u32 %v896, 4294901760
  %v898 = vsub.f32 %v896, %v897
  %v899 = vand.u32 %v898, 4294901760
  %900 = vmatmul.mubr.f32.gmra.mxu0 %v899
  %v901 = vpop.f32.mrf.mxu0
  %v902 = vadd.f32 %v84, %v901
  %v903 = vpop.f32.mrf.mxu0
  %904 = vmatprep.mubr.f32.mxu0 0.0
  %v905 = vand.u32 %v256, 4294901760
  %v906 = vsub.f32 %v256, %v905
  %v907 = vand.u32 %v906, 4294901760
  %v908 = vsub.f32 %v906, %v907
  %v909 = vand.u32 %v908, 4294901760
  %910 = vmatmul.mubr.f32.gmra.mxu0 %v909
  %v911 = vpop.f32.mrf.mxu0
  %v912 = vadd.f32 %v84, %v911
  %v913 = vpop.f32.mrf.mxu0
  %914 = vmatprep.mubr.f32.mxu0 0.0
  %v915 = vand.u32 %v259, 4294901760
  %v916 = vsub.f32 %v259, %v915
  %v917 = vand.u32 %v916, 4294901760
  %v918 = vsub.f32 %v916, %v917
  %v919 = vand.u32 %v918, 4294901760
  %920 = vmatmul.mubr.f32.gmra.mxu0 %v919
  %v921 = vpop.f32.mrf.mxu0
  %v922 = vadd.f32 %v84, %v921
  %v923 = vpop.f32.mrf.mxu0
  %924 = vmatprep.mubr.f32.mxu0 0.0
  %v925 = vand.u32 %v262, 4294901760
  %v926 = vsub.f32 %v262, %v925
  %v927 = vand.u32 %v926, 4294901760
  %v928 = vsub.f32 %v926, %v927
  %v929 = vand.u32 %v928, 4294901760
  %930 = vmatmul.mubr.f32.gmra.mxu0 %v929
  %v931 = vpop.f32.mrf.mxu0
  %v932 = vadd.f32 %v84, %v931
  %v933 = vpop.f32.mrf.mxu0
  %934 = vmatprep.mubr.f32.mxu0 0.0
  %v935 = vand.u32 %v265, 4294901760
  %v936 = vsub.f32 %v265, %v935
  %v937 = vand.u32 %v936, 4294901760
  %v938 = vsub.f32 %v936, %v937
  %v939 = vand.u32 %v938, 4294901760
  %940 = vmatmul.mubr.f32.gmra.mxu0 %v939
  %v941 = vpop.f32.mrf.mxu0
  %v942 = vadd.f32 %v84, %v941
  %v943 = vpop.f32.mrf.mxu0
  %944 = vmatprep.mubr.f32.mxu0 0.0
  %v945 = vand.u32 %v268, 4294901760
  %v946 = vsub.f32 %v268, %v945
  %v947 = vand.u32 %v946, 4294901760
  %v948 = vsub.f32 %v946, %v947
  %v949 = vand.u32 %v948, 4294901760
  %950 = vmatmul.mubr.f32.gmra.mxu0 %v949
  %v951 = vpop.f32.mrf.mxu0
  %v952 = vadd.f32 %v84, %v951
  %v953 = vpop.f32.mrf.mxu0
  %954 = vmatprep.mubr.f32.mxu0 0.0
  %v955 = vand.u32 %v271, 4294901760
  %v956 = vsub.f32 %v271, %v955
  %v957 = vand.u32 %v956, 4294901760
  %v958 = vsub.f32 %v956, %v957
  %v959 = vand.u32 %v958, 4294901760
  %960 = vmatmul.mubr.f32.gmra.mxu0 %v959
  %v961 = vpop.f32.mrf.mxu0
  %v962 = vadd.f32 %v84, %v961
  %v963 = vpop.f32.mrf.mxu0
  %964 = vmatprep.mubr.f32.mxu0 0.0
  %v965 = vand.u32 %v274, 4294901760
  %v966 = vsub.f32 %v274, %v965
  %v967 = vand.u32 %v966, 4294901760
  %v968 = vsub.f32 %v966, %v967
  %v969 = vand.u32 %v968, 4294901760
  %970 = vmatmul.mubr.f32.gmra.mxu0 %v969
  %v971 = vpop.f32.mrf.mxu0
  %v972 = vadd.f32 %v84, %v971
  %v973 = vpop.f32.mrf.mxu0
  %974 = vmatprep.mubr.f32.mxu0 0.0
  %v975 = vand.u32 %v277, 4294901760
  %v976 = vsub.f32 %v277, %v975
  %v977 = vand.u32 %v976, 4294901760
  %v978 = vsub.f32 %v976, %v977
  %v979 = vand.u32 %v978, 4294901760
  %980 = vmatmul.mubr.f32.gmra.mxu0 %v979
  %v981 = vpop.f32.mrf.mxu0
  %v982 = vadd.f32 %v84, %v981
  %v983 = vpop.f32.mrf.mxu0
  %984 = vdwg.mxu0
  %985 = vmatprep.subr.mxu0 0.0
  %986 = vmatpush1.msra.mxu0 0.0
  %987 = vmatprep.subr.mxu0 0.0
  %988 = vmatpush1.msra.mxu0 0.0
  %989 = vmatprep.subr.mxu0 0.0
  %990 = vmatpush1.msra.mxu0 0.0
  %991 = vmatprep.subr.mxu0 0.0
  %992 = vmatpush1.msra.mxu0 0.0
  %993 = vmatprep.subr.mxu0 0.0
  %994 = vmatpush1.msra.mxu0 0.0
  %995 = vmatprep.subr.mxu0 0.0
  %996 = vmatpush1.msra.mxu0 0.0
  %997 = vmatprep.subr.mxu0 0.0
  %998 = vmatpush1.msra.mxu0 0.0
  %999 = vmatprep.subr.mxu0 0.0
  %1000 = vmatpush1.msra.mxu0 0.0
  %1001 = vmatprep.subr.mxu0 0.0
  %1002 = vmatpush1.msra.mxu0 0.0
  %1003 = vmatprep.subr.mxu0 0.0
  %1004 = vmatpush1.msra.mxu0 0.0
  %1005 = vmatprep.subr.mxu0 0.0
  %1006 = vmatpush1.msra.mxu0 0.0
  %1007 = vmatprep.subr.mxu0 0.0
  %1008 = vmatpush1.msra.mxu0 0.0
  %1009 = vmatprep.subr.mxu0 0.0
  %1010 = vmatpush1.msra.mxu0 0.0
  %1011 = vmatprep.subr.mxu0 0.0
  %1012 = vmatpush1.msra.mxu0 0.0
  %1013 = vmatprep.subr.mxu0 0.0
  %1014 = vmatpush1.msra.mxu0 0.0
  %1015 = vmatprep.subr.mxu0 0.0
  %v1016 = vand.u32 %v78, 4294901760
  %v1017 = vsub.f32 %v78, %v1016
  %v1018 = vand.u32 %v1017, 4294901760
  %v1019 = vsub.f32 %v1017, %v1018
  %v1020 = vand.u32 %v1019, 4294901760
  %1021 = vmatpush1.msra.mxu0 %v1020
  %1022 = vmatprep.subr.mxu0 0.0
  %1023 = vmatpush2.msra.mxu0 0.0
  %1024 = vmatprep.subr.mxu0 0.0
  %1025 = vmatpush2.msra.mxu0 0.0
  %1026 = vmatprep.subr.mxu0 0.0
  %1027 = vmatpush2.msra.mxu0 0.0
  %1028 = vmatprep.subr.mxu0 0.0
  %1029 = vmatpush2.msra.mxu0 0.0
  %1030 = vmatprep.subr.mxu0 0.0
  %1031 = vmatpush2.msra.mxu0 0.0
  %1032 = vmatprep.subr.mxu0 0.0
  %1033 = vmatpush2.msra.mxu0 0.0
  %1034 = vmatprep.subr.mxu0 0.0
  %1035 = vmatpush2.msra.mxu0 0.0
  %1036 = vmatprep.subr.mxu0 0.0
  %1037 = vmatpush2.msra.mxu0 0.0
  %1038 = vmatprep.subr.mxu0 0.0
  %1039 = vmatpush2.msra.mxu0 0.0
  %1040 = vmatprep.subr.mxu0 0.0
  %1041 = vmatpush2.msra.mxu0 0.0
  %1042 = vmatprep.subr.mxu0 0.0
  %1043 = vmatpush2.msra.mxu0 0.0
  %1044 = vmatprep.subr.mxu0 0.0
  %1045 = vmatpush2.msra.mxu0 0.0
  %1046 = vmatprep.subr.mxu0 0.0
  %1047 = vmatpush2.msra.mxu0 0.0
  %1048 = vmatprep.subr.mxu0 0.0
  %1049 = vmatpush2.msra.mxu0 0.0
  %1050 = vmatprep.subr.mxu0 0.0
  %1051 = vmatpush2.msra.mxu0 0.0
  %1052 = vmatprep.subr.mxu0 0.0
  %1053 = vmatpush2.msra.mxu0 0.0
  %1054 = vmatprep.mubr.f32.mxu0 0.0
  %v1055 = vand.u32 %v88, 4294901760
  %1056 = vmatmul.mubr.f32.gmra.mxu0 %v1055
  %v1057 = vpop.f32.mrf.mxu0
  %v1058 = vadd.f32 %v352, %v1057
  %v1059 = vpop.f32.mrf.mxu0
  %1060 = vmatprep.mubr.f32.mxu0 0.0
  %v1061 = vand.u32 %v91, 4294901760
  %1062 = vmatmul.mubr.f32.gmra.mxu0 %v1061
  %v1063 = vpop.f32.mrf.mxu0
  %v1064 = vadd.f32 %v362, %v1063
  %v1065 = vpop.f32.mrf.mxu0
  %1066 = vmatprep.mubr.f32.mxu0 0.0
  %v1067 = vand.u32 %v94, 4294901760
  %1068 = vmatmul.mubr.f32.gmra.mxu0 %v1067
  %v1069 = vpop.f32.mrf.mxu0
  %v1070 = vadd.f32 %v372, %v1069
  %v1071 = vpop.f32.mrf.mxu0
  %1072 = vmatprep.mubr.f32.mxu0 0.0
  %v1073 = vand.u32 %v97, 4294901760
  %1074 = vmatmul.mubr.f32.gmra.mxu0 %v1073
  %v1075 = vpop.f32.mrf.mxu0
  %v1076 = vadd.f32 %v382, %v1075
  %v1077 = vpop.f32.mrf.mxu0
  %1078 = vmatprep.mubr.f32.mxu0 0.0
  %v1079 = vand.u32 %v100, 4294901760
  %1080 = vmatmul.mubr.f32.gmra.mxu0 %v1079
  %v1081 = vpop.f32.mrf.mxu0
  %v1082 = vadd.f32 %v392, %v1081
  %v1083 = vpop.f32.mrf.mxu0
  %1084 = vmatprep.mubr.f32.mxu0 0.0
  %v1085 = vand.u32 %v103, 4294901760
  %1086 = vmatmul.mubr.f32.gmra.mxu0 %v1085
  %v1087 = vpop.f32.mrf.mxu0
  %v1088 = vadd.f32 %v402, %v1087
  %v1089 = vpop.f32.mrf.mxu0
  %1090 = vmatprep.mubr.f32.mxu0 0.0
  %v1091 = vand.u32 %v106, 4294901760
  %1092 = vmatmul.mubr.f32.gmra.mxu0 %v1091
  %v1093 = vpop.f32.mrf.mxu0
  %v1094 = vadd.f32 %v412, %v1093
  %v1095 = vpop.f32.mrf.mxu0
  %1096 = vmatprep.mubr.f32.mxu0 0.0
  %v1097 = vand.u32 %v109, 4294901760
  %1098 = vmatmul.mubr.f32.gmra.mxu0 %v1097
  %v1099 = vpop.f32.mrf.mxu0
  %v1100 = vadd.f32 %v422, %v1099
  %v1101 = vpop.f32.mrf.mxu0
  %1102 = vmatprep.mubr.f32.mxu0 0.0
  %v1103 = vand.u32 %v112, 4294901760
  %1104 = vmatmul.mubr.f32.gmra.mxu0 %v1103
  %v1105 = vpop.f32.mrf.mxu0
  %v1106 = vadd.f32 %v432, %v1105
  %v1107 = vpop.f32.mrf.mxu0
  %1108 = vmatprep.mubr.f32.mxu0 0.0
  %v1109 = vand.u32 %v115, 4294901760
  %1110 = vmatmul.mubr.f32.gmra.mxu0 %v1109
  %v1111 = vpop.f32.mrf.mxu0
  %v1112 = vadd.f32 %v442, %v1111
  %v1113 = vpop.f32.mrf.mxu0
  %1114 = vmatprep.mubr.f32.mxu0 0.0
  %v1115 = vand.u32 %v118, 4294901760
  %1116 = vmatmul.mubr.f32.gmra.mxu0 %v1115
  %v1117 = vpop.f32.mrf.mxu0
  %v1118 = vadd.f32 %v452, %v1117
  %v1119 = vpop.f32.mrf.mxu0
  %1120 = vmatprep.mubr.f32.mxu0 0.0
  %v1121 = vand.u32 %v121, 4294901760
  %1122 = vmatmul.mubr.f32.gmra.mxu0 %v1121
  %v1123 = vpop.f32.mrf.mxu0
  %v1124 = vadd.f32 %v462, %v1123
  %v1125 = vpop.f32.mrf.mxu0
  %1126 = vmatprep.mubr.f32.mxu0 0.0
  %v1127 = vand.u32 %v124, 4294901760
  %1128 = vmatmul.mubr.f32.gmra.mxu0 %v1127
  %v1129 = vpop.f32.mrf.mxu0
  %v1130 = vadd.f32 %v472, %v1129
  %v1131 = vpop.f32.mrf.mxu0
  %1132 = vmatprep.mubr.f32.mxu0 0.0
  %v1133 = vand.u32 %v127, 4294901760
  %1134 = vmatmul.mubr.f32.gmra.mxu0 %v1133
  %v1135 = vpop.f32.mrf.mxu0
  %v1136 = vadd.f32 %v482, %v1135
  %v1137 = vpop.f32.mrf.mxu0
  %1138 = vmatprep.mubr.f32.mxu0 0.0
  %v1139 = vand.u32 %v130, 4294901760
  %1140 = vmatmul.mubr.f32.gmra.mxu0 %v1139
  %v1141 = vpop.f32.mrf.mxu0
  %v1142 = vadd.f32 %v492, %v1141
  %v1143 = vpop.f32.mrf.mxu0
  %1144 = vmatprep.mubr.f32.mxu0 0.0
  %v1145 = vand.u32 %v133, 4294901760
  %1146 = vmatmul.mubr.f32.gmra.mxu0 %v1145
  %v1147 = vpop.f32.mrf.mxu0
  %v1148 = vadd.f32 %v502, %v1147
  %v1149 = vpop.f32.mrf.mxu0
  %1150 = vmatprep.mubr.f32.mxu0 0.0
  %v1151 = vand.u32 %v136, 4294901760
  %1152 = vmatmul.mubr.f32.gmra.mxu0 %v1151
  %v1153 = vpop.f32.mrf.mxu0
  %v1154 = vadd.f32 %v512, %v1153
  %v1155 = vpop.f32.mrf.mxu0
  %1156 = vmatprep.mubr.f32.mxu0 0.0
  %v1157 = vand.u32 %v139, 4294901760
  %1158 = vmatmul.mubr.f32.gmra.mxu0 %v1157
  %v1159 = vpop.f32.mrf.mxu0
  %v1160 = vadd.f32 %v522, %v1159
  %v1161 = vpop.f32.mrf.mxu0
  %1162 = vmatprep.mubr.f32.mxu0 0.0
  %v1163 = vand.u32 %v142, 4294901760
  %1164 = vmatmul.mubr.f32.gmra.mxu0 %v1163
  %v1165 = vpop.f32.mrf.mxu0
  %v1166 = vadd.f32 %v532, %v1165
  %v1167 = vpop.f32.mrf.mxu0
  %1168 = vmatprep.mubr.f32.mxu0 0.0
  %v1169 = vand.u32 %v145, 4294901760
  %1170 = vmatmul.mubr.f32.gmra.mxu0 %v1169
  %v1171 = vpop.f32.mrf.mxu0
  %v1172 = vadd.f32 %v542, %v1171
  %v1173 = vpop.f32.mrf.mxu0
  %1174 = vmatprep.mubr.f32.mxu0 0.0
  %v1175 = vand.u32 %v148, 4294901760
  %1176 = vmatmul.mubr.f32.gmra.mxu0 %v1175
  %v1177 = vpop.f32.mrf.mxu0
  %v1178 = vadd.f32 %v552, %v1177
  %v1179 = vpop.f32.mrf.mxu0
  %1180 = vmatprep.mubr.f32.mxu0 0.0
  %v1181 = vand.u32 %v151, 4294901760
  %1182 = vmatmul.mubr.f32.gmra.mxu0 %v1181
  %v1183 = vpop.f32.mrf.mxu0
  %v1184 = vadd.f32 %v562, %v1183
  %v1185 = vpop.f32.mrf.mxu0
  %1186 = vmatprep.mubr.f32.mxu0 0.0
  %v1187 = vand.u32 %v154, 4294901760
  %1188 = vmatmul.mubr.f32.gmra.mxu0 %v1187
  %v1189 = vpop.f32.mrf.mxu0
  %v1190 = vadd.f32 %v572, %v1189
  %v1191 = vpop.f32.mrf.mxu0
  %1192 = vmatprep.mubr.f32.mxu0 0.0
  %v1193 = vand.u32 %v157, 4294901760
  %1194 = vmatmul.mubr.f32.gmra.mxu0 %v1193
  %v1195 = vpop.f32.mrf.mxu0
  %v1196 = vadd.f32 %v582, %v1195
  %v1197 = vpop.f32.mrf.mxu0
  %1198 = vmatprep.mubr.f32.mxu0 0.0
  %v1199 = vand.u32 %v160, 4294901760
  %1200 = vmatmul.mubr.f32.gmra.mxu0 %v1199
  %v1201 = vpop.f32.mrf.mxu0
  %v1202 = vadd.f32 %v592, %v1201
  %v1203 = vpop.f32.mrf.mxu0
  %1204 = vmatprep.mubr.f32.mxu0 0.0
  %v1205 = vand.u32 %v163, 4294901760
  %1206 = vmatmul.mubr.f32.gmra.mxu0 %v1205
  %v1207 = vpop.f32.mrf.mxu0
  %v1208 = vadd.f32 %v602, %v1207
  %v1209 = vpop.f32.mrf.mxu0
  %1210 = vmatprep.mubr.f32.mxu0 0.0
  %v1211 = vand.u32 %v166, 4294901760
  %1212 = vmatmul.mubr.f32.gmra.mxu0 %v1211
  %v1213 = vpop.f32.mrf.mxu0
  %v1214 = vadd.f32 %v612, %v1213
  %v1215 = vpop.f32.mrf.mxu0
  %1216 = vmatprep.mubr.f32.mxu0 0.0
  %v1217 = vand.u32 %v169, 4294901760
  %1218 = vmatmul.mubr.f32.gmra.mxu0 %v1217
  %v1219 = vpop.f32.mrf.mxu0
  %v1220 = vadd.f32 %v622, %v1219
  %v1221 = vpop.f32.mrf.mxu0
  %1222 = vmatprep.mubr.f32.mxu0 0.0
  %v1223 = vand.u32 %v172, 4294901760
  %1224 = vmatmul.mubr.f32.gmra.mxu0 %v1223
  %v1225 = vpop.f32.mrf.mxu0
  %v1226 = vadd.f32 %v632, %v1225
  %v1227 = vpop.f32.mrf.mxu0
  %1228 = vmatprep.mubr.f32.mxu0 0.0
  %v1229 = vand.u32 %v175, 4294901760
  %1230 = vmatmul.mubr.f32.gmra.mxu0 %v1229
  %v1231 = vpop.f32.mrf.mxu0
  %v1232 = vadd.f32 %v642, %v1231
  %v1233 = vpop.f32.mrf.mxu0
  %1234 = vmatprep.mubr.f32.mxu0 0.0
  %v1235 = vand.u32 %v178, 4294901760
  %1236 = vmatmul.mubr.f32.gmra.mxu0 %v1235
  %v1237 = vpop.f32.mrf.mxu0
  %v1238 = vadd.f32 %v652, %v1237
  %v1239 = vpop.f32.mrf.mxu0
  %1240 = vmatprep.mubr.f32.mxu0 0.0
  %v1241 = vand.u32 %v181, 4294901760
  %1242 = vmatmul.mubr.f32.gmra.mxu0 %v1241
  %v1243 = vpop.f32.mrf.mxu0
  %v1244 = vadd.f32 %v662, %v1243
  %v1245 = vpop.f32.mrf.mxu0
  %1246 = vmatprep.mubr.f32.mxu0 0.0
  %v1247 = vand.u32 %v184, 4294901760
  %1248 = vmatmul.mubr.f32.gmra.mxu0 %v1247
  %v1249 = vpop.f32.mrf.mxu0
  %v1250 = vadd.f32 %v672, %v1249
  %v1251 = vpop.f32.mrf.mxu0
  %1252 = vmatprep.mubr.f32.mxu0 0.0
  %v1253 = vand.u32 %v187, 4294901760
  %1254 = vmatmul.mubr.f32.gmra.mxu0 %v1253
  %v1255 = vpop.f32.mrf.mxu0
  %v1256 = vadd.f32 %v682, %v1255
  %v1257 = vpop.f32.mrf.mxu0
  %1258 = vmatprep.mubr.f32.mxu0 0.0
  %v1259 = vand.u32 %v190, 4294901760
  %1260 = vmatmul.mubr.f32.gmra.mxu0 %v1259
  %v1261 = vpop.f32.mrf.mxu0
  %v1262 = vadd.f32 %v692, %v1261
  %v1263 = vpop.f32.mrf.mxu0
  %1264 = vmatprep.mubr.f32.mxu0 0.0
  %v1265 = vand.u32 %v193, 4294901760
  %1266 = vmatmul.mubr.f32.gmra.mxu0 %v1265
  %v1267 = vpop.f32.mrf.mxu0
  %v1268 = vadd.f32 %v702, %v1267
  %v1269 = vpop.f32.mrf.mxu0
  %1270 = vmatprep.mubr.f32.mxu0 0.0
  %v1271 = vand.u32 %v196, 4294901760
  %1272 = vmatmul.mubr.f32.gmra.mxu0 %v1271
  %v1273 = vpop.f32.mrf.mxu0
  %v1274 = vadd.f32 %v712, %v1273
  %v1275 = vpop.f32.mrf.mxu0
  %1276 = vmatprep.mubr.f32.mxu0 0.0
  %v1277 = vand.u32 %v199, 4294901760
  %1278 = vmatmul.mubr.f32.gmra.mxu0 %v1277
  %v1279 = vpop.f32.mrf.mxu0
  %v1280 = vadd.f32 %v722, %v1279
  %v1281 = vpop.f32.mrf.mxu0
  %1282 = vmatprep.mubr.f32.mxu0 0.0
  %v1283 = vand.u32 %v202, 4294901760
  %1284 = vmatmul.mubr.f32.gmra.mxu0 %v1283
  %v1285 = vpop.f32.mrf.mxu0
  %v1286 = vadd.f32 %v732, %v1285
  %v1287 = vpop.f32.mrf.mxu0
  %1288 = vmatprep.mubr.f32.mxu0 0.0
  %v1289 = vand.u32 %v205, 4294901760
  %1290 = vmatmul.mubr.f32.gmra.mxu0 %v1289
  %v1291 = vpop.f32.mrf.mxu0
  %v1292 = vadd.f32 %v742, %v1291
  %v1293 = vpop.f32.mrf.mxu0
  %1294 = vmatprep.mubr.f32.mxu0 0.0
  %v1295 = vand.u32 %v208, 4294901760
  %1296 = vmatmul.mubr.f32.gmra.mxu0 %v1295
  %v1297 = vpop.f32.mrf.mxu0
  %v1298 = vadd.f32 %v752, %v1297
  %v1299 = vpop.f32.mrf.mxu0
  %1300 = vmatprep.mubr.f32.mxu0 0.0
  %v1301 = vand.u32 %v211, 4294901760
  %1302 = vmatmul.mubr.f32.gmra.mxu0 %v1301
  %v1303 = vpop.f32.mrf.mxu0
  %v1304 = vadd.f32 %v762, %v1303
  %v1305 = vpop.f32.mrf.mxu0
  %1306 = vmatprep.mubr.f32.mxu0 0.0
  %v1307 = vand.u32 %v214, 4294901760
  %1308 = vmatmul.mubr.f32.gmra.mxu0 %v1307
  %v1309 = vpop.f32.mrf.mxu0
  %v1310 = vadd.f32 %v772, %v1309
  %v1311 = vpop.f32.mrf.mxu0
  %1312 = vmatprep.mubr.f32.mxu0 0.0
  %v1313 = vand.u32 %v217, 4294901760
  %1314 = vmatmul.mubr.f32.gmra.mxu0 %v1313
  %v1315 = vpop.f32.mrf.mxu0
  %v1316 = vadd.f32 %v782, %v1315
  %v1317 = vpop.f32.mrf.mxu0
  %1318 = vmatprep.mubr.f32.mxu0 0.0
  %v1319 = vand.u32 %v220, 4294901760
  %1320 = vmatmul.mubr.f32.gmra.mxu0 %v1319
  %v1321 = vpop.f32.mrf.mxu0
  %v1322 = vadd.f32 %v792, %v1321
  %v1323 = vpop.f32.mrf.mxu0
  %1324 = vmatprep.mubr.f32.mxu0 0.0
  %v1325 = vand.u32 %v223, 4294901760
  %1326 = vmatmul.mubr.f32.gmra.mxu0 %v1325
  %v1327 = vpop.f32.mrf.mxu0
  %v1328 = vadd.f32 %v802, %v1327
  %v1329 = vpop.f32.mrf.mxu0
  %1330 = vmatprep.mubr.f32.mxu0 0.0
  %v1331 = vand.u32 %v226, 4294901760
  %1332 = vmatmul.mubr.f32.gmra.mxu0 %v1331
  %v1333 = vpop.f32.mrf.mxu0
  %v1334 = vadd.f32 %v812, %v1333
  %v1335 = vpop.f32.mrf.mxu0
  %1336 = vmatprep.mubr.f32.mxu0 0.0
  %v1337 = vand.u32 %v229, 4294901760
  %1338 = vmatmul.mubr.f32.gmra.mxu0 %v1337
  %v1339 = vpop.f32.mrf.mxu0
  %v1340 = vadd.f32 %v822, %v1339
  %v1341 = vpop.f32.mrf.mxu0
  %1342 = vmatprep.mubr.f32.mxu0 0.0
  %v1343 = vand.u32 %v232, 4294901760
  %1344 = vmatmul.mubr.f32.gmra.mxu0 %v1343
  %v1345 = vpop.f32.mrf.mxu0
  %v1346 = vadd.f32 %v832, %v1345
  %v1347 = vpop.f32.mrf.mxu0
  %1348 = vmatprep.mubr.f32.mxu0 0.0
  %v1349 = vand.u32 %v235, 4294901760
  %1350 = vmatmul.mubr.f32.gmra.mxu0 %v1349
  %v1351 = vpop.f32.mrf.mxu0
  %v1352 = vadd.f32 %v842, %v1351
  %v1353 = vpop.f32.mrf.mxu0
  %1354 = vmatprep.mubr.f32.mxu0 0.0
  %v1355 = vand.u32 %v238, 4294901760
  %1356 = vmatmul.mubr.f32.gmra.mxu0 %v1355
  %v1357 = vpop.f32.mrf.mxu0
  %v1358 = vadd.f32 %v852, %v1357
  %v1359 = vpop.f32.mrf.mxu0
  %1360 = vmatprep.mubr.f32.mxu0 0.0
  %v1361 = vand.u32 %v241, 4294901760
  %1362 = vmatmul.mubr.f32.gmra.mxu0 %v1361
  %v1363 = vpop.f32.mrf.mxu0
  %v1364 = vadd.f32 %v862, %v1363
  %v1365 = vpop.f32.mrf.mxu0
  %1366 = vmatprep.mubr.f32.mxu0 0.0
  %v1367 = vand.u32 %v244, 4294901760
  %1368 = vmatmul.mubr.f32.gmra.mxu0 %v1367
  %v1369 = vpop.f32.mrf.mxu0
  %v1370 = vadd.f32 %v872, %v1369
  %v1371 = vpop.f32.mrf.mxu0
  %1372 = vmatprep.mubr.f32.mxu0 0.0
  %v1373 = vand.u32 %v247, 4294901760
  %1374 = vmatmul.mubr.f32.gmra.mxu0 %v1373
  %v1375 = vpop.f32.mrf.mxu0
  %v1376 = vadd.f32 %v882, %v1375
  %v1377 = vpop.f32.mrf.mxu0
  %1378 = vmatprep.mubr.f32.mxu0 0.0
  %v1379 = vand.u32 %v250, 4294901760
  %1380 = vmatmul.mubr.f32.gmra.mxu0 %v1379
  %v1381 = vpop.f32.mrf.mxu0
  %v1382 = vadd.f32 %v892, %v1381
  %v1383 = vpop.f32.mrf.mxu0
  %1384 = vmatprep.mubr.f32.mxu0 0.0
  %v1385 = vand.u32 %v253, 4294901760
  %1386 = vmatmul.mubr.f32.gmra.mxu0 %v1385
  %v1387 = vpop.f32.mrf.mxu0
  %v1388 = vadd.f32 %v902, %v1387
  %v1389 = vpop.f32.mrf.mxu0
  %1390 = vmatprep.mubr.f32.mxu0 0.0
  %v1391 = vand.u32 %v256, 4294901760
  %1392 = vmatmul.mubr.f32.gmra.mxu0 %v1391
  %v1393 = vpop.f32.mrf.mxu0
  %v1394 = vadd.f32 %v912, %v1393
  %v1395 = vpop.f32.mrf.mxu0
  %1396 = vmatprep.mubr.f32.mxu0 0.0
  %v1397 = vand.u32 %v259, 4294901760
  %1398 = vmatmul.mubr.f32.gmra.mxu0 %v1397
  %v1399 = vpop.f32.mrf.mxu0
  %v1400 = vadd.f32 %v922, %v1399
  %v1401 = vpop.f32.mrf.mxu0
  %1402 = vmatprep.mubr.f32.mxu0 0.0
  %v1403 = vand.u32 %v262, 4294901760
  %1404 = vmatmul.mubr.f32.gmra.mxu0 %v1403
  %v1405 = vpop.f32.mrf.mxu0
  %v1406 = vadd.f32 %v932, %v1405
  %v1407 = vpop.f32.mrf.mxu0
  %1408 = vmatprep.mubr.f32.mxu0 0.0
  %v1409 = vand.u32 %v265, 4294901760
  %1410 = vmatmul.mubr.f32.gmra.mxu0 %v1409
  %v1411 = vpop.f32.mrf.mxu0
  %v1412 = vadd.f32 %v942, %v1411
  %v1413 = vpop.f32.mrf.mxu0
  %1414 = vmatprep.mubr.f32.mxu0 0.0
  %v1415 = vand.u32 %v268, 4294901760
  %1416 = vmatmul.mubr.f32.gmra.mxu0 %v1415
  %v1417 = vpop.f32.mrf.mxu0
  %v1418 = vadd.f32 %v952, %v1417
  %v1419 = vpop.f32.mrf.mxu0
  %1420 = vmatprep.mubr.f32.mxu0 0.0
  %v1421 = vand.u32 %v271, 4294901760
  %1422 = vmatmul.mubr.f32.gmra.mxu0 %v1421
  %v1423 = vpop.f32.mrf.mxu0
  %v1424 = vadd.f32 %v962, %v1423
  %v1425 = vpop.f32.mrf.mxu0
  %1426 = vmatprep.mubr.f32.mxu0 0.0
  %v1427 = vand.u32 %v274, 4294901760
  %1428 = vmatmul.mubr.f32.gmra.mxu0 %v1427
  %v1429 = vpop.f32.mrf.mxu0
  %v1430 = vadd.f32 %v972, %v1429
  %v1431 = vpop.f32.mrf.mxu0
  %1432 = vmatprep.mubr.f32.mxu0 0.0
  %v1433 = vand.u32 %v277, 4294901760
  %1434 = vmatmul.mubr.f32.gmra.mxu0 %v1433
  %v1435 = vpop.f32.mrf.mxu0
  %v1436 = vadd.f32 %v982, %v1435
  %v1437 = vpop.f32.mrf.mxu0
  %1438 = vdwg.mxu0
  %1439 = vmatprep.subr.mxu0 0.0
  %1440 = vmatpush1.msra.mxu0 0.0
  %1441 = vmatprep.subr.mxu0 0.0
  %1442 = vmatpush1.msra.mxu0 0.0
  %1443 = vmatprep.subr.mxu0 0.0
  %1444 = vmatpush1.msra.mxu0 0.0
  %1445 = vmatprep.subr.mxu0 0.0
  %1446 = vmatpush1.msra.mxu0 0.0
  %1447 = vmatprep.subr.mxu0 0.0
  %1448 = vmatpush1.msra.mxu0 0.0
  %1449 = vmatprep.subr.mxu0 0.0
  %1450 = vmatpush1.msra.mxu0 0.0
  %1451 = vmatprep.subr.mxu0 0.0
  %1452 = vmatpush1.msra.mxu0 0.0
  %1453 = vmatprep.subr.mxu0 0.0
  %1454 = vmatpush1.msra.mxu0 0.0
  %1455 = vmatprep.subr.mxu0 0.0
  %1456 = vmatpush1.msra.mxu0 0.0
  %1457 = vmatprep.subr.mxu0 0.0
  %1458 = vmatpush1.msra.mxu0 0.0
  %1459 = vmatprep.subr.mxu0 0.0
  %1460 = vmatpush1.msra.mxu0 0.0
  %1461 = vmatprep.subr.mxu0 0.0
  %1462 = vmatpush1.msra.mxu0 0.0
  %1463 = vmatprep.subr.mxu0 0.0
  %1464 = vmatpush1.msra.mxu0 0.0
  %1465 = vmatprep.subr.mxu0 0.0
  %1466 = vmatpush1.msra.mxu0 0.0
  %1467 = vmatprep.subr.mxu0 0.0
  %1468 = vmatpush1.msra.mxu0 0.0
  %1469 = vmatprep.subr.mxu0 0.0
  %v1470 = vand.u32 %v78, 4294901760
  %v1471 = vsub.f32 %v78, %v1470
  %1472 = vmatpush1.msra.mxu0 %v1471
  %1473 = vmatprep.subr.mxu0 0.0
  %1474 = vmatpush2.msra.mxu0 0.0
  %1475 = vmatprep.subr.mxu0 0.0
  %1476 = vmatpush2.msra.mxu0 0.0
  %1477 = vmatprep.subr.mxu0 0.0
  %1478 = vmatpush2.msra.mxu0 0.0
  %1479 = vmatprep.subr.mxu0 0.0
  %1480 = vmatpush2.msra.mxu0 0.0
  %1481 = vmatprep.subr.mxu0 0.0
  %1482 = vmatpush2.msra.mxu0 0.0
  %1483 = vmatprep.subr.mxu0 0.0
  %1484 = vmatpush2.msra.mxu0 0.0
  %1485 = vmatprep.subr.mxu0 0.0
  %1486 = vmatpush2.msra.mxu0 0.0
  %1487 = vmatprep.subr.mxu0 0.0
  %1488 = vmatpush2.msra.mxu0 0.0
  %1489 = vmatprep.subr.mxu0 0.0
  %1490 = vmatpush2.msra.mxu0 0.0
  %1491 = vmatprep.subr.mxu0 0.0
  %1492 = vmatpush2.msra.mxu0 0.0
  %1493 = vmatprep.subr.mxu0 0.0
  %1494 = vmatpush2.msra.mxu0 0.0
  %1495 = vmatprep.subr.mxu0 0.0
  %1496 = vmatpush2.msra.mxu0 0.0
  %1497 = vmatprep.subr.mxu0 0.0
  %1498 = vmatpush2.msra.mxu0 0.0
  %1499 = vmatprep.subr.mxu0 0.0
  %1500 = vmatpush2.msra.mxu0 0.0
  %1501 = vmatprep.subr.mxu0 0.0
  %1502 = vmatpush2.msra.mxu0 0.0
  %1503 = vmatprep.subr.mxu0 0.0
  %1504 = vmatpush2.msra.mxu0 0.0
  %1505 = vmatprep.mubr.f32.mxu0 0.0
  %v1506 = vand.u32 %v88, 4294901760
  %v1507 = vsub.f32 %v88, %v1506
  %1508 = vmatmul.mubr.f32.gmra.mxu0 %v1507
  %v1509 = vpop.f32.mrf.mxu0
  %v1510 = vadd.f32 %v1058, %v1509
  %v1511 = vpop.f32.mrf.mxu0
  %1512 = vmatprep.mubr.f32.mxu0 0.0
  %v1513 = vand.u32 %v91, 4294901760
  %v1514 = vsub.f32 %v91, %v1513
  %1515 = vmatmul.mubr.f32.gmra.mxu0 %v1514
  %v1516 = vpop.f32.mrf.mxu0
  %v1517 = vadd.f32 %v1064, %v1516
  %v1518 = vpop.f32.mrf.mxu0
  %1519 = vmatprep.mubr.f32.mxu0 0.0
  %v1520 = vand.u32 %v94, 4294901760
  %v1521 = vsub.f32 %v94, %v1520
  %1522 = vmatmul.mubr.f32.gmra.mxu0 %v1521
  %v1523 = vpop.f32.mrf.mxu0
  %v1524 = vadd.f32 %v1070, %v1523
  %v1525 = vpop.f32.mrf.mxu0
  %1526 = vmatprep.mubr.f32.mxu0 0.0
  %v1527 = vand.u32 %v97, 4294901760
  %v1528 = vsub.f32 %v97, %v1527
  %1529 = vmatmul.mubr.f32.gmra.mxu0 %v1528
  %v1530 = vpop.f32.mrf.mxu0
  %v1531 = vadd.f32 %v1076, %v1530
  %v1532 = vpop.f32.mrf.mxu0
  %1533 = vmatprep.mubr.f32.mxu0 0.0
  %v1534 = vand.u32 %v100, 4294901760
  %v1535 = vsub.f32 %v100, %v1534
  %1536 = vmatmul.mubr.f32.gmra.mxu0 %v1535
  %v1537 = vpop.f32.mrf.mxu0
  %v1538 = vadd.f32 %v1082, %v1537
  %v1539 = vpop.f32.mrf.mxu0
  %1540 = vmatprep.mubr.f32.mxu0 0.0
  %v1541 = vand.u32 %v103, 4294901760
  %v1542 = vsub.f32 %v103, %v1541
  %1543 = vmatmul.mubr.f32.gmra.mxu0 %v1542
  %v1544 = vpop.f32.mrf.mxu0
  %v1545 = vadd.f32 %v1088, %v1544
  %v1546 = vpop.f32.mrf.mxu0
  %1547 = vmatprep.mubr.f32.mxu0 0.0
  %v1548 = vand.u32 %v106, 4294901760
  %v1549 = vsub.f32 %v106, %v1548
  %1550 = vmatmul.mubr.f32.gmra.mxu0 %v1549
  %v1551 = vpop.f32.mrf.mxu0
  %v1552 = vadd.f32 %v1094, %v1551
  %v1553 = vpop.f32.mrf.mxu0
  %1554 = vmatprep.mubr.f32.mxu0 0.0
  %v1555 = vand.u32 %v109, 4294901760
  %v1556 = vsub.f32 %v109, %v1555
  %1557 = vmatmul.mubr.f32.gmra.mxu0 %v1556
  %v1558 = vpop.f32.mrf.mxu0
  %v1559 = vadd.f32 %v1100, %v1558
  %v1560 = vpop.f32.mrf.mxu0
  %1561 = vmatprep.mubr.f32.mxu0 0.0
  %v1562 = vand.u32 %v112, 4294901760
  %v1563 = vsub.f32 %v112, %v1562
  %1564 = vmatmul.mubr.f32.gmra.mxu0 %v1563
  %v1565 = vpop.f32.mrf.mxu0
  %v1566 = vadd.f32 %v1106, %v1565
  %v1567 = vpop.f32.mrf.mxu0
  %1568 = vmatprep.mubr.f32.mxu0 0.0
  %v1569 = vand.u32 %v115, 4294901760
  %v1570 = vsub.f32 %v115, %v1569
  %1571 = vmatmul.mubr.f32.gmra.mxu0 %v1570
  %v1572 = vpop.f32.mrf.mxu0
  %v1573 = vadd.f32 %v1112, %v1572
  %v1574 = vpop.f32.mrf.mxu0
  %1575 = vmatprep.mubr.f32.mxu0 0.0
  %v1576 = vand.u32 %v118, 4294901760
  %v1577 = vsub.f32 %v118, %v1576
  %1578 = vmatmul.mubr.f32.gmra.mxu0 %v1577
  %v1579 = vpop.f32.mrf.mxu0
  %v1580 = vadd.f32 %v1118, %v1579
  %v1581 = vpop.f32.mrf.mxu0
  %1582 = vmatprep.mubr.f32.mxu0 0.0
  %v1583 = vand.u32 %v121, 4294901760
  %v1584 = vsub.f32 %v121, %v1583
  %1585 = vmatmul.mubr.f32.gmra.mxu0 %v1584
  %v1586 = vpop.f32.mrf.mxu0
  %v1587 = vadd.f32 %v1124, %v1586
  %v1588 = vpop.f32.mrf.mxu0
  %1589 = vmatprep.mubr.f32.mxu0 0.0
  %v1590 = vand.u32 %v124, 4294901760
  %v1591 = vsub.f32 %v124, %v1590
  %1592 = vmatmul.mubr.f32.gmra.mxu0 %v1591
  %v1593 = vpop.f32.mrf.mxu0
  %v1594 = vadd.f32 %v1130, %v1593
  %v1595 = vpop.f32.mrf.mxu0
  %1596 = vmatprep.mubr.f32.mxu0 0.0
  %v1597 = vand.u32 %v127, 4294901760
  %v1598 = vsub.f32 %v127, %v1597
  %1599 = vmatmul.mubr.f32.gmra.mxu0 %v1598
  %v1600 = vpop.f32.mrf.mxu0
  %v1601 = vadd.f32 %v1136, %v1600
  %v1602 = vpop.f32.mrf.mxu0
  %1603 = vmatprep.mubr.f32.mxu0 0.0
  %v1604 = vand.u32 %v130, 4294901760
  %v1605 = vsub.f32 %v130, %v1604
  %1606 = vmatmul.mubr.f32.gmra.mxu0 %v1605
  %v1607 = vpop.f32.mrf.mxu0
  %v1608 = vadd.f32 %v1142, %v1607
  %v1609 = vpop.f32.mrf.mxu0
  %1610 = vmatprep.mubr.f32.mxu0 0.0
  %v1611 = vand.u32 %v133, 4294901760
  %v1612 = vsub.f32 %v133, %v1611
  %1613 = vmatmul.mubr.f32.gmra.mxu0 %v1612
  %v1614 = vpop.f32.mrf.mxu0
  %v1615 = vadd.f32 %v1148, %v1614
  %v1616 = vpop.f32.mrf.mxu0
  %1617 = vmatprep.mubr.f32.mxu0 0.0
  %v1618 = vand.u32 %v136, 4294901760
  %v1619 = vsub.f32 %v136, %v1618
  %1620 = vmatmul.mubr.f32.gmra.mxu0 %v1619
  %v1621 = vpop.f32.mrf.mxu0
  %v1622 = vadd.f32 %v1154, %v1621
  %v1623 = vpop.f32.mrf.mxu0
  %1624 = vmatprep.mubr.f32.mxu0 0.0
  %v1625 = vand.u32 %v139, 4294901760
  %v1626 = vsub.f32 %v139, %v1625
  %1627 = vmatmul.mubr.f32.gmra.mxu0 %v1626
  %v1628 = vpop.f32.mrf.mxu0
  %v1629 = vadd.f32 %v1160, %v1628
  %v1630 = vpop.f32.mrf.mxu0
  %1631 = vmatprep.mubr.f32.mxu0 0.0
  %v1632 = vand.u32 %v142, 4294901760
  %v1633 = vsub.f32 %v142, %v1632
  %1634 = vmatmul.mubr.f32.gmra.mxu0 %v1633
  %v1635 = vpop.f32.mrf.mxu0
  %v1636 = vadd.f32 %v1166, %v1635
  %v1637 = vpop.f32.mrf.mxu0
  %1638 = vmatprep.mubr.f32.mxu0 0.0
  %v1639 = vand.u32 %v145, 4294901760
  %v1640 = vsub.f32 %v145, %v1639
  %1641 = vmatmul.mubr.f32.gmra.mxu0 %v1640
  %v1642 = vpop.f32.mrf.mxu0
  %v1643 = vadd.f32 %v1172, %v1642
  %v1644 = vpop.f32.mrf.mxu0
  %1645 = vmatprep.mubr.f32.mxu0 0.0
  %v1646 = vand.u32 %v148, 4294901760
  %v1647 = vsub.f32 %v148, %v1646
  %1648 = vmatmul.mubr.f32.gmra.mxu0 %v1647
  %v1649 = vpop.f32.mrf.mxu0
  %v1650 = vadd.f32 %v1178, %v1649
  %v1651 = vpop.f32.mrf.mxu0
  %1652 = vmatprep.mubr.f32.mxu0 0.0
  %v1653 = vand.u32 %v151, 4294901760
  %v1654 = vsub.f32 %v151, %v1653
  %1655 = vmatmul.mubr.f32.gmra.mxu0 %v1654
  %v1656 = vpop.f32.mrf.mxu0
  %v1657 = vadd.f32 %v1184, %v1656
  %v1658 = vpop.f32.mrf.mxu0
  %1659 = vmatprep.mubr.f32.mxu0 0.0
  %v1660 = vand.u32 %v154, 4294901760
  %v1661 = vsub.f32 %v154, %v1660
  %1662 = vmatmul.mubr.f32.gmra.mxu0 %v1661
  %v1663 = vpop.f32.mrf.mxu0
  %v1664 = vadd.f32 %v1190, %v1663
  %v1665 = vpop.f32.mrf.mxu0
  %1666 = vmatprep.mubr.f32.mxu0 0.0
  %v1667 = vand.u32 %v157, 4294901760
  %v1668 = vsub.f32 %v157, %v1667
  %1669 = vmatmul.mubr.f32.gmra.mxu0 %v1668
  %v1670 = vpop.f32.mrf.mxu0
  %v1671 = vadd.f32 %v1196, %v1670
  %v1672 = vpop.f32.mrf.mxu0
  %1673 = vmatprep.mubr.f32.mxu0 0.0
  %v1674 = vand.u32 %v160, 4294901760
  %v1675 = vsub.f32 %v160, %v1674
  %1676 = vmatmul.mubr.f32.gmra.mxu0 %v1675
  %v1677 = vpop.f32.mrf.mxu0
  %v1678 = vadd.f32 %v1202, %v1677
  %v1679 = vpop.f32.mrf.mxu0
  %1680 = vmatprep.mubr.f32.mxu0 0.0
  %v1681 = vand.u32 %v163, 4294901760
  %v1682 = vsub.f32 %v163, %v1681
  %1683 = vmatmul.mubr.f32.gmra.mxu0 %v1682
  %v1684 = vpop.f32.mrf.mxu0
  %v1685 = vadd.f32 %v1208, %v1684
  %v1686 = vpop.f32.mrf.mxu0
  %1687 = vmatprep.mubr.f32.mxu0 0.0
  %v1688 = vand.u32 %v166, 4294901760
  %v1689 = vsub.f32 %v166, %v1688
  %1690 = vmatmul.mubr.f32.gmra.mxu0 %v1689
  %v1691 = vpop.f32.mrf.mxu0
  %v1692 = vadd.f32 %v1214, %v1691
  %v1693 = vpop.f32.mrf.mxu0
  %1694 = vmatprep.mubr.f32.mxu0 0.0
  %v1695 = vand.u32 %v169, 4294901760
  %v1696 = vsub.f32 %v169, %v1695
  %1697 = vmatmul.mubr.f32.gmra.mxu0 %v1696
  %v1698 = vpop.f32.mrf.mxu0
  %v1699 = vadd.f32 %v1220, %v1698
  %v1700 = vpop.f32.mrf.mxu0
  %1701 = vmatprep.mubr.f32.mxu0 0.0
  %v1702 = vand.u32 %v172, 4294901760
  %v1703 = vsub.f32 %v172, %v1702
  %1704 = vmatmul.mubr.f32.gmra.mxu0 %v1703
  %v1705 = vpop.f32.mrf.mxu0
  %v1706 = vadd.f32 %v1226, %v1705
  %v1707 = vpop.f32.mrf.mxu0
  %1708 = vmatprep.mubr.f32.mxu0 0.0
  %v1709 = vand.u32 %v175, 4294901760
  %v1710 = vsub.f32 %v175, %v1709
  %1711 = vmatmul.mubr.f32.gmra.mxu0 %v1710
  %v1712 = vpop.f32.mrf.mxu0
  %v1713 = vadd.f32 %v1232, %v1712
  %v1714 = vpop.f32.mrf.mxu0
  %1715 = vmatprep.mubr.f32.mxu0 0.0
  %v1716 = vand.u32 %v178, 4294901760
  %v1717 = vsub.f32 %v178, %v1716
  %1718 = vmatmul.mubr.f32.gmra.mxu0 %v1717
  %v1719 = vpop.f32.mrf.mxu0
  %v1720 = vadd.f32 %v1238, %v1719
  %v1721 = vpop.f32.mrf.mxu0
  %1722 = vmatprep.mubr.f32.mxu0 0.0
  %v1723 = vand.u32 %v181, 4294901760
  %v1724 = vsub.f32 %v181, %v1723
  %1725 = vmatmul.mubr.f32.gmra.mxu0 %v1724
  %v1726 = vpop.f32.mrf.mxu0
  %v1727 = vadd.f32 %v1244, %v1726
  %v1728 = vpop.f32.mrf.mxu0
  %1729 = vmatprep.mubr.f32.mxu0 0.0
  %v1730 = vand.u32 %v184, 4294901760
  %v1731 = vsub.f32 %v184, %v1730
  %1732 = vmatmul.mubr.f32.gmra.mxu0 %v1731
  %v1733 = vpop.f32.mrf.mxu0
  %v1734 = vadd.f32 %v1250, %v1733
  %v1735 = vpop.f32.mrf.mxu0
  %1736 = vmatprep.mubr.f32.mxu0 0.0
  %v1737 = vand.u32 %v187, 4294901760
  %v1738 = vsub.f32 %v187, %v1737
  %1739 = vmatmul.mubr.f32.gmra.mxu0 %v1738
  %v1740 = vpop.f32.mrf.mxu0
  %v1741 = vadd.f32 %v1256, %v1740
  %v1742 = vpop.f32.mrf.mxu0
  %1743 = vmatprep.mubr.f32.mxu0 0.0
  %v1744 = vand.u32 %v190, 4294901760
  %v1745 = vsub.f32 %v190, %v1744
  %1746 = vmatmul.mubr.f32.gmra.mxu0 %v1745
  %v1747 = vpop.f32.mrf.mxu0
  %v1748 = vadd.f32 %v1262, %v1747
  %v1749 = vpop.f32.mrf.mxu0
  %1750 = vmatprep.mubr.f32.mxu0 0.0
  %v1751 = vand.u32 %v193, 4294901760
  %v1752 = vsub.f32 %v193, %v1751
  %1753 = vmatmul.mubr.f32.gmra.mxu0 %v1752
  %v1754 = vpop.f32.mrf.mxu0
  %v1755 = vadd.f32 %v1268, %v1754
  %v1756 = vpop.f32.mrf.mxu0
  %1757 = vmatprep.mubr.f32.mxu0 0.0
  %v1758 = vand.u32 %v196, 4294901760
  %v1759 = vsub.f32 %v196, %v1758
  %1760 = vmatmul.mubr.f32.gmra.mxu0 %v1759
  %v1761 = vpop.f32.mrf.mxu0
  %v1762 = vadd.f32 %v1274, %v1761
  %v1763 = vpop.f32.mrf.mxu0
  %1764 = vmatprep.mubr.f32.mxu0 0.0
  %v1765 = vand.u32 %v199, 4294901760
  %v1766 = vsub.f32 %v199, %v1765
  %1767 = vmatmul.mubr.f32.gmra.mxu0 %v1766
  %v1768 = vpop.f32.mrf.mxu0
  %v1769 = vadd.f32 %v1280, %v1768
  %v1770 = vpop.f32.mrf.mxu0
  %1771 = vmatprep.mubr.f32.mxu0 0.0
  %v1772 = vand.u32 %v202, 4294901760
  %v1773 = vsub.f32 %v202, %v1772
  %1774 = vmatmul.mubr.f32.gmra.mxu0 %v1773
  %v1775 = vpop.f32.mrf.mxu0
  %v1776 = vadd.f32 %v1286, %v1775
  %v1777 = vpop.f32.mrf.mxu0
  %1778 = vmatprep.mubr.f32.mxu0 0.0
  %v1779 = vand.u32 %v205, 4294901760
  %v1780 = vsub.f32 %v205, %v1779
  %1781 = vmatmul.mubr.f32.gmra.mxu0 %v1780
  %v1782 = vpop.f32.mrf.mxu0
  %v1783 = vadd.f32 %v1292, %v1782
  %v1784 = vpop.f32.mrf.mxu0
  %1785 = vmatprep.mubr.f32.mxu0 0.0
  %v1786 = vand.u32 %v208, 4294901760
  %v1787 = vsub.f32 %v208, %v1786
  %1788 = vmatmul.mubr.f32.gmra.mxu0 %v1787
  %v1789 = vpop.f32.mrf.mxu0
  %v1790 = vadd.f32 %v1298, %v1789
  %v1791 = vpop.f32.mrf.mxu0
  %1792 = vmatprep.mubr.f32.mxu0 0.0
  %v1793 = vand.u32 %v211, 4294901760
  %v1794 = vsub.f32 %v211, %v1793
  %1795 = vmatmul.mubr.f32.gmra.mxu0 %v1794
  %v1796 = vpop.f32.mrf.mxu0
  %v1797 = vadd.f32 %v1304, %v1796
  %v1798 = vpop.f32.mrf.mxu0
  %1799 = vmatprep.mubr.f32.mxu0 0.0
  %v1800 = vand.u32 %v214, 4294901760
  %v1801 = vsub.f32 %v214, %v1800
  %1802 = vmatmul.mubr.f32.gmra.mxu0 %v1801
  %v1803 = vpop.f32.mrf.mxu0
  %v1804 = vadd.f32 %v1310, %v1803
  %v1805 = vpop.f32.mrf.mxu0
  %1806 = vmatprep.mubr.f32.mxu0 0.0
  %v1807 = vand.u32 %v217, 4294901760
  %v1808 = vsub.f32 %v217, %v1807
  %1809 = vmatmul.mubr.f32.gmra.mxu0 %v1808
  %v1810 = vpop.f32.mrf.mxu0
  %v1811 = vadd.f32 %v1316, %v1810
  %v1812 = vpop.f32.mrf.mxu0
  %1813 = vmatprep.mubr.f32.mxu0 0.0
  %v1814 = vand.u32 %v220, 4294901760
  %v1815 = vsub.f32 %v220, %v1814
  %1816 = vmatmul.mubr.f32.gmra.mxu0 %v1815
  %v1817 = vpop.f32.mrf.mxu0
  %v1818 = vadd.f32 %v1322, %v1817
  %v1819 = vpop.f32.mrf.mxu0
  %1820 = vmatprep.mubr.f32.mxu0 0.0
  %v1821 = vand.u32 %v223, 4294901760
  %v1822 = vsub.f32 %v223, %v1821
  %1823 = vmatmul.mubr.f32.gmra.mxu0 %v1822
  %v1824 = vpop.f32.mrf.mxu0
  %v1825 = vadd.f32 %v1328, %v1824
  %v1826 = vpop.f32.mrf.mxu0
  %1827 = vmatprep.mubr.f32.mxu0 0.0
  %v1828 = vand.u32 %v226, 4294901760
  %v1829 = vsub.f32 %v226, %v1828
  %1830 = vmatmul.mubr.f32.gmra.mxu0 %v1829
  %v1831 = vpop.f32.mrf.mxu0
  %v1832 = vadd.f32 %v1334, %v1831
  %v1833 = vpop.f32.mrf.mxu0
  %1834 = vmatprep.mubr.f32.mxu0 0.0
  %v1835 = vand.u32 %v229, 4294901760
  %v1836 = vsub.f32 %v229, %v1835
  %1837 = vmatmul.mubr.f32.gmra.mxu0 %v1836
  %v1838 = vpop.f32.mrf.mxu0
  %v1839 = vadd.f32 %v1340, %v1838
  %v1840 = vpop.f32.mrf.mxu0
  %1841 = vmatprep.mubr.f32.mxu0 0.0
  %v1842 = vand.u32 %v232, 4294901760
  %v1843 = vsub.f32 %v232, %v1842
  %1844 = vmatmul.mubr.f32.gmra.mxu0 %v1843
  %v1845 = vpop.f32.mrf.mxu0
  %v1846 = vadd.f32 %v1346, %v1845
  %v1847 = vpop.f32.mrf.mxu0
  %1848 = vmatprep.mubr.f32.mxu0 0.0
  %v1849 = vand.u32 %v235, 4294901760
  %v1850 = vsub.f32 %v235, %v1849
  %1851 = vmatmul.mubr.f32.gmra.mxu0 %v1850
  %v1852 = vpop.f32.mrf.mxu0
  %v1853 = vadd.f32 %v1352, %v1852
  %v1854 = vpop.f32.mrf.mxu0
  %1855 = vmatprep.mubr.f32.mxu0 0.0
  %v1856 = vand.u32 %v238, 4294901760
  %v1857 = vsub.f32 %v238, %v1856
  %1858 = vmatmul.mubr.f32.gmra.mxu0 %v1857
  %v1859 = vpop.f32.mrf.mxu0
  %v1860 = vadd.f32 %v1358, %v1859
  %v1861 = vpop.f32.mrf.mxu0
  %1862 = vmatprep.mubr.f32.mxu0 0.0
  %v1863 = vand.u32 %v241, 4294901760
  %v1864 = vsub.f32 %v241, %v1863
  %1865 = vmatmul.mubr.f32.gmra.mxu0 %v1864
  %v1866 = vpop.f32.mrf.mxu0
  %v1867 = vadd.f32 %v1364, %v1866
  %v1868 = vpop.f32.mrf.mxu0
  %1869 = vmatprep.mubr.f32.mxu0 0.0
  %v1870 = vand.u32 %v244, 4294901760
  %v1871 = vsub.f32 %v244, %v1870
  %1872 = vmatmul.mubr.f32.gmra.mxu0 %v1871
  %v1873 = vpop.f32.mrf.mxu0
  %v1874 = vadd.f32 %v1370, %v1873
  %v1875 = vpop.f32.mrf.mxu0
  %1876 = vmatprep.mubr.f32.mxu0 0.0
  %v1877 = vand.u32 %v247, 4294901760
  %v1878 = vsub.f32 %v247, %v1877
  %1879 = vmatmul.mubr.f32.gmra.mxu0 %v1878
  %v1880 = vpop.f32.mrf.mxu0
  %v1881 = vadd.f32 %v1376, %v1880
  %v1882 = vpop.f32.mrf.mxu0
  %1883 = vmatprep.mubr.f32.mxu0 0.0
  %v1884 = vand.u32 %v250, 4294901760
  %v1885 = vsub.f32 %v250, %v1884
  %1886 = vmatmul.mubr.f32.gmra.mxu0 %v1885
  %v1887 = vpop.f32.mrf.mxu0
  %v1888 = vadd.f32 %v1382, %v1887
  %v1889 = vpop.f32.mrf.mxu0
  %1890 = vmatprep.mubr.f32.mxu0 0.0
  %v1891 = vand.u32 %v253, 4294901760
  %v1892 = vsub.f32 %v253, %v1891
  %1893 = vmatmul.mubr.f32.gmra.mxu0 %v1892
  %v1894 = vpop.f32.mrf.mxu0
  %v1895 = vadd.f32 %v1388, %v1894
  %v1896 = vpop.f32.mrf.mxu0
  %1897 = vmatprep.mubr.f32.mxu0 0.0
  %v1898 = vand.u32 %v256, 4294901760
  %v1899 = vsub.f32 %v256, %v1898
  %1900 = vmatmul.mubr.f32.gmra.mxu0 %v1899
  %v1901 = vpop.f32.mrf.mxu0
  %v1902 = vadd.f32 %v1394, %v1901
  %v1903 = vpop.f32.mrf.mxu0
  %1904 = vmatprep.mubr.f32.mxu0 0.0
  %v1905 = vand.u32 %v259, 4294901760
  %v1906 = vsub.f32 %v259, %v1905
  %1907 = vmatmul.mubr.f32.gmra.mxu0 %v1906
  %v1908 = vpop.f32.mrf.mxu0
  %v1909 = vadd.f32 %v1400, %v1908
  %v1910 = vpop.f32.mrf.mxu0
  %1911 = vmatprep.mubr.f32.mxu0 0.0
  %v1912 = vand.u32 %v262, 4294901760
  %v1913 = vsub.f32 %v262, %v1912
  %1914 = vmatmul.mubr.f32.gmra.mxu0 %v1913
  %v1915 = vpop.f32.mrf.mxu0
  %v1916 = vadd.f32 %v1406, %v1915
  %v1917 = vpop.f32.mrf.mxu0
  %1918 = vmatprep.mubr.f32.mxu0 0.0
  %v1919 = vand.u32 %v265, 4294901760
  %v1920 = vsub.f32 %v265, %v1919
  %1921 = vmatmul.mubr.f32.gmra.mxu0 %v1920
  %v1922 = vpop.f32.mrf.mxu0
  %v1923 = vadd.f32 %v1412, %v1922
  %v1924 = vpop.f32.mrf.mxu0
  %1925 = vmatprep.mubr.f32.mxu0 0.0
  %v1926 = vand.u32 %v268, 4294901760
  %v1927 = vsub.f32 %v268, %v1926
  %1928 = vmatmul.mubr.f32.gmra.mxu0 %v1927
  %v1929 = vpop.f32.mrf.mxu0
  %v1930 = vadd.f32 %v1418, %v1929
  %v1931 = vpop.f32.mrf.mxu0
  %1932 = vmatprep.mubr.f32.mxu0 0.0
  %v1933 = vand.u32 %v271, 4294901760
  %v1934 = vsub.f32 %v271, %v1933
  %1935 = vmatmul.mubr.f32.gmra.mxu0 %v1934
  %v1936 = vpop.f32.mrf.mxu0
  %v1937 = vadd.f32 %v1424, %v1936
  %v1938 = vpop.f32.mrf.mxu0
  %1939 = vmatprep.mubr.f32.mxu0 0.0
  %v1940 = vand.u32 %v274, 4294901760
  %v1941 = vsub.f32 %v274, %v1940
  %1942 = vmatmul.mubr.f32.gmra.mxu0 %v1941
  %v1943 = vpop.f32.mrf.mxu0
  %v1944 = vadd.f32 %v1430, %v1943
  %v1945 = vpop.f32.mrf.mxu0
  %1946 = vmatprep.mubr.f32.mxu0 0.0
  %v1947 = vand.u32 %v277, 4294901760
  %v1948 = vsub.f32 %v277, %v1947
  %1949 = vmatmul.mubr.f32.gmra.mxu0 %v1948
  %v1950 = vpop.f32.mrf.mxu0
  %v1951 = vadd.f32 %v1436, %v1950
  %v1952 = vpop.f32.mrf.mxu0
  %1953 = vdwg.mxu0
  %1954 = vmatprep.subr.mxu0 0.0
  %1955 = vmatpush1.msra.mxu0 0.0
  %1956 = vmatprep.subr.mxu0 0.0
  %1957 = vmatpush1.msra.mxu0 0.0
  %1958 = vmatprep.subr.mxu0 0.0
  %1959 = vmatpush1.msra.mxu0 0.0
  %1960 = vmatprep.subr.mxu0 0.0
  %1961 = vmatpush1.msra.mxu0 0.0
  %1962 = vmatprep.subr.mxu0 0.0
  %1963 = vmatpush1.msra.mxu0 0.0
  %1964 = vmatprep.subr.mxu0 0.0
  %1965 = vmatpush1.msra.mxu0 0.0
  %1966 = vmatprep.subr.mxu0 0.0
  %1967 = vmatpush1.msra.mxu0 0.0
  %1968 = vmatprep.subr.mxu0 0.0
  %1969 = vmatpush1.msra.mxu0 0.0
  %1970 = vmatprep.subr.mxu0 0.0
  %1971 = vmatpush1.msra.mxu0 0.0
  %1972 = vmatprep.subr.mxu0 0.0
  %1973 = vmatpush1.msra.mxu0 0.0
  %1974 = vmatprep.subr.mxu0 0.0
  %1975 = vmatpush1.msra.mxu0 0.0
  %1976 = vmatprep.subr.mxu0 0.0
  %1977 = vmatpush1.msra.mxu0 0.0
  %1978 = vmatprep.subr.mxu0 0.0
  %1979 = vmatpush1.msra.mxu0 0.0
  %1980 = vmatprep.subr.mxu0 0.0
  %1981 = vmatpush1.msra.mxu0 0.0
  %1982 = vmatprep.subr.mxu0 0.0
  %1983 = vmatpush1.msra.mxu0 0.0
  %1984 = vmatprep.subr.mxu0 0.0
  %v1985 = vand.u32 %v78, 4294901760
  %1986 = vmatpush1.msra.mxu0 %v1985
  %1987 = vmatprep.subr.mxu0 0.0
  %1988 = vmatpush2.msra.mxu0 0.0
  %1989 = vmatprep.subr.mxu0 0.0
  %1990 = vmatpush2.msra.mxu0 0.0
  %1991 = vmatprep.subr.mxu0 0.0
  %1992 = vmatpush2.msra.mxu0 0.0
  %1993 = vmatprep.subr.mxu0 0.0
  %1994 = vmatpush2.msra.mxu0 0.0
  %1995 = vmatprep.subr.mxu0 0.0
  %1996 = vmatpush2.msra.mxu0 0.0
  %1997 = vmatprep.subr.mxu0 0.0
  %1998 = vmatpush2.msra.mxu0 0.0
  %1999 = vmatprep.subr.mxu0 0.0
  %2000 = vmatpush2.msra.mxu0 0.0
  %2001 = vmatprep.subr.mxu0 0.0
  %2002 = vmatpush2.msra.mxu0 0.0
  %2003 = vmatprep.subr.mxu0 0.0
  %2004 = vmatpush2.msra.mxu0 0.0
  %2005 = vmatprep.subr.mxu0 0.0
  %2006 = vmatpush2.msra.mxu0 0.0
  %2007 = vmatprep.subr.mxu0 0.0
  %2008 = vmatpush2.msra.mxu0 0.0
  %2009 = vmatprep.subr.mxu0 0.0
  %2010 = vmatpush2.msra.mxu0 0.0
  %2011 = vmatprep.subr.mxu0 0.0
  %2012 = vmatpush2.msra.mxu0 0.0
  %2013 = vmatprep.subr.mxu0 0.0
  %2014 = vmatpush2.msra.mxu0 0.0
  %2015 = vmatprep.subr.mxu0 0.0
  %2016 = vmatpush2.msra.mxu0 0.0
  %2017 = vmatprep.subr.mxu0 0.0
  %2018 = vmatpush2.msra.mxu0 0.0
  %2019 = vmatprep.mubr.f32.mxu0 0.0
  %v2020 = vand.u32 %v88, 4294901760
  %v2021 = vsub.f32 %v88, %v2020
  %v2022 = vand.u32 %v2021, 4294901760
  %2023 = vmatmul.mubr.f32.gmra.mxu0 %v2022
  %v2024 = vpop.f32.mrf.mxu0
  %v2025 = vadd.f32 %v1510, %v2024
  %v2026 = vpop.f32.mrf.mxu0
  %2027 = vmatprep.mubr.f32.mxu0 0.0
  %v2028 = vand.u32 %v91, 4294901760
  %v2029 = vsub.f32 %v91, %v2028
  %v2030 = vand.u32 %v2029, 4294901760
  %2031 = vmatmul.mubr.f32.gmra.mxu0 %v2030
  %v2032 = vpop.f32.mrf.mxu0
  %v2033 = vadd.f32 %v1517, %v2032
  %v2034 = vpop.f32.mrf.mxu0
  %2035 = vmatprep.mubr.f32.mxu0 0.0
  %v2036 = vand.u32 %v94, 4294901760
  %v2037 = vsub.f32 %v94, %v2036
  %v2038 = vand.u32 %v2037, 4294901760
  %2039 = vmatmul.mubr.f32.gmra.mxu0 %v2038
  %v2040 = vpop.f32.mrf.mxu0
  %v2041 = vadd.f32 %v1524, %v2040
  %v2042 = vpop.f32.mrf.mxu0
  %2043 = vmatprep.mubr.f32.mxu0 0.0
  %v2044 = vand.u32 %v97, 4294901760
  %v2045 = vsub.f32 %v97, %v2044
  %v2046 = vand.u32 %v2045, 4294901760
  %2047 = vmatmul.mubr.f32.gmra.mxu0 %v2046
  %v2048 = vpop.f32.mrf.mxu0
  %v2049 = vadd.f32 %v1531, %v2048
  %v2050 = vpop.f32.mrf.mxu0
  %2051 = vmatprep.mubr.f32.mxu0 0.0
  %v2052 = vand.u32 %v100, 4294901760
  %v2053 = vsub.f32 %v100, %v2052
  %v2054 = vand.u32 %v2053, 4294901760
  %2055 = vmatmul.mubr.f32.gmra.mxu0 %v2054
  %v2056 = vpop.f32.mrf.mxu0
  %v2057 = vadd.f32 %v1538, %v2056
  %v2058 = vpop.f32.mrf.mxu0
  %2059 = vmatprep.mubr.f32.mxu0 0.0
  %v2060 = vand.u32 %v103, 4294901760
  %v2061 = vsub.f32 %v103, %v2060
  %v2062 = vand.u32 %v2061, 4294901760
  %2063 = vmatmul.mubr.f32.gmra.mxu0 %v2062
  %v2064 = vpop.f32.mrf.mxu0
  %v2065 = vadd.f32 %v1545, %v2064
  %v2066 = vpop.f32.mrf.mxu0
  %2067 = vmatprep.mubr.f32.mxu0 0.0
  %v2068 = vand.u32 %v106, 4294901760
  %v2069 = vsub.f32 %v106, %v2068
  %v2070 = vand.u32 %v2069, 4294901760
  %2071 = vmatmul.mubr.f32.gmra.mxu0 %v2070
  %v2072 = vpop.f32.mrf.mxu0
  %v2073 = vadd.f32 %v1552, %v2072
  %v2074 = vpop.f32.mrf.mxu0
  %2075 = vmatprep.mubr.f32.mxu0 0.0
  %v2076 = vand.u32 %v109, 4294901760
  %v2077 = vsub.f32 %v109, %v2076
  %v2078 = vand.u32 %v2077, 4294901760
  %2079 = vmatmul.mubr.f32.gmra.mxu0 %v2078
  %v2080 = vpop.f32.mrf.mxu0
  %v2081 = vadd.f32 %v1559, %v2080
  %v2082 = vpop.f32.mrf.mxu0
  %2083 = vmatprep.mubr.f32.mxu0 0.0
  %v2084 = vand.u32 %v112, 4294901760
  %v2085 = vsub.f32 %v112, %v2084
  %v2086 = vand.u32 %v2085, 4294901760
  %2087 = vmatmul.mubr.f32.gmra.mxu0 %v2086
  %v2088 = vpop.f32.mrf.mxu0
  %v2089 = vadd.f32 %v1566, %v2088
  %v2090 = vpop.f32.mrf.mxu0
  %2091 = vmatprep.mubr.f32.mxu0 0.0
  %v2092 = vand.u32 %v115, 4294901760
  %v2093 = vsub.f32 %v115, %v2092
  %v2094 = vand.u32 %v2093, 4294901760
  %2095 = vmatmul.mubr.f32.gmra.mxu0 %v2094
  %v2096 = vpop.f32.mrf.mxu0
  %v2097 = vadd.f32 %v1573, %v2096
  %v2098 = vpop.f32.mrf.mxu0
  %2099 = vmatprep.mubr.f32.mxu0 0.0
  %v2100 = vand.u32 %v118, 4294901760
  %v2101 = vsub.f32 %v118, %v2100
  %v2102 = vand.u32 %v2101, 4294901760
  %2103 = vmatmul.mubr.f32.gmra.mxu0 %v2102
  %v2104 = vpop.f32.mrf.mxu0
  %v2105 = vadd.f32 %v1580, %v2104
  %v2106 = vpop.f32.mrf.mxu0
  %2107 = vmatprep.mubr.f32.mxu0 0.0
  %v2108 = vand.u32 %v121, 4294901760
  %v2109 = vsub.f32 %v121, %v2108
  %v2110 = vand.u32 %v2109, 4294901760
  %2111 = vmatmul.mubr.f32.gmra.mxu0 %v2110
  %v2112 = vpop.f32.mrf.mxu0
  %v2113 = vadd.f32 %v1587, %v2112
  %v2114 = vpop.f32.mrf.mxu0
  %2115 = vmatprep.mubr.f32.mxu0 0.0
  %v2116 = vand.u32 %v124, 4294901760
  %v2117 = vsub.f32 %v124, %v2116
  %v2118 = vand.u32 %v2117, 4294901760
  %2119 = vmatmul.mubr.f32.gmra.mxu0 %v2118
  %v2120 = vpop.f32.mrf.mxu0
  %v2121 = vadd.f32 %v1594, %v2120
  %v2122 = vpop.f32.mrf.mxu0
  %2123 = vmatprep.mubr.f32.mxu0 0.0
  %v2124 = vand.u32 %v127, 4294901760
  %v2125 = vsub.f32 %v127, %v2124
  %v2126 = vand.u32 %v2125, 4294901760
  %2127 = vmatmul.mubr.f32.gmra.mxu0 %v2126
  %v2128 = vpop.f32.mrf.mxu0
  %v2129 = vadd.f32 %v1601, %v2128
  %v2130 = vpop.f32.mrf.mxu0
  %2131 = vmatprep.mubr.f32.mxu0 0.0
  %v2132 = vand.u32 %v130, 4294901760
  %v2133 = vsub.f32 %v130, %v2132
  %v2134 = vand.u32 %v2133, 4294901760
  %2135 = vmatmul.mubr.f32.gmra.mxu0 %v2134
  %v2136 = vpop.f32.mrf.mxu0
  %v2137 = vadd.f32 %v1608, %v2136
  %v2138 = vpop.f32.mrf.mxu0
  %2139 = vmatprep.mubr.f32.mxu0 0.0
  %v2140 = vand.u32 %v133, 4294901760
  %v2141 = vsub.f32 %v133, %v2140
  %v2142 = vand.u32 %v2141, 4294901760
  %2143 = vmatmul.mubr.f32.gmra.mxu0 %v2142
  %v2144 = vpop.f32.mrf.mxu0
  %v2145 = vadd.f32 %v1615, %v2144
  %v2146 = vpop.f32.mrf.mxu0
  %2147 = vmatprep.mubr.f32.mxu0 0.0
  %v2148 = vand.u32 %v136, 4294901760
  %v2149 = vsub.f32 %v136, %v2148
  %v2150 = vand.u32 %v2149, 4294901760
  %2151 = vmatmul.mubr.f32.gmra.mxu0 %v2150
  %v2152 = vpop.f32.mrf.mxu0
  %v2153 = vadd.f32 %v1622, %v2152
  %v2154 = vpop.f32.mrf.mxu0
  %2155 = vmatprep.mubr.f32.mxu0 0.0
  %v2156 = vand.u32 %v139, 4294901760
  %v2157 = vsub.f32 %v139, %v2156
  %v2158 = vand.u32 %v2157, 4294901760
  %2159 = vmatmul.mubr.f32.gmra.mxu0 %v2158
  %v2160 = vpop.f32.mrf.mxu0
  %v2161 = vadd.f32 %v1629, %v2160
  %v2162 = vpop.f32.mrf.mxu0
  %2163 = vmatprep.mubr.f32.mxu0 0.0
  %v2164 = vand.u32 %v142, 4294901760
  %v2165 = vsub.f32 %v142, %v2164
  %v2166 = vand.u32 %v2165, 4294901760
  %2167 = vmatmul.mubr.f32.gmra.mxu0 %v2166
  %v2168 = vpop.f32.mrf.mxu0
  %v2169 = vadd.f32 %v1636, %v2168
  %v2170 = vpop.f32.mrf.mxu0
  %2171 = vmatprep.mubr.f32.mxu0 0.0
  %v2172 = vand.u32 %v145, 4294901760
  %v2173 = vsub.f32 %v145, %v2172
  %v2174 = vand.u32 %v2173, 4294901760
  %2175 = vmatmul.mubr.f32.gmra.mxu0 %v2174
  %v2176 = vpop.f32.mrf.mxu0
  %v2177 = vadd.f32 %v1643, %v2176
  %v2178 = vpop.f32.mrf.mxu0
  %2179 = vmatprep.mubr.f32.mxu0 0.0
  %v2180 = vand.u32 %v148, 4294901760
  %v2181 = vsub.f32 %v148, %v2180
  %v2182 = vand.u32 %v2181, 4294901760
  %2183 = vmatmul.mubr.f32.gmra.mxu0 %v2182
  %v2184 = vpop.f32.mrf.mxu0
  %v2185 = vadd.f32 %v1650, %v2184
  %v2186 = vpop.f32.mrf.mxu0
  %2187 = vmatprep.mubr.f32.mxu0 0.0
  %v2188 = vand.u32 %v151, 4294901760
  %v2189 = vsub.f32 %v151, %v2188
  %v2190 = vand.u32 %v2189, 4294901760
  %2191 = vmatmul.mubr.f32.gmra.mxu0 %v2190
  %v2192 = vpop.f32.mrf.mxu0
  %v2193 = vadd.f32 %v1657, %v2192
  %v2194 = vpop.f32.mrf.mxu0
  %2195 = vmatprep.mubr.f32.mxu0 0.0
  %v2196 = vand.u32 %v154, 4294901760
  %v2197 = vsub.f32 %v154, %v2196
  %v2198 = vand.u32 %v2197, 4294901760
  %2199 = vmatmul.mubr.f32.gmra.mxu0 %v2198
  %v2200 = vpop.f32.mrf.mxu0
  %v2201 = vadd.f32 %v1664, %v2200
  %v2202 = vpop.f32.mrf.mxu0
  %2203 = vmatprep.mubr.f32.mxu0 0.0
  %v2204 = vand.u32 %v157, 4294901760
  %v2205 = vsub.f32 %v157, %v2204
  %v2206 = vand.u32 %v2205, 4294901760
  %2207 = vmatmul.mubr.f32.gmra.mxu0 %v2206
  %v2208 = vpop.f32.mrf.mxu0
  %v2209 = vadd.f32 %v1671, %v2208
  %v2210 = vpop.f32.mrf.mxu0
  %2211 = vmatprep.mubr.f32.mxu0 0.0
  %v2212 = vand.u32 %v160, 4294901760
  %v2213 = vsub.f32 %v160, %v2212
  %v2214 = vand.u32 %v2213, 4294901760
  %2215 = vmatmul.mubr.f32.gmra.mxu0 %v2214
  %v2216 = vpop.f32.mrf.mxu0
  %v2217 = vadd.f32 %v1678, %v2216
  %v2218 = vpop.f32.mrf.mxu0
  %2219 = vmatprep.mubr.f32.mxu0 0.0
  %v2220 = vand.u32 %v163, 4294901760
  %v2221 = vsub.f32 %v163, %v2220
  %v2222 = vand.u32 %v2221, 4294901760
  %2223 = vmatmul.mubr.f32.gmra.mxu0 %v2222
  %v2224 = vpop.f32.mrf.mxu0
  %v2225 = vadd.f32 %v1685, %v2224
  %v2226 = vpop.f32.mrf.mxu0
  %2227 = vmatprep.mubr.f32.mxu0 0.0
  %v2228 = vand.u32 %v166, 4294901760
  %v2229 = vsub.f32 %v166, %v2228
  %v2230 = vand.u32 %v2229, 4294901760
  %2231 = vmatmul.mubr.f32.gmra.mxu0 %v2230
  %v2232 = vpop.f32.mrf.mxu0
  %v2233 = vadd.f32 %v1692, %v2232
  %v2234 = vpop.f32.mrf.mxu0
  %2235 = vmatprep.mubr.f32.mxu0 0.0
  %v2236 = vand.u32 %v169, 4294901760
  %v2237 = vsub.f32 %v169, %v2236
  %v2238 = vand.u32 %v2237, 4294901760
  %2239 = vmatmul.mubr.f32.gmra.mxu0 %v2238
  %v2240 = vpop.f32.mrf.mxu0
  %v2241 = vadd.f32 %v1699, %v2240
  %v2242 = vpop.f32.mrf.mxu0
  %2243 = vmatprep.mubr.f32.mxu0 0.0
  %v2244 = vand.u32 %v172, 4294901760
  %v2245 = vsub.f32 %v172, %v2244
  %v2246 = vand.u32 %v2245, 4294901760
  %2247 = vmatmul.mubr.f32.gmra.mxu0 %v2246
  %v2248 = vpop.f32.mrf.mxu0
  %v2249 = vadd.f32 %v1706, %v2248
  %v2250 = vpop.f32.mrf.mxu0
  %2251 = vmatprep.mubr.f32.mxu0 0.0
  %v2252 = vand.u32 %v175, 4294901760
  %v2253 = vsub.f32 %v175, %v2252
  %v2254 = vand.u32 %v2253, 4294901760
  %2255 = vmatmul.mubr.f32.gmra.mxu0 %v2254
  %v2256 = vpop.f32.mrf.mxu0
  %v2257 = vadd.f32 %v1713, %v2256
  %v2258 = vpop.f32.mrf.mxu0
  %2259 = vmatprep.mubr.f32.mxu0 0.0
  %v2260 = vand.u32 %v178, 4294901760
  %v2261 = vsub.f32 %v178, %v2260
  %v2262 = vand.u32 %v2261, 4294901760
  %2263 = vmatmul.mubr.f32.gmra.mxu0 %v2262
  %v2264 = vpop.f32.mrf.mxu0
  %v2265 = vadd.f32 %v1720, %v2264
  %v2266 = vpop.f32.mrf.mxu0
  %2267 = vmatprep.mubr.f32.mxu0 0.0
  %v2268 = vand.u32 %v181, 4294901760
  %v2269 = vsub.f32 %v181, %v2268
  %v2270 = vand.u32 %v2269, 4294901760
  %2271 = vmatmul.mubr.f32.gmra.mxu0 %v2270
  %v2272 = vpop.f32.mrf.mxu0
  %v2273 = vadd.f32 %v1727, %v2272
  %v2274 = vpop.f32.mrf.mxu0
  %2275 = vmatprep.mubr.f32.mxu0 0.0
  %v2276 = vand.u32 %v184, 4294901760
  %v2277 = vsub.f32 %v184, %v2276
  %v2278 = vand.u32 %v2277, 4294901760
  %2279 = vmatmul.mubr.f32.gmra.mxu0 %v2278
  %v2280 = vpop.f32.mrf.mxu0
  %v2281 = vadd.f32 %v1734, %v2280
  %v2282 = vpop.f32.mrf.mxu0
  %2283 = vmatprep.mubr.f32.mxu0 0.0
  %v2284 = vand.u32 %v187, 4294901760
  %v2285 = vsub.f32 %v187, %v2284
  %v2286 = vand.u32 %v2285, 4294901760
  %2287 = vmatmul.mubr.f32.gmra.mxu0 %v2286
  %v2288 = vpop.f32.mrf.mxu0
  %v2289 = vadd.f32 %v1741, %v2288
  %v2290 = vpop.f32.mrf.mxu0
  %2291 = vmatprep.mubr.f32.mxu0 0.0
  %v2292 = vand.u32 %v190, 4294901760
  %v2293 = vsub.f32 %v190, %v2292
  %v2294 = vand.u32 %v2293, 4294901760
  %2295 = vmatmul.mubr.f32.gmra.mxu0 %v2294
  %v2296 = vpop.f32.mrf.mxu0
  %v2297 = vadd.f32 %v1748, %v2296
  %v2298 = vpop.f32.mrf.mxu0
  %2299 = vmatprep.mubr.f32.mxu0 0.0
  %v2300 = vand.u32 %v193, 4294901760
  %v2301 = vsub.f32 %v193, %v2300
  %v2302 = vand.u32 %v2301, 4294901760
  %2303 = vmatmul.mubr.f32.gmra.mxu0 %v2302
  %v2304 = vpop.f32.mrf.mxu0
  %v2305 = vadd.f32 %v1755, %v2304
  %v2306 = vpop.f32.mrf.mxu0
  %2307 = vmatprep.mubr.f32.mxu0 0.0
  %v2308 = vand.u32 %v196, 4294901760
  %v2309 = vsub.f32 %v196, %v2308
  %v2310 = vand.u32 %v2309, 4294901760
  %2311 = vmatmul.mubr.f32.gmra.mxu0 %v2310
  %v2312 = vpop.f32.mrf.mxu0
  %v2313 = vadd.f32 %v1762, %v2312
  %v2314 = vpop.f32.mrf.mxu0
  %2315 = vmatprep.mubr.f32.mxu0 0.0
  %v2316 = vand.u32 %v199, 4294901760
  %v2317 = vsub.f32 %v199, %v2316
  %v2318 = vand.u32 %v2317, 4294901760
  %2319 = vmatmul.mubr.f32.gmra.mxu0 %v2318
  %v2320 = vpop.f32.mrf.mxu0
  %v2321 = vadd.f32 %v1769, %v2320
  %v2322 = vpop.f32.mrf.mxu0
  %2323 = vmatprep.mubr.f32.mxu0 0.0
  %v2324 = vand.u32 %v202, 4294901760
  %v2325 = vsub.f32 %v202, %v2324
  %v2326 = vand.u32 %v2325, 4294901760
  %2327 = vmatmul.mubr.f32.gmra.mxu0 %v2326
  %v2328 = vpop.f32.mrf.mxu0
  %v2329 = vadd.f32 %v1776, %v2328
  %v2330 = vpop.f32.mrf.mxu0
  %2331 = vmatprep.mubr.f32.mxu0 0.0
  %v2332 = vand.u32 %v205, 4294901760
  %v2333 = vsub.f32 %v205, %v2332
  %v2334 = vand.u32 %v2333, 4294901760
  %2335 = vmatmul.mubr.f32.gmra.mxu0 %v2334
  %v2336 = vpop.f32.mrf.mxu0
  %v2337 = vadd.f32 %v1783, %v2336
  %v2338 = vpop.f32.mrf.mxu0
  %2339 = vmatprep.mubr.f32.mxu0 0.0
  %v2340 = vand.u32 %v208, 4294901760
  %v2341 = vsub.f32 %v208, %v2340
  %v2342 = vand.u32 %v2341, 4294901760
  %2343 = vmatmul.mubr.f32.gmra.mxu0 %v2342
  %v2344 = vpop.f32.mrf.mxu0
  %v2345 = vadd.f32 %v1790, %v2344
  %v2346 = vpop.f32.mrf.mxu0
  %2347 = vmatprep.mubr.f32.mxu0 0.0
  %v2348 = vand.u32 %v211, 4294901760
  %v2349 = vsub.f32 %v211, %v2348
  %v2350 = vand.u32 %v2349, 4294901760
  %2351 = vmatmul.mubr.f32.gmra.mxu0 %v2350
  %v2352 = vpop.f32.mrf.mxu0
  %v2353 = vadd.f32 %v1797, %v2352
  %v2354 = vpop.f32.mrf.mxu0
  %2355 = vmatprep.mubr.f32.mxu0 0.0
  %v2356 = vand.u32 %v214, 4294901760
  %v2357 = vsub.f32 %v214, %v2356
  %v2358 = vand.u32 %v2357, 4294901760
  %2359 = vmatmul.mubr.f32.gmra.mxu0 %v2358
  %v2360 = vpop.f32.mrf.mxu0
  %v2361 = vadd.f32 %v1804, %v2360
  %v2362 = vpop.f32.mrf.mxu0
  %2363 = vmatprep.mubr.f32.mxu0 0.0
  %v2364 = vand.u32 %v217, 4294901760
  %v2365 = vsub.f32 %v217, %v2364
  %v2366 = vand.u32 %v2365, 4294901760
  %2367 = vmatmul.mubr.f32.gmra.mxu0 %v2366
  %v2368 = vpop.f32.mrf.mxu0
  %v2369 = vadd.f32 %v1811, %v2368
  %v2370 = vpop.f32.mrf.mxu0
  %2371 = vmatprep.mubr.f32.mxu0 0.0
  %v2372 = vand.u32 %v220, 4294901760
  %v2373 = vsub.f32 %v220, %v2372
  %v2374 = vand.u32 %v2373, 4294901760
  %2375 = vmatmul.mubr.f32.gmra.mxu0 %v2374
  %v2376 = vpop.f32.mrf.mxu0
  %v2377 = vadd.f32 %v1818, %v2376
  %v2378 = vpop.f32.mrf.mxu0
  %2379 = vmatprep.mubr.f32.mxu0 0.0
  %v2380 = vand.u32 %v223, 4294901760
  %v2381 = vsub.f32 %v223, %v2380
  %v2382 = vand.u32 %v2381, 4294901760
  %2383 = vmatmul.mubr.f32.gmra.mxu0 %v2382
  %v2384 = vpop.f32.mrf.mxu0
  %v2385 = vadd.f32 %v1825, %v2384
  %v2386 = vpop.f32.mrf.mxu0
  %2387 = vmatprep.mubr.f32.mxu0 0.0
  %v2388 = vand.u32 %v226, 4294901760
  %v2389 = vsub.f32 %v226, %v2388
  %v2390 = vand.u32 %v2389, 4294901760
  %2391 = vmatmul.mubr.f32.gmra.mxu0 %v2390
  %v2392 = vpop.f32.mrf.mxu0
  %v2393 = vadd.f32 %v1832, %v2392
  %v2394 = vpop.f32.mrf.mxu0
  %2395 = vmatprep.mubr.f32.mxu0 0.0
  %v2396 = vand.u32 %v229, 4294901760
  %v2397 = vsub.f32 %v229, %v2396
  %v2398 = vand.u32 %v2397, 4294901760
  %2399 = vmatmul.mubr.f32.gmra.mxu0 %v2398
  %v2400 = vpop.f32.mrf.mxu0
  %v2401 = vadd.f32 %v1839, %v2400
  %v2402 = vpop.f32.mrf.mxu0
  %2403 = vmatprep.mubr.f32.mxu0 0.0
  %v2404 = vand.u32 %v232, 4294901760
  %v2405 = vsub.f32 %v232, %v2404
  %v2406 = vand.u32 %v2405, 4294901760
  %2407 = vmatmul.mubr.f32.gmra.mxu0 %v2406
  %v2408 = vpop.f32.mrf.mxu0
  %v2409 = vadd.f32 %v1846, %v2408
  %v2410 = vpop.f32.mrf.mxu0
  %2411 = vmatprep.mubr.f32.mxu0 0.0
  %v2412 = vand.u32 %v235, 4294901760
  %v2413 = vsub.f32 %v235, %v2412
  %v2414 = vand.u32 %v2413, 4294901760
  %2415 = vmatmul.mubr.f32.gmra.mxu0 %v2414
  %v2416 = vpop.f32.mrf.mxu0
  %v2417 = vadd.f32 %v1853, %v2416
  %v2418 = vpop.f32.mrf.mxu0
  %2419 = vmatprep.mubr.f32.mxu0 0.0
  %v2420 = vand.u32 %v238, 4294901760
  %v2421 = vsub.f32 %v238, %v2420
  %v2422 = vand.u32 %v2421, 4294901760
  %2423 = vmatmul.mubr.f32.gmra.mxu0 %v2422
  %v2424 = vpop.f32.mrf.mxu0
  %v2425 = vadd.f32 %v1860, %v2424
  %v2426 = vpop.f32.mrf.mxu0
  %2427 = vmatprep.mubr.f32.mxu0 0.0
  %v2428 = vand.u32 %v241, 4294901760
  %v2429 = vsub.f32 %v241, %v2428
  %v2430 = vand.u32 %v2429, 4294901760
  %2431 = vmatmul.mubr.f32.gmra.mxu0 %v2430
  %v2432 = vpop.f32.mrf.mxu0
  %v2433 = vadd.f32 %v1867, %v2432
  %v2434 = vpop.f32.mrf.mxu0
  %2435 = vmatprep.mubr.f32.mxu0 0.0
  %v2436 = vand.u32 %v244, 4294901760
  %v2437 = vsub.f32 %v244, %v2436
  %v2438 = vand.u32 %v2437, 4294901760
  %2439 = vmatmul.mubr.f32.gmra.mxu0 %v2438
  %v2440 = vpop.f32.mrf.mxu0
  %v2441 = vadd.f32 %v1874, %v2440
  %v2442 = vpop.f32.mrf.mxu0
  %2443 = vmatprep.mubr.f32.mxu0 0.0
  %v2444 = vand.u32 %v247, 4294901760
  %v2445 = vsub.f32 %v247, %v2444
  %v2446 = vand.u32 %v2445, 4294901760
  %2447 = vmatmul.mubr.f32.gmra.mxu0 %v2446
  %v2448 = vpop.f32.mrf.mxu0
  %v2449 = vadd.f32 %v1881, %v2448
  %v2450 = vpop.f32.mrf.mxu0
  %2451 = vmatprep.mubr.f32.mxu0 0.0
  %v2452 = vand.u32 %v250, 4294901760
  %v2453 = vsub.f32 %v250, %v2452
  %v2454 = vand.u32 %v2453, 4294901760
  %2455 = vmatmul.mubr.f32.gmra.mxu0 %v2454
  %v2456 = vpop.f32.mrf.mxu0
  %v2457 = vadd.f32 %v1888, %v2456
  %v2458 = vpop.f32.mrf.mxu0
  %2459 = vmatprep.mubr.f32.mxu0 0.0
  %v2460 = vand.u32 %v253, 4294901760
  %v2461 = vsub.f32 %v253, %v2460
  %v2462 = vand.u32 %v2461, 4294901760
  %2463 = vmatmul.mubr.f32.gmra.mxu0 %v2462
  %v2464 = vpop.f32.mrf.mxu0
  %v2465 = vadd.f32 %v1895, %v2464
  %v2466 = vpop.f32.mrf.mxu0
  %2467 = vmatprep.mubr.f32.mxu0 0.0
  %v2468 = vand.u32 %v256, 4294901760
  %v2469 = vsub.f32 %v256, %v2468
  %v2470 = vand.u32 %v2469, 4294901760
  %2471 = vmatmul.mubr.f32.gmra.mxu0 %v2470
  %v2472 = vpop.f32.mrf.mxu0
  %v2473 = vadd.f32 %v1902, %v2472
  %v2474 = vpop.f32.mrf.mxu0
  %2475 = vmatprep.mubr.f32.mxu0 0.0
  %v2476 = vand.u32 %v259, 4294901760
  %v2477 = vsub.f32 %v259, %v2476
  %v2478 = vand.u32 %v2477, 4294901760
  %2479 = vmatmul.mubr.f32.gmra.mxu0 %v2478
  %v2480 = vpop.f32.mrf.mxu0
  %v2481 = vadd.f32 %v1909, %v2480
  %v2482 = vpop.f32.mrf.mxu0
  %2483 = vmatprep.mubr.f32.mxu0 0.0
  %v2484 = vand.u32 %v262, 4294901760
  %v2485 = vsub.f32 %v262, %v2484
  %v2486 = vand.u32 %v2485, 4294901760
  %2487 = vmatmul.mubr.f32.gmra.mxu0 %v2486
  %v2488 = vpop.f32.mrf.mxu0
  %v2489 = vadd.f32 %v1916, %v2488
  %v2490 = vpop.f32.mrf.mxu0
  %2491 = vmatprep.mubr.f32.mxu0 0.0
  %v2492 = vand.u32 %v265, 4294901760
  %v2493 = vsub.f32 %v265, %v2492
  %v2494 = vand.u32 %v2493, 4294901760
  %2495 = vmatmul.mubr.f32.gmra.mxu0 %v2494
  %v2496 = vpop.f32.mrf.mxu0
  %v2497 = vadd.f32 %v1923, %v2496
  %v2498 = vpop.f32.mrf.mxu0
  %2499 = vmatprep.mubr.f32.mxu0 0.0
  %v2500 = vand.u32 %v268, 4294901760
  %v2501 = vsub.f32 %v268, %v2500
  %v2502 = vand.u32 %v2501, 4294901760
  %2503 = vmatmul.mubr.f32.gmra.mxu0 %v2502
  %v2504 = vpop.f32.mrf.mxu0
  %v2505 = vadd.f32 %v1930, %v2504
  %v2506 = vpop.f32.mrf.mxu0
  %2507 = vmatprep.mubr.f32.mxu0 0.0
  %v2508 = vand.u32 %v271, 4294901760
  %v2509 = vsub.f32 %v271, %v2508
  %v2510 = vand.u32 %v2509, 4294901760
  %2511 = vmatmul.mubr.f32.gmra.mxu0 %v2510
  %v2512 = vpop.f32.mrf.mxu0
  %v2513 = vadd.f32 %v1937, %v2512
  %v2514 = vpop.f32.mrf.mxu0
  %2515 = vmatprep.mubr.f32.mxu0 0.0
  %v2516 = vand.u32 %v274, 4294901760
  %v2517 = vsub.f32 %v274, %v2516
  %v2518 = vand.u32 %v2517, 4294901760
  %2519 = vmatmul.mubr.f32.gmra.mxu0 %v2518
  %v2520 = vpop.f32.mrf.mxu0
  %v2521 = vadd.f32 %v1944, %v2520
  %v2522 = vpop.f32.mrf.mxu0
  %2523 = vmatprep.mubr.f32.mxu0 0.0
  %v2524 = vand.u32 %v277, 4294901760
  %v2525 = vsub.f32 %v277, %v2524
  %v2526 = vand.u32 %v2525, 4294901760
  %2527 = vmatmul.mubr.f32.gmra.mxu0 %v2526
  %v2528 = vpop.f32.mrf.mxu0
  %v2529 = vadd.f32 %v1951, %v2528
  %v2530 = vpop.f32.mrf.mxu0
  %2531 = vdwg.mxu0
  %2532 = vmatprep.subr.mxu0 0.0
  %2533 = vmatpush1.msra.mxu0 0.0
  %2534 = vmatprep.subr.mxu0 0.0
  %2535 = vmatpush1.msra.mxu0 0.0
  %2536 = vmatprep.subr.mxu0 0.0
  %2537 = vmatpush1.msra.mxu0 0.0
  %2538 = vmatprep.subr.mxu0 0.0
  %2539 = vmatpush1.msra.mxu0 0.0
  %2540 = vmatprep.subr.mxu0 0.0
  %2541 = vmatpush1.msra.mxu0 0.0
  %2542 = vmatprep.subr.mxu0 0.0
  %2543 = vmatpush1.msra.mxu0 0.0
  %2544 = vmatprep.subr.mxu0 0.0
  %2545 = vmatpush1.msra.mxu0 0.0
  %2546 = vmatprep.subr.mxu0 0.0
  %2547 = vmatpush1.msra.mxu0 0.0
  %2548 = vmatprep.subr.mxu0 0.0
  %2549 = vmatpush1.msra.mxu0 0.0
  %2550 = vmatprep.subr.mxu0 0.0
  %2551 = vmatpush1.msra.mxu0 0.0
  %2552 = vmatprep.subr.mxu0 0.0
  %2553 = vmatpush1.msra.mxu0 0.0
  %2554 = vmatprep.subr.mxu0 0.0
  %2555 = vmatpush1.msra.mxu0 0.0
  %2556 = vmatprep.subr.mxu0 0.0
  %2557 = vmatpush1.msra.mxu0 0.0
  %2558 = vmatprep.subr.mxu0 0.0
  %2559 = vmatpush1.msra.mxu0 0.0
  %2560 = vmatprep.subr.mxu0 0.0
  %2561 = vmatpush1.msra.mxu0 0.0
  %2562 = vmatprep.subr.mxu0 0.0
  %v2563 = vand.u32 %v78, 4294901760
  %v2564 = vsub.f32 %v78, %v2563
  %v2565 = vand.u32 %v2564, 4294901760
  %2566 = vmatpush1.msra.mxu0 %v2565
  %2567 = vmatprep.subr.mxu0 0.0
  %2568 = vmatpush2.msra.mxu0 0.0
  %2569 = vmatprep.subr.mxu0 0.0
  %2570 = vmatpush2.msra.mxu0 0.0
  %2571 = vmatprep.subr.mxu0 0.0
  %2572 = vmatpush2.msra.mxu0 0.0
  %2573 = vmatprep.subr.mxu0 0.0
  %2574 = vmatpush2.msra.mxu0 0.0
  %2575 = vmatprep.subr.mxu0 0.0
  %2576 = vmatpush2.msra.mxu0 0.0
  %2577 = vmatprep.subr.mxu0 0.0
  %2578 = vmatpush2.msra.mxu0 0.0
  %2579 = vmatprep.subr.mxu0 0.0
  %2580 = vmatpush2.msra.mxu0 0.0
  %2581 = vmatprep.subr.mxu0 0.0
  %2582 = vmatpush2.msra.mxu0 0.0
  %2583 = vmatprep.subr.mxu0 0.0
  %2584 = vmatpush2.msra.mxu0 0.0
  %2585 = vmatprep.subr.mxu0 0.0
  %2586 = vmatpush2.msra.mxu0 0.0
  %2587 = vmatprep.subr.mxu0 0.0
  %2588 = vmatpush2.msra.mxu0 0.0
  %2589 = vmatprep.subr.mxu0 0.0
  %2590 = vmatpush2.msra.mxu0 0.0
  %2591 = vmatprep.subr.mxu0 0.0
  %2592 = vmatpush2.msra.mxu0 0.0
  %2593 = vmatprep.subr.mxu0 0.0
  %2594 = vmatpush2.msra.mxu0 0.0
  %2595 = vmatprep.subr.mxu0 0.0
  %2596 = vmatpush2.msra.mxu0 0.0
  %2597 = vmatprep.subr.mxu0 0.0
  %2598 = vmatpush2.msra.mxu0 0.0
  %2599 = vmatprep.mubr.f32.mxu0 0.0
  %v2600 = vand.u32 %v88, 4294901760
  %2601 = vmatmul.mubr.f32.gmra.mxu0 %v2600
  %v2602 = vpop.f32.mrf.mxu0
  %v2603 = vadd.f32 %v2025, %v2602
  %v2604 = vpop.f32.mrf.mxu0
  %2605 = vmatprep.mubr.f32.mxu0 0.0
  %v2606 = vand.u32 %v91, 4294901760
  %2607 = vmatmul.mubr.f32.gmra.mxu0 %v2606
  %v2608 = vpop.f32.mrf.mxu0
  %v2609 = vadd.f32 %v2033, %v2608
  %v2610 = vpop.f32.mrf.mxu0
  %2611 = vmatprep.mubr.f32.mxu0 0.0
  %v2612 = vand.u32 %v94, 4294901760
  %2613 = vmatmul.mubr.f32.gmra.mxu0 %v2612
  %v2614 = vpop.f32.mrf.mxu0
  %v2615 = vadd.f32 %v2041, %v2614
  %v2616 = vpop.f32.mrf.mxu0
  %2617 = vmatprep.mubr.f32.mxu0 0.0
  %v2618 = vand.u32 %v97, 4294901760
  %2619 = vmatmul.mubr.f32.gmra.mxu0 %v2618
  %v2620 = vpop.f32.mrf.mxu0
  %v2621 = vadd.f32 %v2049, %v2620
  %v2622 = vpop.f32.mrf.mxu0
  %2623 = vmatprep.mubr.f32.mxu0 0.0
  %v2624 = vand.u32 %v100, 4294901760
  %2625 = vmatmul.mubr.f32.gmra.mxu0 %v2624
  %v2626 = vpop.f32.mrf.mxu0
  %v2627 = vadd.f32 %v2057, %v2626
  %v2628 = vpop.f32.mrf.mxu0
  %2629 = vmatprep.mubr.f32.mxu0 0.0
  %v2630 = vand.u32 %v103, 4294901760
  %2631 = vmatmul.mubr.f32.gmra.mxu0 %v2630
  %v2632 = vpop.f32.mrf.mxu0
  %v2633 = vadd.f32 %v2065, %v2632
  %v2634 = vpop.f32.mrf.mxu0
  %2635 = vmatprep.mubr.f32.mxu0 0.0
  %v2636 = vand.u32 %v106, 4294901760
  %2637 = vmatmul.mubr.f32.gmra.mxu0 %v2636
  %v2638 = vpop.f32.mrf.mxu0
  %v2639 = vadd.f32 %v2073, %v2638
  %v2640 = vpop.f32.mrf.mxu0
  %2641 = vmatprep.mubr.f32.mxu0 0.0
  %v2642 = vand.u32 %v109, 4294901760
  %2643 = vmatmul.mubr.f32.gmra.mxu0 %v2642
  %v2644 = vpop.f32.mrf.mxu0
  %v2645 = vadd.f32 %v2081, %v2644
  %v2646 = vpop.f32.mrf.mxu0
  %2647 = vmatprep.mubr.f32.mxu0 0.0
  %v2648 = vand.u32 %v112, 4294901760
  %2649 = vmatmul.mubr.f32.gmra.mxu0 %v2648
  %v2650 = vpop.f32.mrf.mxu0
  %v2651 = vadd.f32 %v2089, %v2650
  %v2652 = vpop.f32.mrf.mxu0
  %2653 = vmatprep.mubr.f32.mxu0 0.0
  %v2654 = vand.u32 %v115, 4294901760
  %2655 = vmatmul.mubr.f32.gmra.mxu0 %v2654
  %v2656 = vpop.f32.mrf.mxu0
  %v2657 = vadd.f32 %v2097, %v2656
  %v2658 = vpop.f32.mrf.mxu0
  %2659 = vmatprep.mubr.f32.mxu0 0.0
  %v2660 = vand.u32 %v118, 4294901760
  %2661 = vmatmul.mubr.f32.gmra.mxu0 %v2660
  %v2662 = vpop.f32.mrf.mxu0
  %v2663 = vadd.f32 %v2105, %v2662
  %v2664 = vpop.f32.mrf.mxu0
  %2665 = vmatprep.mubr.f32.mxu0 0.0
  %v2666 = vand.u32 %v121, 4294901760
  %2667 = vmatmul.mubr.f32.gmra.mxu0 %v2666
  %v2668 = vpop.f32.mrf.mxu0
  %v2669 = vadd.f32 %v2113, %v2668
  %v2670 = vpop.f32.mrf.mxu0
  %2671 = vmatprep.mubr.f32.mxu0 0.0
  %v2672 = vand.u32 %v124, 4294901760
  %2673 = vmatmul.mubr.f32.gmra.mxu0 %v2672
  %v2674 = vpop.f32.mrf.mxu0
  %v2675 = vadd.f32 %v2121, %v2674
  %v2676 = vpop.f32.mrf.mxu0
  %2677 = vmatprep.mubr.f32.mxu0 0.0
  %v2678 = vand.u32 %v127, 4294901760
  %2679 = vmatmul.mubr.f32.gmra.mxu0 %v2678
  %v2680 = vpop.f32.mrf.mxu0
  %v2681 = vadd.f32 %v2129, %v2680
  %v2682 = vpop.f32.mrf.mxu0
  %2683 = vmatprep.mubr.f32.mxu0 0.0
  %v2684 = vand.u32 %v130, 4294901760
  %2685 = vmatmul.mubr.f32.gmra.mxu0 %v2684
  %v2686 = vpop.f32.mrf.mxu0
  %v2687 = vadd.f32 %v2137, %v2686
  %v2688 = vpop.f32.mrf.mxu0
  %2689 = vmatprep.mubr.f32.mxu0 0.0
  %v2690 = vand.u32 %v133, 4294901760
  %2691 = vmatmul.mubr.f32.gmra.mxu0 %v2690
  %v2692 = vpop.f32.mrf.mxu0
  %v2693 = vadd.f32 %v2145, %v2692
  %v2694 = vpop.f32.mrf.mxu0
  %2695 = vmatprep.mubr.f32.mxu0 0.0
  %v2696 = vand.u32 %v136, 4294901760
  %2697 = vmatmul.mubr.f32.gmra.mxu0 %v2696
  %v2698 = vpop.f32.mrf.mxu0
  %v2699 = vadd.f32 %v2153, %v2698
  %v2700 = vpop.f32.mrf.mxu0
  %2701 = vmatprep.mubr.f32.mxu0 0.0
  %v2702 = vand.u32 %v139, 4294901760
  %2703 = vmatmul.mubr.f32.gmra.mxu0 %v2702
  %v2704 = vpop.f32.mrf.mxu0
  %v2705 = vadd.f32 %v2161, %v2704
  %v2706 = vpop.f32.mrf.mxu0
  %2707 = vmatprep.mubr.f32.mxu0 0.0
  %v2708 = vand.u32 %v142, 4294901760
  %2709 = vmatmul.mubr.f32.gmra.mxu0 %v2708
  %v2710 = vpop.f32.mrf.mxu0
  %v2711 = vadd.f32 %v2169, %v2710
  %v2712 = vpop.f32.mrf.mxu0
  %2713 = vmatprep.mubr.f32.mxu0 0.0
  %v2714 = vand.u32 %v145, 4294901760
  %2715 = vmatmul.mubr.f32.gmra.mxu0 %v2714
  %v2716 = vpop.f32.mrf.mxu0
  %v2717 = vadd.f32 %v2177, %v2716
  %v2718 = vpop.f32.mrf.mxu0
  %2719 = vmatprep.mubr.f32.mxu0 0.0
  %v2720 = vand.u32 %v148, 4294901760
  %2721 = vmatmul.mubr.f32.gmra.mxu0 %v2720
  %v2722 = vpop.f32.mrf.mxu0
  %v2723 = vadd.f32 %v2185, %v2722
  %v2724 = vpop.f32.mrf.mxu0
  %2725 = vmatprep.mubr.f32.mxu0 0.0
  %v2726 = vand.u32 %v151, 4294901760
  %2727 = vmatmul.mubr.f32.gmra.mxu0 %v2726
  %v2728 = vpop.f32.mrf.mxu0
  %v2729 = vadd.f32 %v2193, %v2728
  %v2730 = vpop.f32.mrf.mxu0
  %2731 = vmatprep.mubr.f32.mxu0 0.0
  %v2732 = vand.u32 %v154, 4294901760
  %2733 = vmatmul.mubr.f32.gmra.mxu0 %v2732
  %v2734 = vpop.f32.mrf.mxu0
  %v2735 = vadd.f32 %v2201, %v2734
  %v2736 = vpop.f32.mrf.mxu0
  %2737 = vmatprep.mubr.f32.mxu0 0.0
  %v2738 = vand.u32 %v157, 4294901760
  %2739 = vmatmul.mubr.f32.gmra.mxu0 %v2738
  %v2740 = vpop.f32.mrf.mxu0
  %v2741 = vadd.f32 %v2209, %v2740
  %v2742 = vpop.f32.mrf.mxu0
  %2743 = vmatprep.mubr.f32.mxu0 0.0
  %v2744 = vand.u32 %v160, 4294901760
  %2745 = vmatmul.mubr.f32.gmra.mxu0 %v2744
  %v2746 = vpop.f32.mrf.mxu0
  %v2747 = vadd.f32 %v2217, %v2746
  %v2748 = vpop.f32.mrf.mxu0
  %2749 = vmatprep.mubr.f32.mxu0 0.0
  %v2750 = vand.u32 %v163, 4294901760
  %2751 = vmatmul.mubr.f32.gmra.mxu0 %v2750
  %v2752 = vpop.f32.mrf.mxu0
  %v2753 = vadd.f32 %v2225, %v2752
  %v2754 = vpop.f32.mrf.mxu0
  %2755 = vmatprep.mubr.f32.mxu0 0.0
  %v2756 = vand.u32 %v166, 4294901760
  %2757 = vmatmul.mubr.f32.gmra.mxu0 %v2756
  %v2758 = vpop.f32.mrf.mxu0
  %v2759 = vadd.f32 %v2233, %v2758
  %v2760 = vpop.f32.mrf.mxu0
  %2761 = vmatprep.mubr.f32.mxu0 0.0
  %v2762 = vand.u32 %v169, 4294901760
  %2763 = vmatmul.mubr.f32.gmra.mxu0 %v2762
  %v2764 = vpop.f32.mrf.mxu0
  %v2765 = vadd.f32 %v2241, %v2764
  %v2766 = vpop.f32.mrf.mxu0
  %2767 = vmatprep.mubr.f32.mxu0 0.0
  %v2768 = vand.u32 %v172, 4294901760
  %2769 = vmatmul.mubr.f32.gmra.mxu0 %v2768
  %v2770 = vpop.f32.mrf.mxu0
  %v2771 = vadd.f32 %v2249, %v2770
  %v2772 = vpop.f32.mrf.mxu0
  %2773 = vmatprep.mubr.f32.mxu0 0.0
  %v2774 = vand.u32 %v175, 4294901760
  %2775 = vmatmul.mubr.f32.gmra.mxu0 %v2774
  %v2776 = vpop.f32.mrf.mxu0
  %v2777 = vadd.f32 %v2257, %v2776
  %v2778 = vpop.f32.mrf.mxu0
  %2779 = vmatprep.mubr.f32.mxu0 0.0
  %v2780 = vand.u32 %v178, 4294901760
  %2781 = vmatmul.mubr.f32.gmra.mxu0 %v2780
  %v2782 = vpop.f32.mrf.mxu0
  %v2783 = vadd.f32 %v2265, %v2782
  %v2784 = vpop.f32.mrf.mxu0
  %2785 = vmatprep.mubr.f32.mxu0 0.0
  %v2786 = vand.u32 %v181, 4294901760
  %2787 = vmatmul.mubr.f32.gmra.mxu0 %v2786
  %v2788 = vpop.f32.mrf.mxu0
  %v2789 = vadd.f32 %v2273, %v2788
  %v2790 = vpop.f32.mrf.mxu0
  %2791 = vmatprep.mubr.f32.mxu0 0.0
  %v2792 = vand.u32 %v184, 4294901760
  %2793 = vmatmul.mubr.f32.gmra.mxu0 %v2792
  %v2794 = vpop.f32.mrf.mxu0
  %v2795 = vadd.f32 %v2281, %v2794
  %v2796 = vpop.f32.mrf.mxu0
  %2797 = vmatprep.mubr.f32.mxu0 0.0
  %v2798 = vand.u32 %v187, 4294901760
  %2799 = vmatmul.mubr.f32.gmra.mxu0 %v2798
  %v2800 = vpop.f32.mrf.mxu0
  %v2801 = vadd.f32 %v2289, %v2800
  %v2802 = vpop.f32.mrf.mxu0
  %2803 = vmatprep.mubr.f32.mxu0 0.0
  %v2804 = vand.u32 %v190, 4294901760
  %2805 = vmatmul.mubr.f32.gmra.mxu0 %v2804
  %v2806 = vpop.f32.mrf.mxu0
  %v2807 = vadd.f32 %v2297, %v2806
  %v2808 = vpop.f32.mrf.mxu0
  %2809 = vmatprep.mubr.f32.mxu0 0.0
  %v2810 = vand.u32 %v193, 4294901760
  %2811 = vmatmul.mubr.f32.gmra.mxu0 %v2810
  %v2812 = vpop.f32.mrf.mxu0
  %v2813 = vadd.f32 %v2305, %v2812
  %v2814 = vpop.f32.mrf.mxu0
  %2815 = vmatprep.mubr.f32.mxu0 0.0
  %v2816 = vand.u32 %v196, 4294901760
  %2817 = vmatmul.mubr.f32.gmra.mxu0 %v2816
  %v2818 = vpop.f32.mrf.mxu0
  %v2819 = vadd.f32 %v2313, %v2818
  %v2820 = vpop.f32.mrf.mxu0
  %2821 = vmatprep.mubr.f32.mxu0 0.0
  %v2822 = vand.u32 %v199, 4294901760
  %2823 = vmatmul.mubr.f32.gmra.mxu0 %v2822
  %v2824 = vpop.f32.mrf.mxu0
  %v2825 = vadd.f32 %v2321, %v2824
  %v2826 = vpop.f32.mrf.mxu0
  %2827 = vmatprep.mubr.f32.mxu0 0.0
  %v2828 = vand.u32 %v202, 4294901760
  %2829 = vmatmul.mubr.f32.gmra.mxu0 %v2828
  %v2830 = vpop.f32.mrf.mxu0
  %v2831 = vadd.f32 %v2329, %v2830
  %v2832 = vpop.f32.mrf.mxu0
  %2833 = vmatprep.mubr.f32.mxu0 0.0
  %v2834 = vand.u32 %v205, 4294901760
  %2835 = vmatmul.mubr.f32.gmra.mxu0 %v2834
  %v2836 = vpop.f32.mrf.mxu0
  %v2837 = vadd.f32 %v2337, %v2836
  %v2838 = vpop.f32.mrf.mxu0
  %2839 = vmatprep.mubr.f32.mxu0 0.0
  %v2840 = vand.u32 %v208, 4294901760
  %2841 = vmatmul.mubr.f32.gmra.mxu0 %v2840
  %v2842 = vpop.f32.mrf.mxu0
  %v2843 = vadd.f32 %v2345, %v2842
  %v2844 = vpop.f32.mrf.mxu0
  %2845 = vmatprep.mubr.f32.mxu0 0.0
  %v2846 = vand.u32 %v211, 4294901760
  %2847 = vmatmul.mubr.f32.gmra.mxu0 %v2846
  %v2848 = vpop.f32.mrf.mxu0
  %v2849 = vadd.f32 %v2353, %v2848
  %v2850 = vpop.f32.mrf.mxu0
  %2851 = vmatprep.mubr.f32.mxu0 0.0
  %v2852 = vand.u32 %v214, 4294901760
  %2853 = vmatmul.mubr.f32.gmra.mxu0 %v2852
  %v2854 = vpop.f32.mrf.mxu0
  %v2855 = vadd.f32 %v2361, %v2854
  %v2856 = vpop.f32.mrf.mxu0
  %2857 = vmatprep.mubr.f32.mxu0 0.0
  %v2858 = vand.u32 %v217, 4294901760
  %2859 = vmatmul.mubr.f32.gmra.mxu0 %v2858
  %v2860 = vpop.f32.mrf.mxu0
  %v2861 = vadd.f32 %v2369, %v2860
  %v2862 = vpop.f32.mrf.mxu0
  %2863 = vmatprep.mubr.f32.mxu0 0.0
  %v2864 = vand.u32 %v220, 4294901760
  %2865 = vmatmul.mubr.f32.gmra.mxu0 %v2864
  %v2866 = vpop.f32.mrf.mxu0
  %v2867 = vadd.f32 %v2377, %v2866
  %v2868 = vpop.f32.mrf.mxu0
  %2869 = vmatprep.mubr.f32.mxu0 0.0
  %v2870 = vand.u32 %v223, 4294901760
  %2871 = vmatmul.mubr.f32.gmra.mxu0 %v2870
  %v2872 = vpop.f32.mrf.mxu0
  %v2873 = vadd.f32 %v2385, %v2872
  %v2874 = vpop.f32.mrf.mxu0
  %2875 = vmatprep.mubr.f32.mxu0 0.0
  %v2876 = vand.u32 %v226, 4294901760
  %2877 = vmatmul.mubr.f32.gmra.mxu0 %v2876
  %v2878 = vpop.f32.mrf.mxu0
  %v2879 = vadd.f32 %v2393, %v2878
  %v2880 = vpop.f32.mrf.mxu0
  %2881 = vmatprep.mubr.f32.mxu0 0.0
  %v2882 = vand.u32 %v229, 4294901760
  %2883 = vmatmul.mubr.f32.gmra.mxu0 %v2882
  %v2884 = vpop.f32.mrf.mxu0
  %v2885 = vadd.f32 %v2401, %v2884
  %v2886 = vpop.f32.mrf.mxu0
  %2887 = vmatprep.mubr.f32.mxu0 0.0
  %v2888 = vand.u32 %v232, 4294901760
  %2889 = vmatmul.mubr.f32.gmra.mxu0 %v2888
  %v2890 = vpop.f32.mrf.mxu0
  %v2891 = vadd.f32 %v2409, %v2890
  %v2892 = vpop.f32.mrf.mxu0
  %2893 = vmatprep.mubr.f32.mxu0 0.0
  %v2894 = vand.u32 %v235, 4294901760
  %2895 = vmatmul.mubr.f32.gmra.mxu0 %v2894
  %v2896 = vpop.f32.mrf.mxu0
  %v2897 = vadd.f32 %v2417, %v2896
  %v2898 = vpop.f32.mrf.mxu0
  %2899 = vmatprep.mubr.f32.mxu0 0.0
  %v2900 = vand.u32 %v238, 4294901760
  %2901 = vmatmul.mubr.f32.gmra.mxu0 %v2900
  %v2902 = vpop.f32.mrf.mxu0
  %v2903 = vadd.f32 %v2425, %v2902
  %v2904 = vpop.f32.mrf.mxu0
  %2905 = vmatprep.mubr.f32.mxu0 0.0
  %v2906 = vand.u32 %v241, 4294901760
  %2907 = vmatmul.mubr.f32.gmra.mxu0 %v2906
  %v2908 = vpop.f32.mrf.mxu0
  %v2909 = vadd.f32 %v2433, %v2908
  %v2910 = vpop.f32.mrf.mxu0
  %2911 = vmatprep.mubr.f32.mxu0 0.0
  %v2912 = vand.u32 %v244, 4294901760
  %2913 = vmatmul.mubr.f32.gmra.mxu0 %v2912
  %v2914 = vpop.f32.mrf.mxu0
  %v2915 = vadd.f32 %v2441, %v2914
  %v2916 = vpop.f32.mrf.mxu0
  %2917 = vmatprep.mubr.f32.mxu0 0.0
  %v2918 = vand.u32 %v247, 4294901760
  %2919 = vmatmul.mubr.f32.gmra.mxu0 %v2918
  %v2920 = vpop.f32.mrf.mxu0
  %v2921 = vadd.f32 %v2449, %v2920
  %v2922 = vpop.f32.mrf.mxu0
  %2923 = vmatprep.mubr.f32.mxu0 0.0
  %v2924 = vand.u32 %v250, 4294901760
  %2925 = vmatmul.mubr.f32.gmra.mxu0 %v2924
  %v2926 = vpop.f32.mrf.mxu0
  %v2927 = vadd.f32 %v2457, %v2926
  %v2928 = vpop.f32.mrf.mxu0
  %2929 = vmatprep.mubr.f32.mxu0 0.0
  %v2930 = vand.u32 %v253, 4294901760
  %2931 = vmatmul.mubr.f32.gmra.mxu0 %v2930
  %v2932 = vpop.f32.mrf.mxu0
  %v2933 = vadd.f32 %v2465, %v2932
  %v2934 = vpop.f32.mrf.mxu0
  %2935 = vmatprep.mubr.f32.mxu0 0.0
  %v2936 = vand.u32 %v256, 4294901760
  %2937 = vmatmul.mubr.f32.gmra.mxu0 %v2936
  %v2938 = vpop.f32.mrf.mxu0
  %v2939 = vadd.f32 %v2473, %v2938
  %v2940 = vpop.f32.mrf.mxu0
  %2941 = vmatprep.mubr.f32.mxu0 0.0
  %v2942 = vand.u32 %v259, 4294901760
  %2943 = vmatmul.mubr.f32.gmra.mxu0 %v2942
  %v2944 = vpop.f32.mrf.mxu0
  %v2945 = vadd.f32 %v2481, %v2944
  %v2946 = vpop.f32.mrf.mxu0
  %2947 = vmatprep.mubr.f32.mxu0 0.0
  %v2948 = vand.u32 %v262, 4294901760
  %2949 = vmatmul.mubr.f32.gmra.mxu0 %v2948
  %v2950 = vpop.f32.mrf.mxu0
  %v2951 = vadd.f32 %v2489, %v2950
  %v2952 = vpop.f32.mrf.mxu0
  %2953 = vmatprep.mubr.f32.mxu0 0.0
  %v2954 = vand.u32 %v265, 4294901760
  %2955 = vmatmul.mubr.f32.gmra.mxu0 %v2954
  %v2956 = vpop.f32.mrf.mxu0
  %v2957 = vadd.f32 %v2497, %v2956
  %v2958 = vpop.f32.mrf.mxu0
  %2959 = vmatprep.mubr.f32.mxu0 0.0
  %v2960 = vand.u32 %v268, 4294901760
  %2961 = vmatmul.mubr.f32.gmra.mxu0 %v2960
  %v2962 = vpop.f32.mrf.mxu0
  %v2963 = vadd.f32 %v2505, %v2962
  %v2964 = vpop.f32.mrf.mxu0
  %2965 = vmatprep.mubr.f32.mxu0 0.0
  %v2966 = vand.u32 %v271, 4294901760
  %2967 = vmatmul.mubr.f32.gmra.mxu0 %v2966
  %v2968 = vpop.f32.mrf.mxu0
  %v2969 = vadd.f32 %v2513, %v2968
  %v2970 = vpop.f32.mrf.mxu0
  %2971 = vmatprep.mubr.f32.mxu0 0.0
  %v2972 = vand.u32 %v274, 4294901760
  %2973 = vmatmul.mubr.f32.gmra.mxu0 %v2972
  %v2974 = vpop.f32.mrf.mxu0
  %v2975 = vadd.f32 %v2521, %v2974
  %v2976 = vpop.f32.mrf.mxu0
  %2977 = vmatprep.mubr.f32.mxu0 0.0
  %v2978 = vand.u32 %v277, 4294901760
  %2979 = vmatmul.mubr.f32.gmra.mxu0 %v2978
  %v2980 = vpop.f32.mrf.mxu0
  %v2981 = vadd.f32 %v2529, %v2980
  %v2982 = vpop.f32.mrf.mxu0
  %2983 = vdwg.mxu0
  %2984 = vmatprep.subr.mxu0 0.0
  %2985 = vmatpush1.msra.mxu0 0.0
  %2986 = vmatprep.subr.mxu0 0.0
  %2987 = vmatpush1.msra.mxu0 0.0
  %2988 = vmatprep.subr.mxu0 0.0
  %2989 = vmatpush1.msra.mxu0 0.0
  %2990 = vmatprep.subr.mxu0 0.0
  %2991 = vmatpush1.msra.mxu0 0.0
  %2992 = vmatprep.subr.mxu0 0.0
  %2993 = vmatpush1.msra.mxu0 0.0
  %2994 = vmatprep.subr.mxu0 0.0
  %2995 = vmatpush1.msra.mxu0 0.0
  %2996 = vmatprep.subr.mxu0 0.0
  %2997 = vmatpush1.msra.mxu0 0.0
  %2998 = vmatprep.subr.mxu0 0.0
  %2999 = vmatpush1.msra.mxu0 0.0
  %3000 = vmatprep.subr.mxu0 0.0
  %3001 = vmatpush1.msra.mxu0 0.0
  %3002 = vmatprep.subr.mxu0 0.0
  %3003 = vmatpush1.msra.mxu0 0.0
  %3004 = vmatprep.subr.mxu0 0.0
  %3005 = vmatpush1.msra.mxu0 0.0
  %3006 = vmatprep.subr.mxu0 0.0
  %3007 = vmatpush1.msra.mxu0 0.0
  %3008 = vmatprep.subr.mxu0 0.0
  %3009 = vmatpush1.msra.mxu0 0.0
  %3010 = vmatprep.subr.mxu0 0.0
  %3011 = vmatpush1.msra.mxu0 0.0
  %3012 = vmatprep.subr.mxu0 0.0
  %3013 = vmatpush1.msra.mxu0 0.0
  %3014 = vmatprep.subr.mxu0 0.0
  %v3015 = vand.u32 %v78, 4294901760
  %3016 = vmatpush1.msra.mxu0 %v3015
  %3017 = vmatprep.subr.mxu0 0.0
  %3018 = vmatpush2.msra.mxu0 0.0
  %3019 = vmatprep.subr.mxu0 0.0
  %3020 = vmatpush2.msra.mxu0 0.0
  %3021 = vmatprep.subr.mxu0 0.0
  %3022 = vmatpush2.msra.mxu0 0.0
  %3023 = vmatprep.subr.mxu0 0.0
  %3024 = vmatpush2.msra.mxu0 0.0
  %3025 = vmatprep.subr.mxu0 0.0
  %3026 = vmatpush2.msra.mxu0 0.0
  %3027 = vmatprep.subr.mxu0 0.0
  %3028 = vmatpush2.msra.mxu0 0.0
  %3029 = vmatprep.subr.mxu0 0.0
  %3030 = vmatpush2.msra.mxu0 0.0
  %3031 = vmatprep.subr.mxu0 0.0
  %3032 = vmatpush2.msra.mxu0 0.0
  %3033 = vmatprep.subr.mxu0 0.0
  %3034 = vmatpush2.msra.mxu0 0.0
  %3035 = vmatprep.subr.mxu0 0.0
  %3036 = vmatpush2.msra.mxu0 0.0
  %3037 = vmatprep.subr.mxu0 0.0
  %3038 = vmatpush2.msra.mxu0 0.0
  %3039 = vmatprep.subr.mxu0 0.0
  %3040 = vmatpush2.msra.mxu0 0.0
  %3041 = vmatprep.subr.mxu0 0.0
  %3042 = vmatpush2.msra.mxu0 0.0
  %3043 = vmatprep.subr.mxu0 0.0
  %3044 = vmatpush2.msra.mxu0 0.0
  %3045 = vmatprep.subr.mxu0 0.0
  %3046 = vmatpush2.msra.mxu0 0.0
  %3047 = vmatprep.subr.mxu0 0.0
  %3048 = vmatpush2.msra.mxu0 0.0
  %3049 = vmatprep.mubr.f32.mxu0 0.0
  %v3050 = vand.u32 %v88, 4294901760
  %3051 = vmatmul.mubr.f32.gmra.mxu0 %v3050
  %v3052 = vpop.f32.mrf.mxu0
  %v3053 = vadd.f32 %v2603, %v3052
  %v3054 = vpop.f32.mrf.mxu0
  %3055 = vmatprep.mubr.f32.mxu0 0.0
  %v3056 = vand.u32 %v91, 4294901760
  %3057 = vmatmul.mubr.f32.gmra.mxu0 %v3056
  %v3058 = vpop.f32.mrf.mxu0
  %v3059 = vadd.f32 %v2609, %v3058
  %v3060 = vpop.f32.mrf.mxu0
  %3061 = vmatprep.mubr.f32.mxu0 0.0
  %v3062 = vand.u32 %v94, 4294901760
  %3063 = vmatmul.mubr.f32.gmra.mxu0 %v3062
  %v3064 = vpop.f32.mrf.mxu0
  %v3065 = vadd.f32 %v2615, %v3064
  %v3066 = vpop.f32.mrf.mxu0
  %3067 = vmatprep.mubr.f32.mxu0 0.0
  %v3068 = vand.u32 %v97, 4294901760
  %3069 = vmatmul.mubr.f32.gmra.mxu0 %v3068
  %v3070 = vpop.f32.mrf.mxu0
  %v3071 = vadd.f32 %v2621, %v3070
  %v3072 = vpop.f32.mrf.mxu0
  %3073 = vmatprep.mubr.f32.mxu0 0.0
  %v3074 = vand.u32 %v100, 4294901760
  %3075 = vmatmul.mubr.f32.gmra.mxu0 %v3074
  %v3076 = vpop.f32.mrf.mxu0
  %v3077 = vadd.f32 %v2627, %v3076
  %v3078 = vpop.f32.mrf.mxu0
  %3079 = vmatprep.mubr.f32.mxu0 0.0
  %v3080 = vand.u32 %v103, 4294901760
  %3081 = vmatmul.mubr.f32.gmra.mxu0 %v3080
  %v3082 = vpop.f32.mrf.mxu0
  %v3083 = vadd.f32 %v2633, %v3082
  %v3084 = vpop.f32.mrf.mxu0
  %3085 = vmatprep.mubr.f32.mxu0 0.0
  %v3086 = vand.u32 %v106, 4294901760
  %3087 = vmatmul.mubr.f32.gmra.mxu0 %v3086
  %v3088 = vpop.f32.mrf.mxu0
  %v3089 = vadd.f32 %v2639, %v3088
  %v3090 = vpop.f32.mrf.mxu0
  %3091 = vmatprep.mubr.f32.mxu0 0.0
  %v3092 = vand.u32 %v109, 4294901760
  %3093 = vmatmul.mubr.f32.gmra.mxu0 %v3092
  %v3094 = vpop.f32.mrf.mxu0
  %v3095 = vadd.f32 %v2645, %v3094
  %v3096 = vpop.f32.mrf.mxu0
  %3097 = vmatprep.mubr.f32.mxu0 0.0
  %v3098 = vand.u32 %v112, 4294901760
  %3099 = vmatmul.mubr.f32.gmra.mxu0 %v3098
  %v3100 = vpop.f32.mrf.mxu0
  %v3101 = vadd.f32 %v2651, %v3100
  %v3102 = vpop.f32.mrf.mxu0
  %3103 = vmatprep.mubr.f32.mxu0 0.0
  %v3104 = vand.u32 %v115, 4294901760
  %3105 = vmatmul.mubr.f32.gmra.mxu0 %v3104
  %v3106 = vpop.f32.mrf.mxu0
  %v3107 = vadd.f32 %v2657, %v3106
  %v3108 = vpop.f32.mrf.mxu0
  %3109 = vmatprep.mubr.f32.mxu0 0.0
  %v3110 = vand.u32 %v118, 4294901760
  %3111 = vmatmul.mubr.f32.gmra.mxu0 %v3110
  %v3112 = vpop.f32.mrf.mxu0
  %v3113 = vadd.f32 %v2663, %v3112
  %v3114 = vpop.f32.mrf.mxu0
  %3115 = vmatprep.mubr.f32.mxu0 0.0
  %v3116 = vand.u32 %v121, 4294901760
  %3117 = vmatmul.mubr.f32.gmra.mxu0 %v3116
  %v3118 = vpop.f32.mrf.mxu0
  %v3119 = vadd.f32 %v2669, %v3118
  %v3120 = vpop.f32.mrf.mxu0
  %3121 = vmatprep.mubr.f32.mxu0 0.0
  %v3122 = vand.u32 %v124, 4294901760
  %3123 = vmatmul.mubr.f32.gmra.mxu0 %v3122
  %v3124 = vpop.f32.mrf.mxu0
  %v3125 = vadd.f32 %v2675, %v3124
  %v3126 = vpop.f32.mrf.mxu0
  %3127 = vmatprep.mubr.f32.mxu0 0.0
  %v3128 = vand.u32 %v127, 4294901760
  %3129 = vmatmul.mubr.f32.gmra.mxu0 %v3128
  %v3130 = vpop.f32.mrf.mxu0
  %v3131 = vadd.f32 %v2681, %v3130
  %v3132 = vpop.f32.mrf.mxu0
  %3133 = vmatprep.mubr.f32.mxu0 0.0
  %v3134 = vand.u32 %v130, 4294901760
  %3135 = vmatmul.mubr.f32.gmra.mxu0 %v3134
  %v3136 = vpop.f32.mrf.mxu0
  %v3137 = vadd.f32 %v2687, %v3136
  %v3138 = vpop.f32.mrf.mxu0
  %3139 = vmatprep.mubr.f32.mxu0 0.0
  %v3140 = vand.u32 %v133, 4294901760
  %3141 = vmatmul.mubr.f32.gmra.mxu0 %v3140
  %v3142 = vpop.f32.mrf.mxu0
  %v3143 = vadd.f32 %v2693, %v3142
  %v3144 = vpop.f32.mrf.mxu0
  %3145 = vmatprep.mubr.f32.mxu0 0.0
  %v3146 = vand.u32 %v136, 4294901760
  %3147 = vmatmul.mubr.f32.gmra.mxu0 %v3146
  %v3148 = vpop.f32.mrf.mxu0
  %v3149 = vadd.f32 %v2699, %v3148
  %v3150 = vpop.f32.mrf.mxu0
  %3151 = vmatprep.mubr.f32.mxu0 0.0
  %v3152 = vand.u32 %v139, 4294901760
  %3153 = vmatmul.mubr.f32.gmra.mxu0 %v3152
  %v3154 = vpop.f32.mrf.mxu0
  %v3155 = vadd.f32 %v2705, %v3154
  %v3156 = vpop.f32.mrf.mxu0
  %3157 = vmatprep.mubr.f32.mxu0 0.0
  %v3158 = vand.u32 %v142, 4294901760
  %3159 = vmatmul.mubr.f32.gmra.mxu0 %v3158
  %v3160 = vpop.f32.mrf.mxu0
  %v3161 = vadd.f32 %v2711, %v3160
  %v3162 = vpop.f32.mrf.mxu0
  %3163 = vmatprep.mubr.f32.mxu0 0.0
  %v3164 = vand.u32 %v145, 4294901760
  %3165 = vmatmul.mubr.f32.gmra.mxu0 %v3164
  %v3166 = vpop.f32.mrf.mxu0
  %v3167 = vadd.f32 %v2717, %v3166
  %v3168 = vpop.f32.mrf.mxu0
  %3169 = vmatprep.mubr.f32.mxu0 0.0
  %v3170 = vand.u32 %v148, 4294901760
  %3171 = vmatmul.mubr.f32.gmra.mxu0 %v3170
  %v3172 = vpop.f32.mrf.mxu0
  %v3173 = vadd.f32 %v2723, %v3172
  %v3174 = vpop.f32.mrf.mxu0
  %3175 = vmatprep.mubr.f32.mxu0 0.0
  %v3176 = vand.u32 %v151, 4294901760
  %3177 = vmatmul.mubr.f32.gmra.mxu0 %v3176
  %v3178 = vpop.f32.mrf.mxu0
  %v3179 = vadd.f32 %v2729, %v3178
  %v3180 = vpop.f32.mrf.mxu0
  %3181 = vmatprep.mubr.f32.mxu0 0.0
  %v3182 = vand.u32 %v154, 4294901760
  %3183 = vmatmul.mubr.f32.gmra.mxu0 %v3182
  %v3184 = vpop.f32.mrf.mxu0
  %v3185 = vadd.f32 %v2735, %v3184
  %v3186 = vpop.f32.mrf.mxu0
  %3187 = vmatprep.mubr.f32.mxu0 0.0
  %v3188 = vand.u32 %v157, 4294901760
  %3189 = vmatmul.mubr.f32.gmra.mxu0 %v3188
  %v3190 = vpop.f32.mrf.mxu0
  %v3191 = vadd.f32 %v2741, %v3190
  %v3192 = vpop.f32.mrf.mxu0
  %3193 = vmatprep.mubr.f32.mxu0 0.0
  %v3194 = vand.u32 %v160, 4294901760
  %3195 = vmatmul.mubr.f32.gmra.mxu0 %v3194
  %v3196 = vpop.f32.mrf.mxu0
  %v3197 = vadd.f32 %v2747, %v3196
  %v3198 = vpop.f32.mrf.mxu0
  %3199 = vmatprep.mubr.f32.mxu0 0.0
  %v3200 = vand.u32 %v163, 4294901760
  %3201 = vmatmul.mubr.f32.gmra.mxu0 %v3200
  %v3202 = vpop.f32.mrf.mxu0
  %v3203 = vadd.f32 %v2753, %v3202
  %v3204 = vpop.f32.mrf.mxu0
  %3205 = vmatprep.mubr.f32.mxu0 0.0
  %v3206 = vand.u32 %v166, 4294901760
  %3207 = vmatmul.mubr.f32.gmra.mxu0 %v3206
  %v3208 = vpop.f32.mrf.mxu0
  %v3209 = vadd.f32 %v2759, %v3208
  %v3210 = vpop.f32.mrf.mxu0
  %3211 = vmatprep.mubr.f32.mxu0 0.0
  %v3212 = vand.u32 %v169, 4294901760
  %3213 = vmatmul.mubr.f32.gmra.mxu0 %v3212
  %v3214 = vpop.f32.mrf.mxu0
  %v3215 = vadd.f32 %v2765, %v3214
  %v3216 = vpop.f32.mrf.mxu0
  %3217 = vmatprep.mubr.f32.mxu0 0.0
  %v3218 = vand.u32 %v172, 4294901760
  %3219 = vmatmul.mubr.f32.gmra.mxu0 %v3218
  %v3220 = vpop.f32.mrf.mxu0
  %v3221 = vadd.f32 %v2771, %v3220
  %v3222 = vpop.f32.mrf.mxu0
  %3223 = vmatprep.mubr.f32.mxu0 0.0
  %v3224 = vand.u32 %v175, 4294901760
  %3225 = vmatmul.mubr.f32.gmra.mxu0 %v3224
  %v3226 = vpop.f32.mrf.mxu0
  %v3227 = vadd.f32 %v2777, %v3226
  %v3228 = vpop.f32.mrf.mxu0
  %3229 = vmatprep.mubr.f32.mxu0 0.0
  %v3230 = vand.u32 %v178, 4294901760
  %3231 = vmatmul.mubr.f32.gmra.mxu0 %v3230
  %v3232 = vpop.f32.mrf.mxu0
  %v3233 = vadd.f32 %v2783, %v3232
  %v3234 = vpop.f32.mrf.mxu0
  %3235 = vmatprep.mubr.f32.mxu0 0.0
  %v3236 = vand.u32 %v181, 4294901760
  %3237 = vmatmul.mubr.f32.gmra.mxu0 %v3236
  %v3238 = vpop.f32.mrf.mxu0
  %v3239 = vadd.f32 %v2789, %v3238
  %v3240 = vpop.f32.mrf.mxu0
  %3241 = vmatprep.mubr.f32.mxu0 0.0
  %v3242 = vand.u32 %v184, 4294901760
  %3243 = vmatmul.mubr.f32.gmra.mxu0 %v3242
  %v3244 = vpop.f32.mrf.mxu0
  %v3245 = vadd.f32 %v2795, %v3244
  %v3246 = vpop.f32.mrf.mxu0
  %3247 = vmatprep.mubr.f32.mxu0 0.0
  %v3248 = vand.u32 %v187, 4294901760
  %3249 = vmatmul.mubr.f32.gmra.mxu0 %v3248
  %v3250 = vpop.f32.mrf.mxu0
  %v3251 = vadd.f32 %v2801, %v3250
  %v3252 = vpop.f32.mrf.mxu0
  %3253 = vmatprep.mubr.f32.mxu0 0.0
  %v3254 = vand.u32 %v190, 4294901760
  %3255 = vmatmul.mubr.f32.gmra.mxu0 %v3254
  %v3256 = vpop.f32.mrf.mxu0
  %v3257 = vadd.f32 %v2807, %v3256
  %v3258 = vpop.f32.mrf.mxu0
  %3259 = vmatprep.mubr.f32.mxu0 0.0
  %v3260 = vand.u32 %v193, 4294901760
  %3261 = vmatmul.mubr.f32.gmra.mxu0 %v3260
  %v3262 = vpop.f32.mrf.mxu0
  %v3263 = vadd.f32 %v2813, %v3262
  %v3264 = vpop.f32.mrf.mxu0
  %3265 = vmatprep.mubr.f32.mxu0 0.0
  %v3266 = vand.u32 %v196, 4294901760
  %3267 = vmatmul.mubr.f32.gmra.mxu0 %v3266
  %v3268 = vpop.f32.mrf.mxu0
  %v3269 = vadd.f32 %v2819, %v3268
  %v3270 = vpop.f32.mrf.mxu0
  %3271 = vmatprep.mubr.f32.mxu0 0.0
  %v3272 = vand.u32 %v199, 4294901760
  %3273 = vmatmul.mubr.f32.gmra.mxu0 %v3272
  %v3274 = vpop.f32.mrf.mxu0
  %v3275 = vadd.f32 %v2825, %v3274
  %v3276 = vpop.f32.mrf.mxu0
  %3277 = vmatprep.mubr.f32.mxu0 0.0
  %v3278 = vand.u32 %v202, 4294901760
  %3279 = vmatmul.mubr.f32.gmra.mxu0 %v3278
  %v3280 = vpop.f32.mrf.mxu0
  %v3281 = vadd.f32 %v2831, %v3280
  %v3282 = vpop.f32.mrf.mxu0
  %3283 = vmatprep.mubr.f32.mxu0 0.0
  %v3284 = vand.u32 %v205, 4294901760
  %3285 = vmatmul.mubr.f32.gmra.mxu0 %v3284
  %v3286 = vpop.f32.mrf.mxu0
  %v3287 = vadd.f32 %v2837, %v3286
  %v3288 = vpop.f32.mrf.mxu0
  %3289 = vmatprep.mubr.f32.mxu0 0.0
  %v3290 = vand.u32 %v208, 4294901760
  %3291 = vmatmul.mubr.f32.gmra.mxu0 %v3290
  %v3292 = vpop.f32.mrf.mxu0
  %v3293 = vadd.f32 %v2843, %v3292
  %v3294 = vpop.f32.mrf.mxu0
  %3295 = vmatprep.mubr.f32.mxu0 0.0
  %v3296 = vand.u32 %v211, 4294901760
  %3297 = vmatmul.mubr.f32.gmra.mxu0 %v3296
  %v3298 = vpop.f32.mrf.mxu0
  %v3299 = vadd.f32 %v2849, %v3298
  %v3300 = vpop.f32.mrf.mxu0
  %3301 = vmatprep.mubr.f32.mxu0 0.0
  %v3302 = vand.u32 %v214, 4294901760
  %3303 = vmatmul.mubr.f32.gmra.mxu0 %v3302
  %v3304 = vpop.f32.mrf.mxu0
  %v3305 = vadd.f32 %v2855, %v3304
  %v3306 = vpop.f32.mrf.mxu0
  %3307 = vmatprep.mubr.f32.mxu0 0.0
  %v3308 = vand.u32 %v217, 4294901760
  %3309 = vmatmul.mubr.f32.gmra.mxu0 %v3308
  %v3310 = vpop.f32.mrf.mxu0
  %v3311 = vadd.f32 %v2861, %v3310
  %v3312 = vpop.f32.mrf.mxu0
  %3313 = vmatprep.mubr.f32.mxu0 0.0
  %v3314 = vand.u32 %v220, 4294901760
  %3315 = vmatmul.mubr.f32.gmra.mxu0 %v3314
  %v3316 = vpop.f32.mrf.mxu0
  %v3317 = vadd.f32 %v2867, %v3316
  %v3318 = vpop.f32.mrf.mxu0
  %3319 = vmatprep.mubr.f32.mxu0 0.0
  %v3320 = vand.u32 %v223, 4294901760
  %3321 = vmatmul.mubr.f32.gmra.mxu0 %v3320
  %v3322 = vpop.f32.mrf.mxu0
  %v3323 = vadd.f32 %v2873, %v3322
  %v3324 = vpop.f32.mrf.mxu0
  %3325 = vmatprep.mubr.f32.mxu0 0.0
  %v3326 = vand.u32 %v226, 4294901760
  %3327 = vmatmul.mubr.f32.gmra.mxu0 %v3326
  %v3328 = vpop.f32.mrf.mxu0
  %v3329 = vadd.f32 %v2879, %v3328
  %v3330 = vpop.f32.mrf.mxu0
  %3331 = vmatprep.mubr.f32.mxu0 0.0
  %v3332 = vand.u32 %v229, 4294901760
  %3333 = vmatmul.mubr.f32.gmra.mxu0 %v3332
  %v3334 = vpop.f32.mrf.mxu0
  %v3335 = vadd.f32 %v2885, %v3334
  %v3336 = vpop.f32.mrf.mxu0
  %3337 = vmatprep.mubr.f32.mxu0 0.0
  %v3338 = vand.u32 %v232, 4294901760
  %3339 = vmatmul.mubr.f32.gmra.mxu0 %v3338
  %v3340 = vpop.f32.mrf.mxu0
  %v3341 = vadd.f32 %v2891, %v3340
  %v3342 = vpop.f32.mrf.mxu0
  %3343 = vmatprep.mubr.f32.mxu0 0.0
  %v3344 = vand.u32 %v235, 4294901760
  %3345 = vmatmul.mubr.f32.gmra.mxu0 %v3344
  %v3346 = vpop.f32.mrf.mxu0
  %v3347 = vadd.f32 %v2897, %v3346
  %v3348 = vpop.f32.mrf.mxu0
  %3349 = vmatprep.mubr.f32.mxu0 0.0
  %v3350 = vand.u32 %v238, 4294901760
  %3351 = vmatmul.mubr.f32.gmra.mxu0 %v3350
  %v3352 = vpop.f32.mrf.mxu0
  %v3353 = vadd.f32 %v2903, %v3352
  %v3354 = vpop.f32.mrf.mxu0
  %3355 = vmatprep.mubr.f32.mxu0 0.0
  %v3356 = vand.u32 %v241, 4294901760
  %3357 = vmatmul.mubr.f32.gmra.mxu0 %v3356
  %v3358 = vpop.f32.mrf.mxu0
  %v3359 = vadd.f32 %v2909, %v3358
  %v3360 = vpop.f32.mrf.mxu0
  %3361 = vmatprep.mubr.f32.mxu0 0.0
  %v3362 = vand.u32 %v244, 4294901760
  %3363 = vmatmul.mubr.f32.gmra.mxu0 %v3362
  %v3364 = vpop.f32.mrf.mxu0
  %v3365 = vadd.f32 %v2915, %v3364
  %v3366 = vpop.f32.mrf.mxu0
  %3367 = vmatprep.mubr.f32.mxu0 0.0
  %v3368 = vand.u32 %v247, 4294901760
  %3369 = vmatmul.mubr.f32.gmra.mxu0 %v3368
  %v3370 = vpop.f32.mrf.mxu0
  %v3371 = vadd.f32 %v2921, %v3370
  %v3372 = vpop.f32.mrf.mxu0
  %3373 = vmatprep.mubr.f32.mxu0 0.0
  %v3374 = vand.u32 %v250, 4294901760
  %3375 = vmatmul.mubr.f32.gmra.mxu0 %v3374
  %v3376 = vpop.f32.mrf.mxu0
  %v3377 = vadd.f32 %v2927, %v3376
  %v3378 = vpop.f32.mrf.mxu0
  %3379 = vmatprep.mubr.f32.mxu0 0.0
  %v3380 = vand.u32 %v253, 4294901760
  %3381 = vmatmul.mubr.f32.gmra.mxu0 %v3380
  %v3382 = vpop.f32.mrf.mxu0
  %v3383 = vadd.f32 %v2933, %v3382
  %v3384 = vpop.f32.mrf.mxu0
  %3385 = vmatprep.mubr.f32.mxu0 0.0
  %v3386 = vand.u32 %v256, 4294901760
  %3387 = vmatmul.mubr.f32.gmra.mxu0 %v3386
  %v3388 = vpop.f32.mrf.mxu0
  %v3389 = vadd.f32 %v2939, %v3388
  %v3390 = vpop.f32.mrf.mxu0
  %3391 = vmatprep.mubr.f32.mxu0 0.0
  %v3392 = vand.u32 %v259, 4294901760
  %3393 = vmatmul.mubr.f32.gmra.mxu0 %v3392
  %v3394 = vpop.f32.mrf.mxu0
  %v3395 = vadd.f32 %v2945, %v3394
  %v3396 = vpop.f32.mrf.mxu0
  %3397 = vmatprep.mubr.f32.mxu0 0.0
  %v3398 = vand.u32 %v262, 4294901760
  %3399 = vmatmul.mubr.f32.gmra.mxu0 %v3398
  %v3400 = vpop.f32.mrf.mxu0
  %v3401 = vadd.f32 %v2951, %v3400
  %v3402 = vpop.f32.mrf.mxu0
  %3403 = vmatprep.mubr.f32.mxu0 0.0
  %v3404 = vand.u32 %v265, 4294901760
  %3405 = vmatmul.mubr.f32.gmra.mxu0 %v3404
  %v3406 = vpop.f32.mrf.mxu0
  %v3407 = vadd.f32 %v2957, %v3406
  %v3408 = vpop.f32.mrf.mxu0
  %3409 = vmatprep.mubr.f32.mxu0 0.0
  %v3410 = vand.u32 %v268, 4294901760
  %3411 = vmatmul.mubr.f32.gmra.mxu0 %v3410
  %v3412 = vpop.f32.mrf.mxu0
  %v3413 = vadd.f32 %v2963, %v3412
  %v3414 = vpop.f32.mrf.mxu0
  %3415 = vmatprep.mubr.f32.mxu0 0.0
  %v3416 = vand.u32 %v271, 4294901760
  %3417 = vmatmul.mubr.f32.gmra.mxu0 %v3416
  %v3418 = vpop.f32.mrf.mxu0
  %v3419 = vadd.f32 %v2969, %v3418
  %v3420 = vpop.f32.mrf.mxu0
  %3421 = vmatprep.mubr.f32.mxu0 0.0
  %v3422 = vand.u32 %v274, 4294901760
  %3423 = vmatmul.mubr.f32.gmra.mxu0 %v3422
  %v3424 = vpop.f32.mrf.mxu0
  %v3425 = vadd.f32 %v2975, %v3424
  %v3426 = vpop.f32.mrf.mxu0
  %3427 = vmatprep.mubr.f32.mxu0 0.0
  %v3428 = vand.u32 %v277, 4294901760
  %3429 = vmatmul.mubr.f32.gmra.mxu0 %v3428
  %v3430 = vpop.f32.mrf.mxu0
  %v3431 = vadd.f32 %v2981, %v3430
  %v3432 = vpop.f32.mrf.mxu0
  %3433 = vdwg.mxu0
  %v3434 = vmax.f32 %v3053, 0.0
  %v3435 = vmax.f32 %v3059, 0.0
  %v3436 = vmax.f32 %v3065, 0.0
  %v3437 = vmax.f32 %v3071, 0.0
  %v3438 = vmax.f32 %v3077, 0.0
  %v3439 = vmax.f32 %v3083, 0.0
  %v3440 = vmax.f32 %v3089, 0.0
  %v3441 = vmax.f32 %v3095, 0.0
  %v3442 = vmax.f32 %v3101, 0.0
  %v3443 = vmax.f32 %v3107, 0.0
  %v3444 = vmax.f32 %v3113, 0.0
  %v3445 = vmax.f32 %v3119, 0.0
  %v3446 = vmax.f32 %v3125, 0.0
  %v3447 = vmax.f32 %v3131, 0.0
  %v3448 = vmax.f32 %v3137, 0.0
  %v3449 = vmax.f32 %v3143, 0.0
  %v3450 = vmax.f32 %v3149, 0.0
  %v3451 = vmax.f32 %v3155, 0.0
  %v3452 = vmax.f32 %v3161, 0.0
  %v3453 = vmax.f32 %v3167, 0.0
  %v3454 = vmax.f32 %v3173, 0.0
  %v3455 = vmax.f32 %v3179, 0.0
  %v3456 = vmax.f32 %v3185, 0.0
  %v3457 = vmax.f32 %v3191, 0.0
  %v3458 = vmax.f32 %v3197, 0.0
  %v3459 = vmax.f32 %v3203, 0.0
  %v3460 = vmax.f32 %v3209, 0.0
  %v3461 = vmax.f32 %v3215, 0.0
  %v3462 = vmax.f32 %v3221, 0.0
  %v3463 = vmax.f32 %v3227, 0.0
  %v3464 = vmax.f32 %v3233, 0.0
  %v3465 = vmax.f32 %v3239, 0.0
  %v3466 = vmax.f32 %v3245, 0.0
  %v3467 = vmax.f32 %v3251, 0.0
  %v3468 = vmax.f32 %v3257, 0.0
  %v3469 = vmax.f32 %v3263, 0.0
  %v3470 = vmax.f32 %v3269, 0.0
  %v3471 = vmax.f32 %v3275, 0.0
  %v3472 = vmax.f32 %v3281, 0.0
  %v3473 = vmax.f32 %v3287, 0.0
  %v3474 = vmax.f32 %v3293, 0.0
  %v3475 = vmax.f32 %v3299, 0.0
  %v3476 = vmax.f32 %v3305, 0.0
  %v3477 = vmax.f32 %v3311, 0.0
  %v3478 = vmax.f32 %v3317, 0.0
  %v3479 = vmax.f32 %v3323, 0.0
  %v3480 = vmax.f32 %v3329, 0.0
  %v3481 = vmax.f32 %v3335, 0.0
  %v3482 = vmax.f32 %v3341, 0.0
  %v3483 = vmax.f32 %v3347, 0.0
  %v3484 = vmax.f32 %v3353, 0.0
  %v3485 = vmax.f32 %v3359, 0.0
  %v3486 = vmax.f32 %v3365, 0.0
  %v3487 = vmax.f32 %v3371, 0.0
  %v3488 = vmax.f32 %v3377, 0.0
  %v3489 = vmax.f32 %v3383, 0.0
  %v3490 = vmax.f32 %v3389, 0.0
  %v3491 = vmax.f32 %v3395, 0.0
  %v3492 = vmax.f32 %v3401, 0.0
  %v3493 = vmax.f32 %v3407, 0.0
  %v3494 = vmax.f32 %v3413, 0.0
  %v3495 = vmax.f32 %v3419, 0.0
  %v3496 = vmax.f32 %v3425, 0.0
  %v3497 = vmax.f32 %v3431, 0.0
  %vm3498 = vcmask 31744
  %3499 = vst.msk [vmem:[%s3] sm:$0xff] %vm3498, %v3434
  %3500 = vst.msk [vmem:[%s3 + $0x8] sm:$0xff] %vm3498, %v3435
  %3501 = vst.msk [vmem:[%s3 + $0x10] sm:$0xff] %vm3498, %v3436
  %3502 = vst.msk [vmem:[%s3 + $0x18] sm:$0xff] %vm3498, %v3437
  %3503 = vst.msk [vmem:[%s3 + $0x20] sm:$0xff] %vm3498, %v3438
  %3504 = vst.msk [vmem:[%s3 + $0x28] sm:$0xff] %vm3498, %v3439
  %3505 = vst.msk [vmem:[%s3 + $0x30] sm:$0xff] %vm3498, %v3440
  %3506 = vst.msk [vmem:[%s3 + $0x38] sm:$0xff] %vm3498, %v3441
  %3507 = vst.msk [vmem:[%s3 + $0x40] sm:$0xff] %vm3498, %v3442
  %3508 = vst.msk [vmem:[%s3 + $0x48] sm:$0xff] %vm3498, %v3443
  %3509 = vst.msk [vmem:[%s3 + $0x50] sm:$0xff] %vm3498, %v3444
  %3510 = vst.msk [vmem:[%s3 + $0x58] sm:$0xff] %vm3498, %v3445
  %3511 = vst.msk [vmem:[%s3 + $0x60] sm:$0xff] %vm3498, %v3446
  %3512 = vst.msk [vmem:[%s3 + $0x68] sm:$0xff] %vm3498, %v3447
  %3513 = vst.msk [vmem:[%s3 + $0x70] sm:$0xff] %vm3498, %v3448
  %3514 = vst.msk [vmem:[%s3 + $0x78] sm:$0xff] %vm3498, %v3449
  %3515 = vst.msk [vmem:[%s3 + $0x80] sm:$0xff] %vm3498, %v3450
  %3516 = vst.msk [vmem:[%s3 + $0x88] sm:$0xff] %vm3498, %v3451
  %3517 = vst.msk [vmem:[%s3 + $0x90] sm:$0xff] %vm3498, %v3452
  %3518 = vst.msk [vmem:[%s3 + $0x98] sm:$0xff] %vm3498, %v3453
  %3519 = vst.msk [vmem:[%s3 + $0xa0] sm:$0xff] %vm3498, %v3454
  %3520 = vst.msk [vmem:[%s3 + $0xa8] sm:$0xff] %vm3498, %v3455
  %3521 = vst.msk [vmem:[%s3 + $0xb0] sm:$0xff] %vm3498, %v3456
  %3522 = vst.msk [vmem:[%s3 + $0xb8] sm:$0xff] %vm3498, %v3457
  %3523 = vst.msk [vmem:[%s3 + $0xc0] sm:$0xff] %vm3498, %v3458
  %3524 = vst.msk [vmem:[%s3 + $0xc8] sm:$0xff] %vm3498, %v3459
  %3525 = vst.msk [vmem:[%s3 + $0xd0] sm:$0xff] %vm3498, %v3460
  %3526 = vst.msk [vmem:[%s3 + $0xd8] sm:$0xff] %vm3498, %v3461
  %3527 = vst.msk [vmem:[%s3 + $0xe0] sm:$0xff] %vm3498, %v3462
  %3528 = vst.msk [vmem:[%s3 + $0xe8] sm:$0xff] %vm3498, %v3463
  %3529 = vst.msk [vmem:[%s3 + $0xf0] sm:$0xff] %vm3498, %v3464
  %3530 = vst.msk [vmem:[%s3 + $0xf8] sm:$0xff] %vm3498, %v3465
  %3531 = vst.msk [vmem:[%s3 + $0x100] sm:$0xff] %vm3498, %v3466
  %3532 = vst.msk [vmem:[%s3 + $0x108] sm:$0xff] %vm3498, %v3467
  %3533 = vst.msk [vmem:[%s3 + $0x110] sm:$0xff] %vm3498, %v3468
  %3534 = vst.msk [vmem:[%s3 + $0x118] sm:$0xff] %vm3498, %v3469
  %3535 = vst.msk [vmem:[%s3 + $0x120] sm:$0xff] %vm3498, %v3470
  %3536 = vst.msk [vmem:[%s3 + $0x128] sm:$0xff] %vm3498, %v3471
  %3537 = vst.msk [vmem:[%s3 + $0x130] sm:$0xff] %vm3498, %v3472
  %3538 = vst.msk [vmem:[%s3 + $0x138] sm:$0xff] %vm3498, %v3473
  %3539 = vst.msk [vmem:[%s3 + $0x140] sm:$0xff] %vm3498, %v3474
  %3540 = vst.msk [vmem:[%s3 + $0x148] sm:$0xff] %vm3498, %v3475
  %3541 = vst.msk [vmem:[%s3 + $0x150] sm:$0xff] %vm3498, %v3476
  %3542 = vst.msk [vmem:[%s3 + $0x158] sm:$0xff] %vm3498, %v3477
  %3543 = vst.msk [vmem:[%s3 + $0x160] sm:$0xff] %vm3498, %v3478
  %3544 = vst.msk [vmem:[%s3 + $0x168] sm:$0xff] %vm3498, %v3479
  %3545 = vst.msk [vmem:[%s3 + $0x170] sm:$0xff] %vm3498, %v3480
  %3546 = vst.msk [vmem:[%s3 + $0x178] sm:$0xff] %vm3498, %v3481
  %3547 = vst.msk [vmem:[%s3 + $0x180] sm:$0xff] %vm3498, %v3482
  %3548 = vst.msk [vmem:[%s3 + $0x188] sm:$0xff] %vm3498, %v3483
  %3549 = vst.msk [vmem:[%s3 + $0x190] sm:$0xff] %vm3498, %v3484
  %3550 = vst.msk [vmem:[%s3 + $0x198] sm:$0xff] %vm3498, %v3485
  %3551 = vst.msk [vmem:[%s3 + $0x1a0] sm:$0xff] %vm3498, %v3486
  %3552 = vst.msk [vmem:[%s3 + $0x1a8] sm:$0xff] %vm3498, %v3487
  %3553 = vst.msk [vmem:[%s3 + $0x1b0] sm:$0xff] %vm3498, %v3488
  %3554 = vst.msk [vmem:[%s3 + $0x1b8] sm:$0xff] %vm3498, %v3489
  %3555 = vst.msk [vmem:[%s3 + $0x1c0] sm:$0xff] %vm3498, %v3490
  %3556 = vst.msk [vmem:[%s3 + $0x1c8] sm:$0xff] %vm3498, %v3491
  %3557 = vst.msk [vmem:[%s3 + $0x1d0] sm:$0xff] %vm3498, %v3492
  %3558 = vst.msk [vmem:[%s3 + $0x1d8] sm:$0xff] %vm3498, %v3493
  %3559 = vst.msk [vmem:[%s3 + $0x1e0] sm:$0xff] %vm3498, %v3494
  %3560 = vst.msk [vmem:[%s3 + $0x1e8] sm:$0xff] %vm3498, %v3495
  %3561 = vst.msk [vmem:[%s3 + $0x1f0] sm:$0xff] %vm3498, %v3496
  %3562 = vst.msk [vmem:[%s3 + $0x1f8] sm:$0xff] %vm3498, %v3497
  // Predicated region
  $region14: #{tpu_custom_call.1} parent=0 // pred_check
    _
  $region15: #{tpu_custom_call.1} parent=0 // pred_check_branch
    %3564 = sbr.rel (0) target = $region17
  $region16: #{tpu_custom_call.1} parent=0 // pred_region
    _
  $region17: #{tpu_custom_call.1} parent=0 // pred_fallthru
    _
  // Predicated region
  $region18: #{tpu_custom_call.1} parent=0 // pred_check
    _
  $region19: #{tpu_custom_call.1} parent=0 // pred_check_branch
    %3566 = sbr.rel (0) target = $region21
  $region20: #{tpu_custom_call.1} parent=0 // pred_region
    _
  $region21: #{tpu_custom_call.1} parent=0 // pred_fallthru
    _

</llo_original>
